<compile_context>
chip_gen: v5e
topology: v5e:2x2
jax: 0.10.0
libtpu: 0.0.40
codegen_flags: <defaults>
</compile_context>

<pallas_src>
import functools

import jax
import jax.numpy as jnp
from jax.experimental import pallas as pl
from jax.experimental.pallas import tpu as pltpu

LANE = 128  # TPU lane width


def _round_up(x, m):
    return (x + m - 1) // m * m


# ----------------------------------------------------------------------------
# Fused kernel: [3x3 conv + bias + LeakyReLU] x2 + AvgPool2d(2), one batch elem
# ----------------------------------------------------------------------------
def _dis_block_kernel(x_ref, w1_ref, b1_ref, w2_ref, b2_ref, o_ref,
                      xp_ref, *, slope):
    # x_ref : (1, H, W, Cpi)      un-padded NHWC tile (channels lane-padded)
    # w1_ref: (9*Cpi, Cpi)        pre-scaled conv1 weights, im2col layout
    # b1_ref: (1, Cpi)
    # w2_ref: (9*Cpi, Cpo)        pre-scaled conv2 weights, im2col layout
    # b2_ref: (1, Cpo)
    # o_ref : (1, H//2, W//2, Cpo)
    # xp_ref: VMEM scratch (H+2, W+2, Cpi) -- zero-padded halo buffer, reused
    #         for both convs (conv1 output written back into its interior).
    _, H, W, Cpi = x_ref.shape
    Cpo = o_ref.shape[3]

    # Build the zero-padded (halo) tile in VMEM: no HBM pad pass in the wrapper.
    xp_ref[...] = jnp.zeros_like(xp_ref)
    xp_ref[1:H + 1, 1:W + 1, :] = x_ref[0]

    def conv_bias_lrelu(w, b):
        # im2col: a single (H*W, 9*Cpi) x (9*Cpi, C_out) MXU matmul.
        patches = jnp.concatenate(
            [xp_ref[kh:kh + H, kw:kw + W, :].reshape(H * W, Cpi)
             for kh in range(3) for kw in range(3)],
            axis=1,
        )
        acc = jnp.dot(patches, w, preferred_element_type=jnp.float32)
        acc = acc + b.astype(jnp.float32)             # (H*W, C_out) + (1, C_out)
        return jnp.where(acc >= 0, acc, slope * acc)  # LeakyReLU(0.2)

    # conv1 + lrelu; result stays in VMEM (written back into the halo interior,
    # border zeros are still valid from the initial fill).
    y1 = conv_bias_lrelu(w1_ref[...], b1_ref[...])          # (H*W, Cpi), f32
    xp_ref[1:H + 1, 1:W + 1, :] = y1.reshape(H, W, Cpi).astype(xp_ref.dtype)

    # conv2 + lrelu + fused AvgPool2d(2) epilogue.
    y2 = conv_bias_lrelu(w2_ref[...], b2_ref[...])          # (H*W, Cpo), f32
    y2 = y2.reshape(H // 2, 2, W // 2, 2, Cpo)
    o_ref[0] = jnp.mean(y2, axis=(1, 3)).astype(o_ref.dtype)


def fused_dis_block(x_nhwc, w1, b1, w2, b2, *, slope=0.2):
    """x_nhwc: (N, H, W, Cpi) lane-padded; w1: (9*Cpi, Cpi); w2: (9*Cpi, Cpo)."""
    N, H, W, Cpi = x_nhwc.shape
    Cpo = w2.shape[1]
    assert w1.shape == (9 * Cpi, Cpi), (w1.shape, Cpi)
    assert w2.shape[0] == 9 * Cpi, (w2.shape, Cpi)
    assert H % 2 == 0 and W % 2 == 0

    return pl.pallas_call(
        functools.partial(_dis_block_kernel, slope=slope),
        out_shape=jax.ShapeDtypeStruct((N, H // 2, W // 2, Cpo), x_nhwc.dtype),
        grid_spec=pltpu.PrefetchScalarGridSpec(
            num_scalar_prefetch=0,
            grid=(N,),
            in_specs=[
                pl.BlockSpec((1, H, W, Cpi), lambda n: (n, 0, 0, 0)),
                pl.BlockSpec((9 * Cpi, Cpi), lambda n: (0, 0)),
                pl.BlockSpec((1, Cpi), lambda n: (0, 0)),
                pl.BlockSpec((9 * Cpi, Cpo), lambda n: (0, 0)),
                pl.BlockSpec((1, Cpo), lambda n: (0, 0)),
            ],
            out_specs=pl.BlockSpec((1, H // 2, W // 2, Cpo),
                                   lambda n: (n, 0, 0, 0)),
            scratch_shapes=[pltpu.VMEM((H + 2, W + 2, Cpi), x_nhwc.dtype)],
        ),
        compiler_params=pltpu.CompilerParams(
            dimension_semantics=("parallel",),
            vmem_limit_bytes=48 * 1024 * 1024,
        ),
    )(x_nhwc, w1, b1, w2, b2)


# ----------------------------------------------------------------------------
# Parameters: init (mirrors PyTorch module) + one-time kernel-layout prep
# ----------------------------------------------------------------------------
def init_dis_general_conv_block(key, in_channels, out_channels):
    """Deterministic param init mirroring the PyTorch module (use_eql=True)."""
    k1, k2 = jax.random.split(key)
    # torch.nn.init.normal_ -> standard normal; weight shape (Cout, Cin, 3, 3)
    w1 = jax.random.normal(k1, (in_channels, in_channels, 3, 3), jnp.float32)
    w2 = jax.random.normal(k2, (out_channels, in_channels, 3, 3), jnp.float32)
    b1 = jnp.zeros((in_channels,), jnp.float32)
    b2 = jnp.zeros((out_channels,), jnp.float32)
    scale1 = jnp.float32(jnp.sqrt(2.0) / jnp.sqrt(9.0 * in_channels))
    scale2 = jnp.float32(jnp.sqrt(2.0) / jnp.sqrt(9.0 * in_channels))
    return dict(w1=w1, b1=b1, scale1=scale1, w2=w2, b2=b2, scale2=scale2)


def prepare_dis_block_params(params):
    """One-time prep (hoisted out of the forward): fold in the equalized-lr
    scale, transpose (Cout,Cin,3,3)->(3,3,Cin,Cout), lane-pad channels to
    multiples of 128, reshape to the (9*Cp_in, Cp_out) im2col layout."""
    def prep_w(w_oihw, scale):
        cout, cin = int(w_oihw.shape[0]), int(w_oihw.shape[1])
        cpi, cpo = _round_up(cin, LANE), _round_up(cout, LANE)
        w = jnp.transpose(w_oihw, (2, 3, 1, 0)) * scale          # (3,3,Cin,Cout)
        w = jnp.pad(w, ((0, 0), (0, 0), (0, cpi - cin), (0, cpo - cout)))
        return w.reshape(9 * cpi, cpo)

    def prep_b(b):
        c = int(b.shape[0])
        return jnp.pad(b, (0, _round_up(c, LANE) - c)).reshape(1, -1)

    return dict(
        w1=prep_w(params["w1"], params["scale1"]), b1=prep_b(params["b1"]),
        w2=prep_w(params["w2"], params["scale2"]), b2=prep_b(params["b2"]),
        in_channels=int(params["w1"].shape[1]),
        out_channels=int(params["w2"].shape[0]),
    )


def dis_general_conv_block(prepped, x_nchw):
    """Forward pass. Input/output are NCHW (PyTorch convention)."""
    n, cin, h, w = x_nchw.shape
    cpi = prepped["w1"].shape[1]          # conv1 is Cin -> Cin (lane-padded)
    cout = prepped["out_channels"]

    # Layout glue: NCHW -> NHWC + lane-pad channels (single fused XLA pass).
    x = jnp.transpose(x_nchw, (0, 2, 3, 1))
    x = jnp.pad(x, ((0, 0), (0, 0), (0, 0), (0, cpi - cin)))

    y = fused_dis_block(x, prepped["w1"], prepped["b1"],
                        prepped["w2"], prepped["b2"])            # fused block
    y = y[..., :cout]                                            # drop lane pad
    return jnp.transpose(y, (0, 3, 1, 2))                        # NHWC -> NCHW


# ----------------------------------------------------------------------------
# Pure-JAX reference (correctness check only)
# ----------------------------------------------------------------------------
def _reference(params, x_nchw):
    def conv(x, w_oihw, b, scale):
        y = jax.lax.conv_general_dilated(
            x, w_oihw * scale, window_strides=(1, 1), padding=((1, 1), (1, 1)),
            dimension_numbers=("NCHW", "OIHW", "NCHW"),
            precision=jax.lax.Precision.HIGHEST)
        return y + b[None, :, None, None]

    lrelu = lambda v: jnp.where(v >= 0, v, 0.2 * v)
    y = lrelu(conv(x_nchw, params["w1"], params["b1"], params["scale1"]))
    y = lrelu(conv(y, params["w2"], params["b2"], params["scale2"]))
    N, C, H, W = y.shape
    y = y.reshape(N, C, H // 2, 2, W // 2, 2).mean(axis=(3, 5))
    return y


if __name__ == "__main__":
    key = jax.random.PRNGKey(0)
    k_param, k_x = jax.random.split(key)

    in_channels, out_channels = 4, 8
    params = init_dis_general_conv_block(k_param, in_channels, out_channels)
    prepped = prepare_dis_block_params(params)

    x = jax.random.normal(k_x, (2, in_channels, 16, 16), jnp.float32)  # NCHW

    out = jax.block_until_ready(dis_general_conv_block(prepped, x))
    ref = jax.block_until_ready(_reference(params, x))

    assert out.shape == (2, out_channels, 8, 8), out.shape
    assert jnp.allclose(out, ref, rtol=1e-3, atol=1e-3), \
        float(jnp.max(jnp.abs(out - ref)))

    print("KERNEL_OK")
</pallas_src>

<mosaic_0001>
module attributes {stable_mosaic.version = 11 : i64} {
  func.func @_dis_block_kernel(%arg0: i32, %arg1: memref<1x16x16x128xf32, #tpu.memory_space<vmem>>, %arg2: memref<1152x128xf32, #tpu.memory_space<vmem>>, %arg3: memref<1x128xf32, #tpu.memory_space<vmem>>, %arg4: memref<1152x128xf32, #tpu.memory_space<vmem>>, %arg5: memref<1x128xf32, #tpu.memory_space<vmem>>, %arg6: memref<1x8x8x128xf32, #tpu.memory_space<vmem>>, %arg7: memref<18x18x128xf32, #tpu.memory_space<vmem>>) attributes {dimension_semantics = [#tpu.dimension_semantics<parallel>], iteration_bounds = array<i64: 2>, scalar_prefetch = 0 : i64, scratch_operands = 1 : i64, tpu.core_type = #tpu.core_type<tc>, window_params = [{transform_indices = @transform_0, window_bounds = array<i64: 1, 16, 16, 128>}, {pipeline_mode = #tpu.pipeline_mode<synchronous>, transform_indices = @transform_1, window_bounds = array<i64: 1152, 128>}, {pipeline_mode = #tpu.pipeline_mode<synchronous>, transform_indices = @transform_2, window_bounds = array<i64: 1, 128>}, {pipeline_mode = #tpu.pipeline_mode<synchronous>, transform_indices = @transform_3, window_bounds = array<i64: 1152, 128>}, {pipeline_mode = #tpu.pipeline_mode<synchronous>, transform_indices = @transform_4, window_bounds = array<i64: 1, 128>}, {transform_indices = @transform_5, window_bounds = array<i64: 1, 8, 8, 128>}]} {
    %cst = arith.constant 0.000000e+00 : f32
    %0 = vector.broadcast %cst : f32 to vector<18x18x128xf32>
    %c0 = arith.constant 0 : index
    %c0_0 = arith.constant 0 : index
    %c0_1 = arith.constant 0 : index
    %1 = vector.load %arg7[%c0, %c0_0, %c0_1] : memref<18x18x128xf32, #tpu.memory_space<vmem>>, vector<18x18x128xf32>
    tpu.vector_store %arg7[%c0, %c0_0, %c0_1], %0 {strides = array<i32>} : memref<18x18x128xf32, #tpu.memory_space<vmem>>, vector<18x18x128xf32>,
    %c0_2 = arith.constant 0 : index
    %c0_3 = arith.constant 0 : index
    %c0_4 = arith.constant 0 : index
    %c0_5 = arith.constant 0 : index
    %2 = vector.load %arg1[%c0_2, %c0_3, %c0_4, %c0_5] : memref<1x16x16x128xf32, #tpu.memory_space<vmem>>, vector<1x16x16x128xf32>
    %3 = vector.shape_cast %2 : vector<1x16x16x128xf32> to vector<16x16x128xf32>
    %c1 = arith.constant 1 : index
    %c1_6 = arith.constant 1 : index
    %c0_7 = arith.constant 0 : index
    %4 = vector.load %arg7[%c1, %c1_6, %c0_7] : memref<18x18x128xf32, #tpu.memory_space<vmem>>, vector<16x16x128xf32>
    tpu.vector_store %arg7[%c1, %c1_6, %c0_7], %3 {strides = array<i32>} : memref<18x18x128xf32, #tpu.memory_space<vmem>>, vector<16x16x128xf32>,
    %c0_8 = arith.constant 0 : index
    %c0_9 = arith.constant 0 : index
    %5 = vector.load %arg2[%c0_8, %c0_9] : memref<1152x128xf32, #tpu.memory_space<vmem>>, vector<1152x128xf32>
    %c0_10 = arith.constant 0 : index
    %c0_11 = arith.constant 0 : index
    %6 = vector.load %arg3[%c0_10, %c0_11] : memref<1x128xf32, #tpu.memory_space<vmem>>, vector<1x128xf32>
    %c0_12 = arith.constant 0 : index
    %c0_13 = arith.constant 0 : index
    %c0_14 = arith.constant 0 : index
    %7 = vector.load %arg7[%c0_12, %c0_13, %c0_14] : memref<18x18x128xf32, #tpu.memory_space<vmem>>, vector<16x16x128xf32>
    %8 = vector.shape_cast %7 : vector<16x16x128xf32> to vector<256x128xf32>
    %c0_15 = arith.constant 0 : index
    %c1_16 = arith.constant 1 : index
    %c0_17 = arith.constant 0 : index
    %9 = vector.load %arg7[%c0_15, %c1_16, %c0_17] : memref<18x18x128xf32, #tpu.memory_space<vmem>>, vector<16x16x128xf32>
    %10 = vector.shape_cast %9 : vector<16x16x128xf32> to vector<256x128xf32>
    %c0_18 = arith.constant 0 : index
    %c2 = arith.constant 2 : index
    %c0_19 = arith.constant 0 : index
    %11 = vector.load %arg7[%c0_18, %c2, %c0_19] : memref<18x18x128xf32, #tpu.memory_space<vmem>>, vector<16x16x128xf32>
    %12 = vector.shape_cast %11 : vector<16x16x128xf32> to vector<256x128xf32>
    %c1_20 = arith.constant 1 : index
    %c0_21 = arith.constant 0 : index
    %c0_22 = arith.constant 0 : index
    %13 = vector.load %arg7[%c1_20, %c0_21, %c0_22] : memref<18x18x128xf32, #tpu.memory_space<vmem>>, vector<16x16x128xf32>
    %14 = vector.shape_cast %13 : vector<16x16x128xf32> to vector<256x128xf32>
    %c1_23 = arith.constant 1 : index
    %c1_24 = arith.constant 1 : index
    %c0_25 = arith.constant 0 : index
    %15 = vector.load %arg7[%c1_23, %c1_24, %c0_25] : memref<18x18x128xf32, #tpu.memory_space<vmem>>, vector<16x16x128xf32>
    %16 = vector.shape_cast %15 : vector<16x16x128xf32> to vector<256x128xf32>
    %c1_26 = arith.constant 1 : index
    %c2_27 = arith.constant 2 : index
    %c0_28 = arith.constant 0 : index
    %17 = vector.load %arg7[%c1_26, %c2_27, %c0_28] : memref<18x18x128xf32, #tpu.memory_space<vmem>>, vector<16x16x128xf32>
    %18 = vector.shape_cast %17 : vector<16x16x128xf32> to vector<256x128xf32>
    %c2_29 = arith.constant 2 : index
    %c0_30 = arith.constant 0 : index
    %c0_31 = arith.constant 0 : index
    %19 = vector.load %arg7[%c2_29, %c0_30, %c0_31] : memref<18x18x128xf32, #tpu.memory_space<vmem>>, vector<16x16x128xf32>
    %20 = vector.shape_cast %19 : vector<16x16x128xf32> to vector<256x128xf32>
    %c2_32 = arith.constant 2 : index
    %c1_33 = arith.constant 1 : index
    %c0_34 = arith.constant 0 : index
    %21 = vector.load %arg7[%c2_32, %c1_33, %c0_34] : memref<18x18x128xf32, #tpu.memory_space<vmem>>, vector<16x16x128xf32>
    %22 = vector.shape_cast %21 : vector<16x16x128xf32> to vector<256x128xf32>
    %c2_35 = arith.constant 2 : index
    %c2_36 = arith.constant 2 : index
    %c0_37 = arith.constant 0 : index
    %23 = vector.load %arg7[%c2_35, %c2_36, %c0_37] : memref<18x18x128xf32, #tpu.memory_space<vmem>>, vector<16x16x128xf32>
    %24 = vector.shape_cast %23 : vector<16x16x128xf32> to vector<256x128xf32>
    %25 = tpu.concatenate %8, %10, %12, %14, %16, %18, %20, %22, %24 in 1 : vector<256x128xf32>, vector<256x128xf32>, vector<256x128xf32>, vector<256x128xf32>, vector<256x128xf32>, vector<256x128xf32>, vector<256x128xf32>, vector<256x128xf32>, vector<256x128xf32> -> vector<256x1152xf32>
    %cst_38 = arith.constant dense<0.000000e+00> : vector<256x128xf32>
    %26 = tpu.matmul %25, %5, %cst_38 {dimension_numbers = #tpu.dot_dimension_numbers<[1], [0], [0], [1], [0, 0, 1, 1], [], []>} : vector<256x1152xf32>, vector<1152x128xf32>, vector<256x128xf32> -> vector<256x128xf32>
    %27 = vector.broadcast %6 : vector<1x128xf32> to vector<256x128xf32>
    %28 = arith.addf %26, %27 : vector<256x128xf32>
    %cst_39 = arith.constant 0.000000e+00 : f32
    %29 = vector.broadcast %cst_39 : f32 to vector<256x128xf32>
    %30 = arith.cmpf oge, %28, %29 : vector<256x128xf32>
    %cst_40 = arith.constant 2.000000e-01 : f32
    %31 = vector.broadcast %cst_40 : f32 to vector<256x128xf32>
    %32 = arith.mulf %31, %28 : vector<256x128xf32>
    %33 = arith.select %30, %28, %32 : vector<256x128xi1>, vector<256x128xf32>
    %34 = vector.shape_cast %33 : vector<256x128xf32> to vector<16x16x128xf32>
    %c1_41 = arith.constant 1 : index
    %c1_42 = arith.constant 1 : index
    %c0_43 = arith.constant 0 : index
    %35 = vector.load %arg7[%c1_41, %c1_42, %c0_43] : memref<18x18x128xf32, #tpu.memory_space<vmem>>, vector<16x16x128xf32>
    tpu.vector_store %arg7[%c1_41, %c1_42, %c0_43], %34 {strides = array<i32>} : memref<18x18x128xf32, #tpu.memory_space<vmem>>, vector<16x16x128xf32>,
    %c0_44 = arith.constant 0 : index
    %c0_45 = arith.constant 0 : index
    %36 = vector.load %arg4[%c0_44, %c0_45] : memref<1152x128xf32, #tpu.memory_space<vmem>>, vector<1152x128xf32>
    %c0_46 = arith.constant 0 : index
    %c0_47 = arith.constant 0 : index
    %37 = vector.load %arg5[%c0_46, %c0_47] : memref<1x128xf32, #tpu.memory_space<vmem>>, vector<1x128xf32>
    %c0_48 = arith.constant 0 : index
    %c0_49 = arith.constant 0 : index
    %c0_50 = arith.constant 0 : index
    %38 = vector.load %arg7[%c0_48, %c0_49, %c0_50] : memref<18x18x128xf32, #tpu.memory_space<vmem>>, vector<16x16x128xf32>
    %39 = vector.shape_cast %38 : vector<16x16x128xf32> to vector<256x128xf32>
    %c0_51 = arith.constant 0 : index
    %c1_52 = arith.constant 1 : index
    %c0_53 = arith.constant 0 : index
    %40 = vector.load %arg7[%c0_51, %c1_52, %c0_53] : memref<18x18x128xf32, #tpu.memory_space<vmem>>, vector<16x16x128xf32>
    %41 = vector.shape_cast %40 : vector<16x16x128xf32> to vector<256x128xf32>
    %c0_54 = arith.constant 0 : index
    %c2_55 = arith.constant 2 : index
    %c0_56 = arith.constant 0 : index
    %42 = vector.load %arg7[%c0_54, %c2_55, %c0_56] : memref<18x18x128xf32, #tpu.memory_space<vmem>>, vector<16x16x128xf32>
    %43 = vector.shape_cast %42 : vector<16x16x128xf32> to vector<256x128xf32>
    %c1_57 = arith.constant 1 : index
    %c0_58 = arith.constant 0 : index
    %c0_59 = arith.constant 0 : index
    %44 = vector.load %arg7[%c1_57, %c0_58, %c0_59] : memref<18x18x128xf32, #tpu.memory_space<vmem>>, vector<16x16x128xf32>
    %45 = vector.shape_cast %44 : vector<16x16x128xf32> to vector<256x128xf32>
    %c1_60 = arith.constant 1 : index
    %c1_61 = arith.constant 1 : index
    %c0_62 = arith.constant 0 : index
    %46 = vector.load %arg7[%c1_60, %c1_61, %c0_62] : memref<18x18x128xf32, #tpu.memory_space<vmem>>, vector<16x16x128xf32>
    %47 = vector.shape_cast %46 : vector<16x16x128xf32> to vector<256x128xf32>
    %c1_63 = arith.constant 1 : index
    %c2_64 = arith.constant 2 : index
    %c0_65 = arith.constant 0 : index
    %48 = vector.load %arg7[%c1_63, %c2_64, %c0_65] : memref<18x18x128xf32, #tpu.memory_space<vmem>>, vector<16x16x128xf32>
    %49 = vector.shape_cast %48 : vector<16x16x128xf32> to vector<256x128xf32>
    %c2_66 = arith.constant 2 : index
    %c0_67 = arith.constant 0 : index
    %c0_68 = arith.constant 0 : index
    %50 = vector.load %arg7[%c2_66, %c0_67, %c0_68] : memref<18x18x128xf32, #tpu.memory_space<vmem>>, vector<16x16x128xf32>
    %51 = vector.shape_cast %50 : vector<16x16x128xf32> to vector<256x128xf32>
    %c2_69 = arith.constant 2 : index
    %c1_70 = arith.constant 1 : index
    %c0_71 = arith.constant 0 : index
    %52 = vector.load %arg7[%c2_69, %c1_70, %c0_71] : memref<18x18x128xf32, #tpu.memory_space<vmem>>, vector<16x16x128xf32>
    %53 = vector.shape_cast %52 : vector<16x16x128xf32> to vector<256x128xf32>
    %c2_72 = arith.constant 2 : index
    %c2_73 = arith.constant 2 : index
    %c0_74 = arith.constant 0 : index
    %54 = vector.load %arg7[%c2_72, %c2_73, %c0_74] : memref<18x18x128xf32, #tpu.memory_space<vmem>>, vector<16x16x128xf32>
    %55 = vector.shape_cast %54 : vector<16x16x128xf32> to vector<256x128xf32>
    %56 = tpu.concatenate %39, %41, %43, %45, %47, %49, %51, %53, %55 in 1 : vector<256x128xf32>, vector<256x128xf32>, vector<256x128xf32>, vector<256x128xf32>, vector<256x128xf32>, vector<256x128xf32>, vector<256x128xf32>, vector<256x128xf32>, vector<256x128xf32> -> vector<256x1152xf32>
    %cst_75 = arith.constant dense<0.000000e+00> : vector<256x128xf32>
    %57 = tpu.matmul %56, %36, %cst_75 {dimension_numbers = #tpu.dot_dimension_numbers<[1], [0], [0], [1], [0, 0, 1, 1], [], []>} : vector<256x1152xf32>, vector<1152x128xf32>, vector<256x128xf32> -> vector<256x128xf32>
    %58 = vector.broadcast %37 : vector<1x128xf32> to vector<256x128xf32>
    %59 = arith.addf %57, %58 : vector<256x128xf32>
    %cst_76 = arith.constant 0.000000e+00 : f32
    %60 = vector.broadcast %cst_76 : f32 to vector<256x128xf32>
    %61 = arith.cmpf oge, %59, %60 : vector<256x128xf32>
    %cst_77 = arith.constant 2.000000e-01 : f32
    %62 = vector.broadcast %cst_77 : f32 to vector<256x128xf32>
    %63 = arith.mulf %62, %59 : vector<256x128xf32>
    %64 = arith.select %61, %59, %63 : vector<256x128xi1>, vector<256x128xf32>
    %65 = vector.shape_cast %64 : vector<256x128xf32> to vector<8x2x8x2x128xf32>
    %cst_78 = arith.constant dense<0.000000e+00> : vector<8x8x128xf32>
    %66 = vector.multi_reduction <add>, %65, %cst_78 [1, 3] : vector<8x2x8x2x128xf32> to vector<8x8x128xf32>
    %cst_79 = arith.constant 4.000000e+00 : f32
    %67 = vector.broadcast %cst_79 : f32 to vector<8x8x128xf32>
    %68 = arith.divf %66, %67 : vector<8x8x128xf32>
    %c0_80 = arith.constant 0 : index
    %c0_81 = arith.constant 0 : index
    %c0_82 = arith.constant 0 : index
    %c0_83 = arith.constant 0 : index
    %69 = vector.load %arg6[%c0_80, %c0_81, %c0_82, %c0_83] : memref<1x8x8x128xf32, #tpu.memory_space<vmem>>, vector<1x8x8x128xf32>
    %70 = vector.shape_cast %69 : vector<1x8x8x128xf32> to vector<8x8x128xf32>
    %71 = vector.shape_cast %68 : vector<8x8x128xf32> to vector<1x8x8x128xf32>
    tpu.vector_store %arg6[%c0_80, %c0_81, %c0_82, %c0_83], %71 {strides = array<i32>} : memref<1x8x8x128xf32, #tpu.memory_space<vmem>>, vector<1x8x8x128xf32>,
    return
  }
  func.func @transform_0(%arg0: i32) -> (i32, i32, i32, i32) {
    %c0_i32 = arith.constant 0 : i32
    %c0_i32_0 = arith.constant 0 : i32
    %c0_i32_1 = arith.constant 0 : i32
    %c0_i32_2 = arith.constant 0 : i32
    return %arg0, %c0_i32, %c0_i32_0, %c0_i32_1 : i32, i32, i32, i32
  }
  func.func @transform_1(%arg0: i32) -> (i32, i32) {
    %c0_i32 = arith.constant 0 : i32
    %c0_i32_0 = arith.constant 0 : i32
    %c0_i32_1 = arith.constant 0 : i32
    return %c0_i32, %c0_i32_0 : i32, i32
  }
  func.func @transform_2(%arg0: i32) -> (i32, i32) {
    %c0_i32 = arith.constant 0 : i32
    %c0_i32_0 = arith.constant 0 : i32
    %c0_i32_1 = arith.constant 0 : i32
    return %c0_i32, %c0_i32_0 : i32, i32
  }
  func.func @transform_3(%arg0: i32) -> (i32, i32) {
    %c0_i32 = arith.constant 0 : i32
    %c0_i32_0 = arith.constant 0 : i32
    %c0_i32_1 = arith.constant 0 : i32
    return %c0_i32, %c0_i32_0 : i32, i32
  }
  func.func @transform_4(%arg0: i32) -> (i32, i32) {
    %c0_i32 = arith.constant 0 : i32
    %c0_i32_0 = arith.constant 0 : i32
    %c0_i32_1 = arith.constant 0 : i32
    return %c0_i32, %c0_i32_0 : i32, i32
  }
  func.func @transform_5(%arg0: i32) -> (i32, i32, i32, i32) {
    %c0_i32 = arith.constant 0 : i32
    %c0_i32_0 = arith.constant 0 : i32
    %c0_i32_1 = arith.constant 0 : i32
    %c0_i32_2 = arith.constant 0 : i32
    return %arg0, %c0_i32, %c0_i32_0, %c0_i32_1 : i32, i32, i32, i32
  }
}

</mosaic_0001>

<llo_original>
// kernel: tpu_custom_call.1
$region0: #{tpu_custom_call.1}
  #allocation0 [shape = 'u32[]', space=smem, size = 0x4, offset = 0x4, fixed_abs, tag = 'smem constant byte address 0x4 - core index']
  #allocation1 [shape = 'u32[72,128]{1,0:T(1,128)}', space=vmem, size = 0x9000, scoped, tag = 'internal scratch']
  #allocation2 [shape = 'f32[18,18,128]{2,1,0:T(8,128)}', space=vmem, size = 0x36000, scoped, tag = 'scratch operand']
  %s0 = inlined_call_operand.hbm [shape: f32[2,16,16,128], index: 0, kind: input, shape index: {}]
  %s1 = inlined_call_operand.hbm [shape: f32[1152,128], index: 1, kind: input, shape index: {}]
  %s2 = inlined_call_operand.vmem [shape: f32[1,128], index: 2, kind: input, shape index: {}]
  %s3 = inlined_call_operand.hbm [shape: f32[1152,128], index: 3, kind: input, shape index: {}]
  %s4 = inlined_call_operand.vmem [shape: f32[1,128], index: 4, kind: input, shape index: {}]
  %s5 = inlined_call_operand.hbm [shape: f32[2,8,8,128], index: 5, kind: output, shape index: {}]
  %s6 = sld [smem:[#allocation0]]
  $region65: #{tpu_custom_call.1} parent=0
    _
  %s8 = ssub.s32 1, %s6
  %s9 = scalar_select 0, %s8, %s6
  $region1: #{tpu_custom_call.1} parent=0
    #allocation3 [shape = 'u8[262144]{0}', space=vmem, size = 0x40000, scoped, tag = 'input window, operand 0']
    #allocation4 [shape = 's32[2]{0}', space=sflag, size = 0x8, scoped, tag = 'scoped memory for tpu_custom_call.1']
    #allocation5 [shape = 's32[2]{0}', space=sflag, size = 0x8, scoped, tag = 'scoped memory for tpu_custom_call.1']
    #allocation6 [shape = 'u8[589824]{0}', space=vmem, size = 0x90000, scoped, tag = 'input window, operand 1, single buffered']
    #allocation7 [shape = 's32[1]{0}', space=sflag, size = 0x4, scoped, tag = 'scoped memory for tpu_custom_call.1']
    #allocation8 [shape = 'u8[589824]{0}', space=vmem, size = 0x90000, scoped, tag = 'input window, operand 3, single buffered']
    #allocation9 [shape = 'u8[65536]{0}', space=vmem, size = 0x10000, scoped, tag = 'output window, operand 0']
    %10 = vsyncpa [#allocation4], 0
    %s11 = scalar_lea.sflag [#allocation4], 1
    %12 = vsyncpa %s11, 0
    %13 = vsyncpa [#allocation7], 0
    %14 = vsyncpa [#allocation5], 0
    %s15 = scalar_lea.sflag [#allocation5], 1
    %16 = vsyncpa %s15, 0
    loop: start=0, step=1, limit=4
    $region2: #{tpu_custom_call.1} parent=1 // loop_pre_header
      _
    $region3: #{tpu_custom_call.1} parent=1 // loop_header
      %s18 = sphi 0, %s22
      %p19 = scmp.ge.s32.totalorder %s18, 4
      %s28 = sphi 0, %s30
      %s31 = sphi 0, %s28
      %s32 = sphi 0, %s31
      %s48 = sphi 0, %s32
      %s52 = sphi 0, %s52
      %s54 = sphi 0, %s52
      %s55 = sphi 0, %s54
      %s69 = sphi 0, %s55
      %s73 = sphi 0, %s73
      %s75 = sphi 0, %s73
      %s76 = sphi 0, %s75
      %s90 = sphi 0, %s76
      %s94 = sphi 0, %s94
      %s96 = sphi 0, %s94
      %s97 = sphi 0, %s96
      %s111 = sphi 0, %s97
      %s115 = sphi 0, %s115
      %s117 = sphi 0, %s115
      %s118 = sphi 0, %s117
      %s132 = sphi 0, %s118
      %s138 = sphi 0, %s140
      %s141 = sphi 0, %s138
      %s142 = sphi 0, %s141
      %s158 = sphi 0, %s142
    $region4: #{tpu_custom_call.1} parent=1 // loop_header_branch
      %21 = sbr.rel (%p19) target = $region8
    $region5: #{tpu_custom_call.1} parent=1 // loop_body
      %s23 = ssub.s32 %s18, 1
      %s24 = ssub.s32 %s18, 2
      %s25 = sadd.s32 %s18, 1
      %s26 = ssub.s32 %s18, %s25
      %p27 = scmp.eq.s32.totalorder %s26, 0
      %s29 = sadd.s32 %s28, 1
      %s30 = scalar_select %p27, %s28, %s29
      %p33 = pneg %p27
      %p34 = scmp.eq.s32.totalorder %s18, 1
      %p35 = por %p33, %p34
      %p36 = scmp.ne.s32.totalorder %s28, %s31
      %p37 = scmp.eq.s32.totalorder %s18, 0
      %p38 = por %p36, %p37
      %p39 = scmp.ne.s32.totalorder %s28, %s31
      %p40 = scmp.eq.s32.totalorder %s23, 1
      %p41 = por %p39, %p40
      %p42 = scmp.ne.s32.totalorder %s31, %s32
      %p43 = scmp.eq.s32.totalorder %s23, 0
      %p44 = por %p42, %p43
      %p45 = scmp.ne.s32.totalorder %s31, %s32
      %p46 = scmp.eq.s32.totalorder %s24, 1
      %p47 = por %p45, %p46
      %p49 = scmp.ne.s32.totalorder %s32, %s48
      %p50 = scmp.eq.s32.totalorder %s24, 0
      %p51 = por %p49, %p50
      %s53 = sadd.s32 %s52, 1
      %p56 = scmp.eq.s32.totalorder %s18, 1
      %p57 = scmp.ne.s32.totalorder %s52, %s54
      %p58 = scmp.eq.s32.totalorder %s18, 0
      %p59 = por %p57, %p58
      %p60 = scmp.ne.s32.totalorder %s52, %s54
      %p61 = scmp.eq.s32.totalorder %s23, 1
      %p62 = por %p60, %p61
      %p63 = scmp.ne.s32.totalorder %s54, %s55
      %p64 = scmp.eq.s32.totalorder %s23, 0
      %p65 = por %p63, %p64
      %p66 = scmp.ne.s32.totalorder %s54, %s55
      %p67 = scmp.eq.s32.totalorder %s24, 1
      %p68 = por %p66, %p67
      %p70 = scmp.ne.s32.totalorder %s55, %s69
      %p71 = scmp.eq.s32.totalorder %s24, 0
      %p72 = por %p70, %p71
      %s74 = sadd.s32 %s73, 1
      %p77 = scmp.eq.s32.totalorder %s18, 1
      %p78 = scmp.ne.s32.totalorder %s73, %s75
      %p79 = scmp.eq.s32.totalorder %s18, 0
      %p80 = por %p78, %p79
      %p81 = scmp.ne.s32.totalorder %s73, %s75
      %p82 = scmp.eq.s32.totalorder %s23, 1
      %p83 = por %p81, %p82
      %p84 = scmp.ne.s32.totalorder %s75, %s76
      %p85 = scmp.eq.s32.totalorder %s23, 0
      %p86 = por %p84, %p85
      %p87 = scmp.ne.s32.totalorder %s75, %s76
      %p88 = scmp.eq.s32.totalorder %s24, 1
      %p89 = por %p87, %p88
      %p91 = scmp.ne.s32.totalorder %s76, %s90
      %p92 = scmp.eq.s32.totalorder %s24, 0
      %p93 = por %p91, %p92
      %s95 = sadd.s32 %s94, 1
      %p98 = scmp.eq.s32.totalorder %s18, 1
      %p99 = scmp.ne.s32.totalorder %s94, %s96
      %p100 = scmp.eq.s32.totalorder %s18, 0
      %p101 = por %p99, %p100
      %p102 = scmp.ne.s32.totalorder %s94, %s96
      %p103 = scmp.eq.s32.totalorder %s23, 1
      %p104 = por %p102, %p103
      %p105 = scmp.ne.s32.totalorder %s96, %s97
      %p106 = scmp.eq.s32.totalorder %s23, 0
      %p107 = por %p105, %p106
      %p108 = scmp.ne.s32.totalorder %s96, %s97
      %p109 = scmp.eq.s32.totalorder %s24, 1
      %p110 = por %p108, %p109
      %p112 = scmp.ne.s32.totalorder %s97, %s111
      %p113 = scmp.eq.s32.totalorder %s24, 0
      %p114 = por %p112, %p113
      %s116 = sadd.s32 %s115, 1
      %p119 = scmp.eq.s32.totalorder %s18, 1
      %p120 = scmp.ne.s32.totalorder %s115, %s117
      %p121 = scmp.eq.s32.totalorder %s18, 0
      %p122 = por %p120, %p121
      %p123 = scmp.ne.s32.totalorder %s115, %s117
      %p124 = scmp.eq.s32.totalorder %s23, 1
      %p125 = por %p123, %p124
      %p126 = scmp.ne.s32.totalorder %s117, %s118
      %p127 = scmp.eq.s32.totalorder %s23, 0
      %p128 = por %p126, %p127
      %p129 = scmp.ne.s32.totalorder %s117, %s118
      %p130 = scmp.eq.s32.totalorder %s24, 1
      %p131 = por %p129, %p130
      %p133 = scmp.ne.s32.totalorder %s118, %s132
      %p134 = scmp.eq.s32.totalorder %s24, 0
      %p135 = por %p133, %p134
      %s136 = ssub.s32 %s18, %s25
      %p137 = scmp.eq.s32.totalorder %s136, 0
      %s139 = sadd.s32 %s138, 1
      %s140 = scalar_select %p137, %s138, %s139
      %p143 = pneg %p137
      %p144 = scmp.eq.s32.totalorder %s18, 1
      %p145 = por %p143, %p144
      %p146 = scmp.ne.s32.totalorder %s138, %s141
      %p147 = scmp.eq.s32.totalorder %s18, 0
      %p148 = por %p146, %p147
      %p149 = scmp.ne.s32.totalorder %s138, %s141
      %p150 = scmp.eq.s32.totalorder %s23, 1
      %p151 = por %p149, %p150
      %p152 = scmp.ne.s32.totalorder %s141, %s142
      %p153 = scmp.eq.s32.totalorder %s23, 0
      %p154 = por %p152, %p153
      %p155 = scmp.ne.s32.totalorder %s141, %s142
      %p156 = scmp.eq.s32.totalorder %s24, 1
      %p157 = por %p155, %p156
      %p159 = scmp.ne.s32.totalorder %s142, %s158
      %p160 = scmp.eq.s32.totalorder %s24, 0
      %p161 = por %p159, %p160
      %p162 = scmp.le.s32.totalorder 1, %s18
      %p163 = scmp.lt.s32.totalorder %s18, 3
      %p164 = pnand %p162, %p163
      %p165 = pneg %p164
      // Predicated region
      $region9: #{tpu_custom_call.1} parent=5 // pred_check
        _
      $region10: #{tpu_custom_call.1} parent=5 // pred_check_branch
        %167 = sbr.rel (%p164) target = $region12
      $region11: #{tpu_custom_call.1} parent=5 // pred_region
        %s168 = ssub.s32 %s18, 1
        // Predicated region
        $region13: #{tpu_custom_call.1} parent=11 // pred_check
          %p169 = pneg %p65
        $region14: #{tpu_custom_call.1} parent=11 // pred_check_branch
          %171 = sbr.rel (%p169) target = $region16
        $region15: #{tpu_custom_call.1} parent=11 // pred_region
          %173 = vsyncadd [#allocation7], 0
          %s174 = sshll.u32 %s1, 4
          %s175 = int_to_ptr.hbm [resolvable:$true] %s174
          %s176 = sshll.u32 [#allocation6], 4
          %s177 = int_to_ptr.vmem [resolvable:$true] %s176
          %182 = dma.hbm_to_vmem [thread:$0]  %s175, 18432, %s177, [#allocation7], 128, 128, 8
        $region16: #{tpu_custom_call.1} parent=11 // pred_fallthru
          _
        // Predicated region
        $region17: #{tpu_custom_call.1} parent=11 // pred_check
          %p183 = pneg %p86
        $region18: #{tpu_custom_call.1} parent=11 // pred_check_branch
          %185 = sbr.rel (%p183) target = $region20
        $region19: #{tpu_custom_call.1} parent=11 // pred_region
          _
        $region20: #{tpu_custom_call.1} parent=11 // pred_fallthru
          _
        // Predicated region
        $region21: #{tpu_custom_call.1} parent=11 // pred_check
          %p186 = pneg %p107
        $region22: #{tpu_custom_call.1} parent=11 // pred_check_branch
          %188 = sbr.rel (%p186) target = $region24
        $region23: #{tpu_custom_call.1} parent=11 // pred_region
          %190 = vsyncadd [#allocation7], 0
          %s191 = sshll.u32 %s3, 4
          %s192 = int_to_ptr.hbm [resolvable:$true] %s191
          %s193 = sshll.u32 [#allocation8], 4
          %s194 = int_to_ptr.vmem [resolvable:$true] %s193
          %199 = dma.hbm_to_vmem [thread:$0]  %s192, 18432, %s194, [#allocation7], 128, 128, 8
        $region24: #{tpu_custom_call.1} parent=11 // pred_fallthru
          _
        // Predicated region
        $region25: #{tpu_custom_call.1} parent=11 // pred_check
          %p200 = pneg %p128
        $region26: #{tpu_custom_call.1} parent=11 // pred_check_branch
          %202 = sbr.rel (%p200) target = $region28
        $region27: #{tpu_custom_call.1} parent=11 // pred_region
          _
        $region28: #{tpu_custom_call.1} parent=11 // pred_fallthru
          _
      $region12: #{tpu_custom_call.1} parent=5 // pred_fallthru
        _
      %p203 = scmp.lt.s32.totalorder %s18, 2
      // Predicated region
      $region29: #{tpu_custom_call.1} parent=5 // pred_check
        %p204 = pneg %p203
      $region30: #{tpu_custom_call.1} parent=5 // pred_check_branch
        %206 = sbr.rel (%p204) target = $region32
      $region31: #{tpu_custom_call.1} parent=5 // pred_region
        // Predicated region
        $region33: #{tpu_custom_call.1} parent=31 // pred_check
          %p207 = pneg %p38
        $region34: #{tpu_custom_call.1} parent=31 // pred_check_branch
          %209 = sbr.rel (%p207) target = $region36
        $region35: #{tpu_custom_call.1} parent=31 // pred_region
          %s210 = sand.u32 %s28, 1
          %s211 = scalar_lea.sflag [#allocation4], %s210
          %s212 = sand.u32 %s28, 1
          %s213 = smul.addr %s212, 256
          %s214 = scalar_lea.vmem [#allocation3], %s213
          %216 = vsyncadd %s211, 0
          %s217 = smul.addr %s18, 32
          %s218 = smul.addr %s217, 8
          %s219 = scalar_lea.hbm %s0, %s218
          %s220 = sshll.u32 %s219, 4
          %s221 = int_to_ptr.hbm [resolvable:$true] %s220
          %s222 = sshll.u32 %s214, 4
          %s223 = int_to_ptr.vmem [resolvable:$true] %s222
          %228 = dma.hbm_to_vmem [thread:$0]  %s221, 4096, %s223, %s211, 128, 128, 8
        $region36: #{tpu_custom_call.1} parent=31 // pred_fallthru
          _
      $region32: #{tpu_custom_call.1} parent=5 // pred_fallthru
        _
      %p229 = scmp.le.s32.totalorder 1, %s18
      %p230 = scmp.lt.s32.totalorder %s18, 3
      %p231 = pnand %p229, %p230
      %p232 = pneg %p231
      // Predicated region
      $region37: #{tpu_custom_call.1} parent=5 // pred_check
        _
      $region38: #{tpu_custom_call.1} parent=5 // pred_check_branch
        %234 = sbr.rel (%p231) target = $region40
      $region39: #{tpu_custom_call.1} parent=5 // pred_region
        %s235 = ssub.s32 %s18, 1
        %s236 = sand.u32 %s31, 1
        %s237 = scalar_lea.sflag [#allocation4], %s236
        %s238 = sand.u32 %s31, 1
        %s239 = smul.addr %s238, 256
        %s240 = scalar_lea.vmem [#allocation3], %s239
        // Predicated region
        $region41: #{tpu_custom_call.1} parent=39 // pred_check
          %p241 = pneg %p44
        $region42: #{tpu_custom_call.1} parent=39 // pred_check_branch
          %243 = sbr.rel (%p241) target = $region44
        $region43: #{tpu_custom_call.1} parent=39 // pred_region
          %245 = dma.done %s237, 4096
        $region44: #{tpu_custom_call.1} parent=39 // pred_fallthru
          _
        // Predicated region
        $region45: #{tpu_custom_call.1} parent=39 // pred_check
          %p246 = pneg %p65
        $region46: #{tpu_custom_call.1} parent=39 // pred_check_branch
          %248 = sbr.rel (%p246) target = $region48
        $region47: #{tpu_custom_call.1} parent=39 // pred_region
          %250 = dma.done [#allocation7], 18432
        $region48: #{tpu_custom_call.1} parent=39 // pred_fallthru
          _
        // Predicated region
        $region49: #{tpu_custom_call.1} parent=39 // pred_check
          %p251 = pneg %p107
        $region50: #{tpu_custom_call.1} parent=39 // pred_check_branch
          %253 = sbr.rel (%p251) target = $region52
        $region51: #{tpu_custom_call.1} parent=39 // pred_region
          %255 = dma.done [#allocation7], 18432
        $region52: #{tpu_custom_call.1} parent=39 // pred_fallthru
          _
        %s256 = sand.u32 %s31, 1
        %s257 = scalar_lea.sflag [#allocation4], %s256
        %s258 = sand.u32 %s31, 1
        %s259 = smul.addr %s258, 256
        %s260 = scalar_lea.vmem [#allocation3], %s259
        %p261 = pneg %p44
        %p262 = pneg %p41
        %p263 = pneg %p65
        %p264 = pneg %p62
        %p265 = pneg %p86
        %p266 = pneg %p83
        %p267 = pneg %p107
        %p268 = pneg %p104
        %p269 = pneg %p128
        %p270 = pneg %p125
        %p271 = pneg %p154
        %p272 = pneg %p151
        %s273 = sand.u32 %s141, 1
        %s274 = scalar_lea.sflag [#allocation5], %s273
        %s275 = sand.u32 %s141, 1
        %s276 = smul.addr %s275, 64
        %s277 = scalar_lea.vmem [#allocation9], %s276
        %278 = vst [vmem:[#allocation2] sm:$0xff] 0.0
        %279 = vst [vmem:[#allocation2 + $0x8] sm:$0xff] 0.0
        %280 = vst [vmem:[#allocation2 + $0x10] sm:$0x3] 0.0
        %281 = vst [vmem:[#allocation2 + $0x18] sm:$0xff] 0.0
        %282 = vst [vmem:[#allocation2 + $0x20] sm:$0xff] 0.0
        %283 = vst [vmem:[#allocation2 + $0x28] sm:$0x3] 0.0
        %284 = vst [vmem:[#allocation2 + $0x30] sm:$0xff] 0.0
        %285 = vst [vmem:[#allocation2 + $0x38] sm:$0xff] 0.0
        %286 = vst [vmem:[#allocation2 + $0x40] sm:$0x3] 0.0
        %287 = vst [vmem:[#allocation2 + $0x48] sm:$0xff] 0.0
        %288 = vst [vmem:[#allocation2 + $0x50] sm:$0xff] 0.0
        %289 = vst [vmem:[#allocation2 + $0x58] sm:$0x3] 0.0
        %290 = vst [vmem:[#allocation2 + $0x60] sm:$0xff] 0.0
        %291 = vst [vmem:[#allocation2 + $0x68] sm:$0xff] 0.0
        %292 = vst [vmem:[#allocation2 + $0x70] sm:$0x3] 0.0
        %293 = vst [vmem:[#allocation2 + $0x78] sm:$0xff] 0.0
        %294 = vst [vmem:[#allocation2 + $0x80] sm:$0xff] 0.0
        %295 = vst [vmem:[#allocation2 + $0x88] sm:$0x3] 0.0
        %296 = vst [vmem:[#allocation2 + $0x90] sm:$0xff] 0.0
        %297 = vst [vmem:[#allocation2 + $0x98] sm:$0xff] 0.0
        %298 = vst [vmem:[#allocation2 + $0xa0] sm:$0x3] 0.0
        %299 = vst [vmem:[#allocation2 + $0xa8] sm:$0xff] 0.0
        %300 = vst [vmem:[#allocation2 + $0xb0] sm:$0xff] 0.0
        %301 = vst [vmem:[#allocation2 + $0xb8] sm:$0x3] 0.0
        %302 = vst [vmem:[#allocation2 + $0xc0] sm:$0xff] 0.0
        %303 = vst [vmem:[#allocation2 + $0xc8] sm:$0xff] 0.0
        %304 = vst [vmem:[#allocation2 + $0xd0] sm:$0x3] 0.0
        %305 = vst [vmem:[#allocation2 + $0xd8] sm:$0xff] 0.0
        %306 = vst [vmem:[#allocation2 + $0xe0] sm:$0xff] 0.0
        %307 = vst [vmem:[#allocation2 + $0xe8] sm:$0x3] 0.0
        %308 = vst [vmem:[#allocation2 + $0xf0] sm:$0xff] 0.0
        %309 = vst [vmem:[#allocation2 + $0xf8] sm:$0xff] 0.0
        %310 = vst [vmem:[#allocation2 + $0x100] sm:$0x3] 0.0
        %311 = vst [vmem:[#allocation2 + $0x108] sm:$0xff] 0.0
        %312 = vst [vmem:[#allocation2 + $0x110] sm:$0xff] 0.0
        %313 = vst [vmem:[#allocation2 + $0x118] sm:$0x3] 0.0
        %314 = vst [vmem:[#allocation2 + $0x120] sm:$0xff] 0.0
        %315 = vst [vmem:[#allocation2 + $0x128] sm:$0xff] 0.0
        %316 = vst [vmem:[#allocation2 + $0x130] sm:$0x3] 0.0
        %317 = vst [vmem:[#allocation2 + $0x138] sm:$0xff] 0.0
        %318 = vst [vmem:[#allocation2 + $0x140] sm:$0xff] 0.0
        %319 = vst [vmem:[#allocation2 + $0x148] sm:$0x3] 0.0
        %320 = vst [vmem:[#allocation2 + $0x150] sm:$0xff] 0.0
        %321 = vst [vmem:[#allocation2 + $0x158] sm:$0xff] 0.0
        %322 = vst [vmem:[#allocation2 + $0x160] sm:$0x3] 0.0
        %323 = vst [vmem:[#allocation2 + $0x168] sm:$0xff] 0.0
        %324 = vst [vmem:[#allocation2 + $0x170] sm:$0xff] 0.0
        %325 = vst [vmem:[#allocation2 + $0x178] sm:$0x3] 0.0
        %326 = vst [vmem:[#allocation2 + $0x180] sm:$0xff] 0.0
        %327 = vst [vmem:[#allocation2 + $0x188] sm:$0xff] 0.0
        %328 = vst [vmem:[#allocation2 + $0x190] sm:$0x3] 0.0
        %329 = vst [vmem:[#allocation2 + $0x198] sm:$0xff] 0.0
        %330 = vst [vmem:[#allocation2 + $0x1a0] sm:$0xff] 0.0
        %331 = vst [vmem:[#allocation2 + $0x1a8] sm:$0x3] 0.0
        %v332 = vld [vmem:[%s240] sm:$0xff]
        %v333 = vld [vmem:[%s240 + $0x8] sm:$0xff]
        %v334 = vld [vmem:[%s240 + $0x10] sm:$0xff]
        %v335 = vld [vmem:[%s240 + $0x18] sm:$0xff]
        %v336 = vld [vmem:[%s240 + $0x20] sm:$0xff]
        %v337 = vld [vmem:[%s240 + $0x28] sm:$0xff]
        %v338 = vld [vmem:[%s240 + $0x30] sm:$0xff]
        %v339 = vld [vmem:[%s240 + $0x38] sm:$0xff]
        %v340 = vld [vmem:[%s240 + $0x40] sm:$0xff]
        %v341 = vld [vmem:[%s240 + $0x48] sm:$0xff]
        %v342 = vld [vmem:[%s240 + $0x50] sm:$0xff]
        %v343 = vld [vmem:[%s240 + $0x58] sm:$0xff]
        %v344 = vld [vmem:[%s240 + $0x60] sm:$0xff]
        %v345 = vld [vmem:[%s240 + $0x68] sm:$0xff]
        %v346 = vld [vmem:[%s240 + $0x70] sm:$0xff]
        %v347 = vld [vmem:[%s240 + $0x78] sm:$0xff]
        %v348 = vld [vmem:[%s240 + $0x80] sm:$0xff]
        %v349 = vld [vmem:[%s240 + $0x88] sm:$0xff]
        %v350 = vld [vmem:[%s240 + $0x90] sm:$0xff]
        %v351 = vld [vmem:[%s240 + $0x98] sm:$0xff]
        %v352 = vld [vmem:[%s240 + $0xa0] sm:$0xff]
        %v353 = vld [vmem:[%s240 + $0xa8] sm:$0xff]
        %v354 = vld [vmem:[%s240 + $0xb0] sm:$0xff]
        %v355 = vld [vmem:[%s240 + $0xb8] sm:$0xff]
        %v356 = vld [vmem:[%s240 + $0xc0] sm:$0xff]
        %v357 = vld [vmem:[%s240 + $0xc8] sm:$0xff]
        %v358 = vld [vmem:[%s240 + $0xd0] sm:$0xff]
        %v359 = vld [vmem:[%s240 + $0xd8] sm:$0xff]
        %v360 = vld [vmem:[%s240 + $0xe0] sm:$0xff]
        %v361 = vld [vmem:[%s240 + $0xe8] sm:$0xff]
        %v362 = vld [vmem:[%s240 + $0xf0] sm:$0xff]
        %v363 = vld [vmem:[%s240 + $0xf8] sm:$0xff]
        %s364 = scalar_lea.vmem [#allocation2], 24
        %365 = vst [vmem:[%s364 + $0x1] sm:$0xff] %v332
        %366 = vst [vmem:[%s364 + $0x9] sm:$0xff] %v333
        %367 = vst [vmem:[%s364 + $0x19] sm:$0xff] %v334
        %368 = vst [vmem:[%s364 + $0x21] sm:$0xff] %v335
        %369 = vst [vmem:[%s364 + $0x31] sm:$0xff] %v336
        %370 = vst [vmem:[%s364 + $0x39] sm:$0xff] %v337
        %371 = vst [vmem:[%s364 + $0x49] sm:$0xff] %v338
        %372 = vst [vmem:[%s364 + $0x51] sm:$0xff] %v339
        %373 = vst [vmem:[%s364 + $0x61] sm:$0xff] %v340
        %374 = vst [vmem:[%s364 + $0x69] sm:$0xff] %v341
        %375 = vst [vmem:[%s364 + $0x79] sm:$0xff] %v342
        %376 = vst [vmem:[%s364 + $0x81] sm:$0xff] %v343
        %377 = vst [vmem:[%s364 + $0x91] sm:$0xff] %v344
        %378 = vst [vmem:[%s364 + $0x99] sm:$0xff] %v345
        %379 = vst [vmem:[%s364 + $0xa9] sm:$0xff] %v346
        %380 = vst [vmem:[%s364 + $0xb1] sm:$0xff] %v347
        %381 = vst [vmem:[%s364 + $0xc1] sm:$0xff] %v348
        %382 = vst [vmem:[%s364 + $0xc9] sm:$0xff] %v349
        %383 = vst [vmem:[%s364 + $0xd9] sm:$0xff] %v350
        %384 = vst [vmem:[%s364 + $0xe1] sm:$0xff] %v351
        %385 = vst [vmem:[%s364 + $0xf1] sm:$0xff] %v352
        %386 = vst [vmem:[%s364 + $0xf9] sm:$0xff] %v353
        %387 = vst [vmem:[%s364 + $0x109] sm:$0xff] %v354
        %388 = vst [vmem:[%s364 + $0x111] sm:$0xff] %v355
        %389 = vst [vmem:[%s364 + $0x121] sm:$0xff] %v356
        %390 = vst [vmem:[%s364 + $0x129] sm:$0xff] %v357
        %391 = vst [vmem:[%s364 + $0x139] sm:$0xff] %v358
        %392 = vst [vmem:[%s364 + $0x141] sm:$0xff] %v359
        %393 = vst [vmem:[%s364 + $0x151] sm:$0xff] %v360
        %394 = vst [vmem:[%s364 + $0x159] sm:$0xff] %v361
        %395 = vst [vmem:[%s364 + $0x169] sm:$0xff] %v362
        %396 = vst [vmem:[%s364 + $0x171] sm:$0xff] %v363
        %v397 = vld [vmem:[#allocation6] sm:$0xff]
        %v398 = vld [vmem:[#allocation6 + $0x8] sm:$0xff]
        %v399 = vld [vmem:[#allocation6 + $0x10] sm:$0xff]
        %v400 = vld [vmem:[#allocation6 + $0x18] sm:$0xff]
        %v401 = vld [vmem:[#allocation6 + $0x20] sm:$0xff]
        %v402 = vld [vmem:[#allocation6 + $0x28] sm:$0xff]
        %v403 = vld [vmem:[#allocation6 + $0x30] sm:$0xff]
        %v404 = vld [vmem:[#allocation6 + $0x38] sm:$0xff]
        %v405 = vld [vmem:[#allocation6 + $0x40] sm:$0xff]
        %v406 = vld [vmem:[#allocation6 + $0x48] sm:$0xff]
        %v407 = vld [vmem:[#allocation6 + $0x50] sm:$0xff]
        %v408 = vld [vmem:[#allocation6 + $0x58] sm:$0xff]
        %v409 = vld [vmem:[#allocation6 + $0x60] sm:$0xff]
        %v410 = vld [vmem:[#allocation6 + $0x68] sm:$0xff]
        %v411 = vld [vmem:[#allocation6 + $0x70] sm:$0xff]
        %v412 = vld [vmem:[#allocation6 + $0x78] sm:$0xff]
        %v413 = vld [vmem:[#allocation6 + $0x80] sm:$0xff]
        %v414 = vld [vmem:[#allocation6 + $0x88] sm:$0xff]
        %v415 = vld [vmem:[#allocation6 + $0x90] sm:$0xff]
        %v416 = vld [vmem:[#allocation6 + $0x98] sm:$0xff]
        %v417 = vld [vmem:[#allocation6 + $0xa0] sm:$0xff]
        %v418 = vld [vmem:[#allocation6 + $0xa8] sm:$0xff]
        %v419 = vld [vmem:[#allocation6 + $0xb0] sm:$0xff]
        %v420 = vld [vmem:[#allocation6 + $0xb8] sm:$0xff]
        %v421 = vld [vmem:[#allocation6 + $0xc0] sm:$0xff]
        %v422 = vld [vmem:[#allocation6 + $0xc8] sm:$0xff]
        %v423 = vld [vmem:[#allocation6 + $0xd0] sm:$0xff]
        %v424 = vld [vmem:[#allocation6 + $0xd8] sm:$0xff]
        %v425 = vld [vmem:[#allocation6 + $0xe0] sm:$0xff]
        %v426 = vld [vmem:[#allocation6 + $0xe8] sm:$0xff]
        %v427 = vld [vmem:[#allocation6 + $0xf0] sm:$0xff]
        %v428 = vld [vmem:[#allocation6 + $0xf8] sm:$0xff]
        %v429 = vld [vmem:[#allocation6 + $0x100] sm:$0xff]
        %v430 = vld [vmem:[#allocation6 + $0x108] sm:$0xff]
        %v431 = vld [vmem:[#allocation6 + $0x110] sm:$0xff]
        %v432 = vld [vmem:[#allocation6 + $0x118] sm:$0xff]
        %v433 = vld [vmem:[#allocation6 + $0x120] sm:$0xff]
        %v434 = vld [vmem:[#allocation6 + $0x128] sm:$0xff]
        %v435 = vld [vmem:[#allocation6 + $0x130] sm:$0xff]
        %v436 = vld [vmem:[#allocation6 + $0x138] sm:$0xff]
        %v437 = vld [vmem:[#allocation6 + $0x140] sm:$0xff]
        %v438 = vld [vmem:[#allocation6 + $0x148] sm:$0xff]
        %v439 = vld [vmem:[#allocation6 + $0x150] sm:$0xff]
        %v440 = vld [vmem:[#allocation6 + $0x158] sm:$0xff]
        %v441 = vld [vmem:[#allocation6 + $0x160] sm:$0xff]
        %v442 = vld [vmem:[#allocation6 + $0x168] sm:$0xff]
        %v443 = vld [vmem:[#allocation6 + $0x170] sm:$0xff]
        %v444 = vld [vmem:[#allocation6 + $0x178] sm:$0xff]
        %v445 = vld [vmem:[#allocation6 + $0x180] sm:$0xff]
        %v446 = vld [vmem:[#allocation6 + $0x188] sm:$0xff]
        %v447 = vld [vmem:[#allocation6 + $0x190] sm:$0xff]
        %v448 = vld [vmem:[#allocation6 + $0x198] sm:$0xff]
        %v449 = vld [vmem:[#allocation6 + $0x1a0] sm:$0xff]
        %v450 = vld [vmem:[#allocation6 + $0x1a8] sm:$0xff]
        %v451 = vld [vmem:[#allocation6 + $0x1b0] sm:$0xff]
        %v452 = vld [vmem:[#allocation6 + $0x1b8] sm:$0xff]
        %v453 = vld [vmem:[#allocation6 + $0x1c0] sm:$0xff]
        %v454 = vld [vmem:[#allocation6 + $0x1c8] sm:$0xff]
        %v455 = vld [vmem:[#allocation6 + $0x1d0] sm:$0xff]
        %v456 = vld [vmem:[#allocation6 + $0x1d8] sm:$0xff]
        %v457 = vld [vmem:[#allocation6 + $0x1e0] sm:$0xff]
        %v458 = vld [vmem:[#allocation6 + $0x1e8] sm:$0xff]
        %v459 = vld [vmem:[#allocation6 + $0x1f0] sm:$0xff]
        %v460 = vld [vmem:[#allocation6 + $0x1f8] sm:$0xff]
        %v461 = vld [vmem:[#allocation6 + $0x200] sm:$0xff]
        %v462 = vld [vmem:[#allocation6 + $0x208] sm:$0xff]
        %v463 = vld [vmem:[#allocation6 + $0x210] sm:$0xff]
        %v464 = vld [vmem:[#allocation6 + $0x218] sm:$0xff]
        %v465 = vld [vmem:[#allocation6 + $0x220] sm:$0xff]
        %v466 = vld [vmem:[#allocation6 + $0x228] sm:$0xff]
        %v467 = vld [vmem:[#allocation6 + $0x230] sm:$0xff]
        %v468 = vld [vmem:[#allocation6 + $0x238] sm:$0xff]
        %v469 = vld [vmem:[#allocation6 + $0x240] sm:$0xff]
        %v470 = vld [vmem:[#allocation6 + $0x248] sm:$0xff]
        %v471 = vld [vmem:[#allocation6 + $0x250] sm:$0xff]
        %v472 = vld [vmem:[#allocation6 + $0x258] sm:$0xff]
        %v473 = vld [vmem:[#allocation6 + $0x260] sm:$0xff]
        %v474 = vld [vmem:[#allocation6 + $0x268] sm:$0xff]
        %v475 = vld [vmem:[#allocation6 + $0x270] sm:$0xff]
        %v476 = vld [vmem:[#allocation6 + $0x278] sm:$0xff]
        %v477 = vld [vmem:[#allocation6 + $0x280] sm:$0xff]
        %v478 = vld [vmem:[#allocation6 + $0x288] sm:$0xff]
        %v479 = vld [vmem:[#allocation6 + $0x290] sm:$0xff]
        %v480 = vld [vmem:[#allocation6 + $0x298] sm:$0xff]
        %v481 = vld [vmem:[#allocation6 + $0x2a0] sm:$0xff]
        %v482 = vld [vmem:[#allocation6 + $0x2a8] sm:$0xff]
        %v483 = vld [vmem:[#allocation6 + $0x2b0] sm:$0xff]
        %v484 = vld [vmem:[#allocation6 + $0x2b8] sm:$0xff]
        %v485 = vld [vmem:[#allocation6 + $0x2c0] sm:$0xff]
        %v486 = vld [vmem:[#allocation6 + $0x2c8] sm:$0xff]
        %v487 = vld [vmem:[#allocation6 + $0x2d0] sm:$0xff]
        %v488 = vld [vmem:[#allocation6 + $0x2d8] sm:$0xff]
        %v489 = vld [vmem:[#allocation6 + $0x2e0] sm:$0xff]
        %v490 = vld [vmem:[#allocation6 + $0x2e8] sm:$0xff]
        %v491 = vld [vmem:[#allocation6 + $0x2f0] sm:$0xff]
        %v492 = vld [vmem:[#allocation6 + $0x2f8] sm:$0xff]
        %v493 = vld [vmem:[#allocation6 + $0x300] sm:$0xff]
        %v494 = vld [vmem:[#allocation6 + $0x308] sm:$0xff]
        %v495 = vld [vmem:[#allocation6 + $0x310] sm:$0xff]
        %v496 = vld [vmem:[#allocation6 + $0x318] sm:$0xff]
        %v497 = vld [vmem:[#allocation6 + $0x320] sm:$0xff]
        %v498 = vld [vmem:[#allocation6 + $0x328] sm:$0xff]
        %v499 = vld [vmem:[#allocation6 + $0x330] sm:$0xff]
        %v500 = vld [vmem:[#allocation6 + $0x338] sm:$0xff]
        %v501 = vld [vmem:[#allocation6 + $0x340] sm:$0xff]
        %v502 = vld [vmem:[#allocation6 + $0x348] sm:$0xff]
        %v503 = vld [vmem:[#allocation6 + $0x350] sm:$0xff]
        %v504 = vld [vmem:[#allocation6 + $0x358] sm:$0xff]
        %v505 = vld [vmem:[#allocation6 + $0x360] sm:$0xff]
        %v506 = vld [vmem:[#allocation6 + $0x368] sm:$0xff]
        %v507 = vld [vmem:[#allocation6 + $0x370] sm:$0xff]
        %v508 = vld [vmem:[#allocation6 + $0x378] sm:$0xff]
        %v509 = vld [vmem:[#allocation6 + $0x380] sm:$0xff]
        %v510 = vld [vmem:[#allocation6 + $0x388] sm:$0xff]
        %v511 = vld [vmem:[#allocation6 + $0x390] sm:$0xff]
        %v512 = vld [vmem:[#allocation6 + $0x398] sm:$0xff]
        %v513 = vld [vmem:[#allocation6 + $0x3a0] sm:$0xff]
        %v514 = vld [vmem:[#allocation6 + $0x3a8] sm:$0xff]
        %v515 = vld [vmem:[#allocation6 + $0x3b0] sm:$0xff]
        %v516 = vld [vmem:[#allocation6 + $0x3b8] sm:$0xff]
        %v517 = vld [vmem:[#allocation6 + $0x3c0] sm:$0xff]
        %v518 = vld [vmem:[#allocation6 + $0x3c8] sm:$0xff]
        %v519 = vld [vmem:[#allocation6 + $0x3d0] sm:$0xff]
        %v520 = vld [vmem:[#allocation6 + $0x3d8] sm:$0xff]
        %v521 = vld [vmem:[#allocation6 + $0x3e0] sm:$0xff]
        %v522 = vld [vmem:[#allocation6 + $0x3e8] sm:$0xff]
        %v523 = vld [vmem:[#allocation6 + $0x3f0] sm:$0xff]
        %v524 = vld [vmem:[#allocation6 + $0x3f8] sm:$0xff]
        %v525 = vld [vmem:[#allocation6 + $0x400] sm:$0xff]
        %v526 = vld [vmem:[#allocation6 + $0x408] sm:$0xff]
        %v527 = vld [vmem:[#allocation6 + $0x410] sm:$0xff]
        %v528 = vld [vmem:[#allocation6 + $0x418] sm:$0xff]
        %v529 = vld [vmem:[#allocation6 + $0x420] sm:$0xff]
        %v530 = vld [vmem:[#allocation6 + $0x428] sm:$0xff]
        %v531 = vld [vmem:[#allocation6 + $0x430] sm:$0xff]
        %v532 = vld [vmem:[#allocation6 + $0x438] sm:$0xff]
        %v533 = vld [vmem:[#allocation6 + $0x440] sm:$0xff]
        %v534 = vld [vmem:[#allocation6 + $0x448] sm:$0xff]
        %v535 = vld [vmem:[#allocation6 + $0x450] sm:$0xff]
        %v536 = vld [vmem:[#allocation6 + $0x458] sm:$0xff]
        %v537 = vld [vmem:[#allocation6 + $0x460] sm:$0xff]
        %v538 = vld [vmem:[#allocation6 + $0x468] sm:$0xff]
        %v539 = vld [vmem:[#allocation6 + $0x470] sm:$0xff]
        %v540 = vld [vmem:[#allocation6 + $0x478] sm:$0xff]
        %v541 = vld [vmem:[%s2] sm:$0x1]
        %v542 = vld [vmem:[#allocation2] sm:$0xff]
        %v543 = vld [vmem:[#allocation2 + $0x8] sm:$0xff]
        %v544 = vld [vmem:[#allocation2 + $0x18] sm:$0xff]
        %v545 = vld [vmem:[#allocation2 + $0x20] sm:$0xff]
        %v546 = vld [vmem:[#allocation2 + $0x30] sm:$0xff]
        %v547 = vld [vmem:[#allocation2 + $0x38] sm:$0xff]
        %v548 = vld [vmem:[#allocation2 + $0x48] sm:$0xff]
        %v549 = vld [vmem:[#allocation2 + $0x50] sm:$0xff]
        %v550 = vld [vmem:[#allocation2 + $0x60] sm:$0xff]
        %v551 = vld [vmem:[#allocation2 + $0x68] sm:$0xff]
        %v552 = vld [vmem:[#allocation2 + $0x78] sm:$0xff]
        %v553 = vld [vmem:[#allocation2 + $0x80] sm:$0xff]
        %v554 = vld [vmem:[#allocation2 + $0x90] sm:$0xff]
        %v555 = vld [vmem:[#allocation2 + $0x98] sm:$0xff]
        %v556 = vld [vmem:[#allocation2 + $0xa8] sm:$0xff]
        %v557 = vld [vmem:[#allocation2 + $0xb0] sm:$0xff]
        %v558 = vld [vmem:[#allocation2 + $0xc0] sm:$0xff]
        %v559 = vld [vmem:[#allocation2 + $0xc8] sm:$0xff]
        %v560 = vld [vmem:[#allocation2 + $0xd8] sm:$0xff]
        %v561 = vld [vmem:[#allocation2 + $0xe0] sm:$0xff]
        %v562 = vld [vmem:[#allocation2 + $0xf0] sm:$0xff]
        %v563 = vld [vmem:[#allocation2 + $0xf8] sm:$0xff]
        %v564 = vld [vmem:[#allocation2 + $0x108] sm:$0xff]
        %v565 = vld [vmem:[#allocation2 + $0x110] sm:$0xff]
        %v566 = vld [vmem:[#allocation2 + $0x120] sm:$0xff]
        %v567 = vld [vmem:[#allocation2 + $0x128] sm:$0xff]
        %v568 = vld [vmem:[#allocation2 + $0x138] sm:$0xff]
        %v569 = vld [vmem:[#allocation2 + $0x140] sm:$0xff]
        %v570 = vld [vmem:[#allocation2 + $0x150] sm:$0xff]
        %v571 = vld [vmem:[#allocation2 + $0x158] sm:$0xff]
        %v572 = vld [vmem:[#allocation2 + $0x168] sm:$0xff]
        %v573 = vld [vmem:[#allocation2 + $0x170] sm:$0xff]
        %v574 = vld [vmem:[#allocation2 + $0x1] sm:$0xff]
        %v575 = vld [vmem:[#allocation2 + $0x9] sm:$0xff]
        %v576 = vld [vmem:[#allocation2 + $0x19] sm:$0xff]
        %v577 = vld [vmem:[#allocation2 + $0x21] sm:$0xff]
        %v578 = vld [vmem:[#allocation2 + $0x31] sm:$0xff]
        %v579 = vld [vmem:[#allocation2 + $0x39] sm:$0xff]
        %v580 = vld [vmem:[#allocation2 + $0x49] sm:$0xff]
        %v581 = vld [vmem:[#allocation2 + $0x51] sm:$0xff]
        %v582 = vld [vmem:[#allocation2 + $0x61] sm:$0xff]
        %v583 = vld [vmem:[#allocation2 + $0x69] sm:$0xff]
        %v584 = vld [vmem:[#allocation2 + $0x79] sm:$0xff]
        %v585 = vld [vmem:[#allocation2 + $0x81] sm:$0xff]
        %v586 = vld [vmem:[#allocation2 + $0x91] sm:$0xff]
        %v587 = vld [vmem:[#allocation2 + $0x99] sm:$0xff]
        %v588 = vld [vmem:[#allocation2 + $0xa9] sm:$0xff]
        %v589 = vld [vmem:[#allocation2 + $0xb1] sm:$0xff]
        %v590 = vld [vmem:[#allocation2 + $0xc1] sm:$0xff]
        %v591 = vld [vmem:[#allocation2 + $0xc9] sm:$0xff]
        %v592 = vld [vmem:[#allocation2 + $0xd9] sm:$0xff]
        %v593 = vld [vmem:[#allocation2 + $0xe1] sm:$0xff]
        %v594 = vld [vmem:[#allocation2 + $0xf1] sm:$0xff]
        %v595 = vld [vmem:[#allocation2 + $0xf9] sm:$0xff]
        %v596 = vld [vmem:[#allocation2 + $0x109] sm:$0xff]
        %v597 = vld [vmem:[#allocation2 + $0x111] sm:$0xff]
        %v598 = vld [vmem:[#allocation2 + $0x121] sm:$0xff]
        %v599 = vld [vmem:[#allocation2 + $0x129] sm:$0xff]
        %v600 = vld [vmem:[#allocation2 + $0x139] sm:$0xff]
        %v601 = vld [vmem:[#allocation2 + $0x141] sm:$0xff]
        %v602 = vld [vmem:[#allocation2 + $0x151] sm:$0xff]
        %v603 = vld [vmem:[#allocation2 + $0x159] sm:$0xff]
        %v604 = vld [vmem:[#allocation2 + $0x169] sm:$0xff]
        %v605 = vld [vmem:[#allocation2 + $0x171] sm:$0xff]
        %v606 = vld [vmem:[#allocation2 + $0x2] sm:$0xff]
        %v607 = vld [vmem:[#allocation2 + $0xa] sm:$0xff]
        %v608 = vld [vmem:[#allocation2 + $0x1a] sm:$0xff]
        %v609 = vld [vmem:[#allocation2 + $0x22] sm:$0xff]
        %v610 = vld [vmem:[#allocation2 + $0x32] sm:$0xff]
        %v611 = vld [vmem:[#allocation2 + $0x3a] sm:$0xff]
        %v612 = vld [vmem:[#allocation2 + $0x4a] sm:$0xff]
        %v613 = vld [vmem:[#allocation2 + $0x52] sm:$0xff]
        %v614 = vld [vmem:[#allocation2 + $0x62] sm:$0xff]
        %v615 = vld [vmem:[#allocation2 + $0x6a] sm:$0xff]
        %v616 = vld [vmem:[#allocation2 + $0x7a] sm:$0xff]
        %v617 = vld [vmem:[#allocation2 + $0x82] sm:$0xff]
        %v618 = vld [vmem:[#allocation2 + $0x92] sm:$0xff]
        %v619 = vld [vmem:[#allocation2 + $0x9a] sm:$0xff]
        %v620 = vld [vmem:[#allocation2 + $0xaa] sm:$0xff]
        %v621 = vld [vmem:[#allocation2 + $0xb2] sm:$0xff]
        %v622 = vld [vmem:[#allocation2 + $0xc2] sm:$0xff]
        %v623 = vld [vmem:[#allocation2 + $0xca] sm:$0xff]
        %v624 = vld [vmem:[#allocation2 + $0xda] sm:$0xff]
        %v625 = vld [vmem:[#allocation2 + $0xe2] sm:$0xff]
        %v626 = vld [vmem:[#allocation2 + $0xf2] sm:$0xff]
        %v627 = vld [vmem:[#allocation2 + $0xfa] sm:$0xff]
        %v628 = vld [vmem:[#allocation2 + $0x10a] sm:$0xff]
        %v629 = vld [vmem:[#allocation2 + $0x112] sm:$0xff]
        %v630 = vld [vmem:[#allocation2 + $0x122] sm:$0xff]
        %v631 = vld [vmem:[#allocation2 + $0x12a] sm:$0xff]
        %v632 = vld [vmem:[#allocation2 + $0x13a] sm:$0xff]
        %v633 = vld [vmem:[#allocation2 + $0x142] sm:$0xff]
        %v634 = vld [vmem:[#allocation2 + $0x152] sm:$0xff]
        %v635 = vld [vmem:[#allocation2 + $0x15a] sm:$0xff]
        %v636 = vld [vmem:[#allocation2 + $0x16a] sm:$0xff]
        %v637 = vld [vmem:[#allocation2 + $0x172] sm:$0xff]
        %v638 = vld [vmem:[%s364] sm:$0xff]
        %v639 = vld [vmem:[%s364 + $0x8] sm:$0xff]
        %v640 = vld [vmem:[%s364 + $0x18] sm:$0xff]
        %v641 = vld [vmem:[%s364 + $0x20] sm:$0xff]
        %v642 = vld [vmem:[%s364 + $0x30] sm:$0xff]
        %v643 = vld [vmem:[%s364 + $0x38] sm:$0xff]
        %v644 = vld [vmem:[%s364 + $0x48] sm:$0xff]
        %v645 = vld [vmem:[%s364 + $0x50] sm:$0xff]
        %v646 = vld [vmem:[%s364 + $0x60] sm:$0xff]
        %v647 = vld [vmem:[%s364 + $0x68] sm:$0xff]
        %v648 = vld [vmem:[%s364 + $0x78] sm:$0xff]
        %v649 = vld [vmem:[%s364 + $0x80] sm:$0xff]
        %v650 = vld [vmem:[%s364 + $0x90] sm:$0xff]
        %v651 = vld [vmem:[%s364 + $0x98] sm:$0xff]
        %v652 = vld [vmem:[%s364 + $0xa8] sm:$0xff]
        %v653 = vld [vmem:[%s364 + $0xb0] sm:$0xff]
        %v654 = vld [vmem:[%s364 + $0xc0] sm:$0xff]
        %v655 = vld [vmem:[%s364 + $0xc8] sm:$0xff]
        %v656 = vld [vmem:[%s364 + $0xd8] sm:$0xff]
        %v657 = vld [vmem:[%s364 + $0xe0] sm:$0xff]
        %v658 = vld [vmem:[%s364 + $0xf0] sm:$0xff]
        %v659 = vld [vmem:[%s364 + $0xf8] sm:$0xff]
        %v660 = vld [vmem:[%s364 + $0x108] sm:$0xff]
        %v661 = vld [vmem:[%s364 + $0x110] sm:$0xff]
        %v662 = vld [vmem:[%s364 + $0x120] sm:$0xff]
        %v663 = vld [vmem:[%s364 + $0x128] sm:$0xff]
        %v664 = vld [vmem:[%s364 + $0x138] sm:$0xff]
        %v665 = vld [vmem:[%s364 + $0x140] sm:$0xff]
        %v666 = vld [vmem:[%s364 + $0x150] sm:$0xff]
        %v667 = vld [vmem:[%s364 + $0x158] sm:$0xff]
        %v668 = vld [vmem:[%s364 + $0x168] sm:$0xff]
        %v669 = vld [vmem:[%s364 + $0x170] sm:$0xff]
        %v670 = vld [vmem:[%s364 + $0x1] sm:$0xff]
        %v671 = vld [vmem:[%s364 + $0x9] sm:$0xff]
        %v672 = vld [vmem:[%s364 + $0x19] sm:$0xff]
        %v673 = vld [vmem:[%s364 + $0x21] sm:$0xff]
        %v674 = vld [vmem:[%s364 + $0x31] sm:$0xff]
        %v675 = vld [vmem:[%s364 + $0x39] sm:$0xff]
        %v676 = vld [vmem:[%s364 + $0x49] sm:$0xff]
        %v677 = vld [vmem:[%s364 + $0x51] sm:$0xff]
        %v678 = vld [vmem:[%s364 + $0x61] sm:$0xff]
        %v679 = vld [vmem:[%s364 + $0x69] sm:$0xff]
        %v680 = vld [vmem:[%s364 + $0x79] sm:$0xff]
        %v681 = vld [vmem:[%s364 + $0x81] sm:$0xff]
        %v682 = vld [vmem:[%s364 + $0x91] sm:$0xff]
        %v683 = vld [vmem:[%s364 + $0x99] sm:$0xff]
        %v684 = vld [vmem:[%s364 + $0xa9] sm:$0xff]
        %v685 = vld [vmem:[%s364 + $0xb1] sm:$0xff]
        %v686 = vld [vmem:[%s364 + $0xc1] sm:$0xff]
        %v687 = vld [vmem:[%s364 + $0xc9] sm:$0xff]
        %v688 = vld [vmem:[%s364 + $0xd9] sm:$0xff]
        %v689 = vld [vmem:[%s364 + $0xe1] sm:$0xff]
        %v690 = vld [vmem:[%s364 + $0xf1] sm:$0xff]
        %v691 = vld [vmem:[%s364 + $0xf9] sm:$0xff]
        %v692 = vld [vmem:[%s364 + $0x109] sm:$0xff]
        %v693 = vld [vmem:[%s364 + $0x111] sm:$0xff]
        %v694 = vld [vmem:[%s364 + $0x121] sm:$0xff]
        %v695 = vld [vmem:[%s364 + $0x129] sm:$0xff]
        %v696 = vld [vmem:[%s364 + $0x139] sm:$0xff]
        %v697 = vld [vmem:[%s364 + $0x141] sm:$0xff]
        %v698 = vld [vmem:[%s364 + $0x151] sm:$0xff]
        %v699 = vld [vmem:[%s364 + $0x159] sm:$0xff]
        %v700 = vld [vmem:[%s364 + $0x169] sm:$0xff]
        %v701 = vld [vmem:[%s364 + $0x171] sm:$0xff]
        %v702 = vld [vmem:[%s364 + $0x2] sm:$0xff]
        %v703 = vld [vmem:[%s364 + $0xa] sm:$0xff]
        %v704 = vld [vmem:[%s364 + $0x1a] sm:$0xff]
        %v705 = vld [vmem:[%s364 + $0x22] sm:$0xff]
        %v706 = vld [vmem:[%s364 + $0x32] sm:$0xff]
        %v707 = vld [vmem:[%s364 + $0x3a] sm:$0xff]
        %v708 = vld [vmem:[%s364 + $0x4a] sm:$0xff]
        %v709 = vld [vmem:[%s364 + $0x52] sm:$0xff]
        %v710 = vld [vmem:[%s364 + $0x62] sm:$0xff]
        %v711 = vld [vmem:[%s364 + $0x6a] sm:$0xff]
        %v712 = vld [vmem:[%s364 + $0x7a] sm:$0xff]
        %v713 = vld [vmem:[%s364 + $0x82] sm:$0xff]
        %v714 = vld [vmem:[%s364 + $0x92] sm:$0xff]
        %v715 = vld [vmem:[%s364 + $0x9a] sm:$0xff]
        %v716 = vld [vmem:[%s364 + $0xaa] sm:$0xff]
        %v717 = vld [vmem:[%s364 + $0xb2] sm:$0xff]
        %v718 = vld [vmem:[%s364 + $0xc2] sm:$0xff]
        %v719 = vld [vmem:[%s364 + $0xca] sm:$0xff]
        %v720 = vld [vmem:[%s364 + $0xda] sm:$0xff]
        %v721 = vld [vmem:[%s364 + $0xe2] sm:$0xff]
        %v722 = vld [vmem:[%s364 + $0xf2] sm:$0xff]
        %v723 = vld [vmem:[%s364 + $0xfa] sm:$0xff]
        %v724 = vld [vmem:[%s364 + $0x10a] sm:$0xff]
        %v725 = vld [vmem:[%s364 + $0x112] sm:$0xff]
        %v726 = vld [vmem:[%s364 + $0x122] sm:$0xff]
        %v727 = vld [vmem:[%s364 + $0x12a] sm:$0xff]
        %v728 = vld [vmem:[%s364 + $0x13a] sm:$0xff]
        %v729 = vld [vmem:[%s364 + $0x142] sm:$0xff]
        %v730 = vld [vmem:[%s364 + $0x152] sm:$0xff]
        %v731 = vld [vmem:[%s364 + $0x15a] sm:$0xff]
        %v732 = vld [vmem:[%s364 + $0x16a] sm:$0xff]
        %v733 = vld [vmem:[%s364 + $0x172] sm:$0xff]
        %s734 = scalar_lea.vmem [#allocation2], 48
        %v735 = vld [vmem:[%s734] sm:$0xff]
        %v736 = vld [vmem:[%s734 + $0x8] sm:$0xff]
        %v737 = vld [vmem:[%s734 + $0x18] sm:$0xff]
        %v738 = vld [vmem:[%s734 + $0x20] sm:$0xff]
        %v739 = vld [vmem:[%s734 + $0x30] sm:$0xff]
        %v740 = vld [vmem:[%s734 + $0x38] sm:$0xff]
        %v741 = vld [vmem:[%s734 + $0x48] sm:$0xff]
        %v742 = vld [vmem:[%s734 + $0x50] sm:$0xff]
        %v743 = vld [vmem:[%s734 + $0x60] sm:$0xff]
        %v744 = vld [vmem:[%s734 + $0x68] sm:$0xff]
        %v745 = vld [vmem:[%s734 + $0x78] sm:$0xff]
        %v746 = vld [vmem:[%s734 + $0x80] sm:$0xff]
        %v747 = vld [vmem:[%s734 + $0x90] sm:$0xff]
        %v748 = vld [vmem:[%s734 + $0x98] sm:$0xff]
        %v749 = vld [vmem:[%s734 + $0xa8] sm:$0xff]
        %v750 = vld [vmem:[%s734 + $0xb0] sm:$0xff]
        %v751 = vld [vmem:[%s734 + $0xc0] sm:$0xff]
        %v752 = vld [vmem:[%s734 + $0xc8] sm:$0xff]
        %v753 = vld [vmem:[%s734 + $0xd8] sm:$0xff]
        %v754 = vld [vmem:[%s734 + $0xe0] sm:$0xff]
        %v755 = vld [vmem:[%s734 + $0xf0] sm:$0xff]
        %v756 = vld [vmem:[%s734 + $0xf8] sm:$0xff]
        %v757 = vld [vmem:[%s734 + $0x108] sm:$0xff]
        %v758 = vld [vmem:[%s734 + $0x110] sm:$0xff]
        %v759 = vld [vmem:[%s734 + $0x120] sm:$0xff]
        %v760 = vld [vmem:[%s734 + $0x128] sm:$0xff]
        %v761 = vld [vmem:[%s734 + $0x138] sm:$0xff]
        %v762 = vld [vmem:[%s734 + $0x140] sm:$0xff]
        %v763 = vld [vmem:[%s734 + $0x150] sm:$0xff]
        %v764 = vld [vmem:[%s734 + $0x158] sm:$0xff]
        %v765 = vld [vmem:[%s734 + $0x168] sm:$0xff]
        %v766 = vld [vmem:[%s734 + $0x170] sm:$0xff]
        %v767 = vld [vmem:[%s734 + $0x1] sm:$0xff]
        %v768 = vld [vmem:[%s734 + $0x9] sm:$0xff]
        %v769 = vld [vmem:[%s734 + $0x19] sm:$0xff]
        %v770 = vld [vmem:[%s734 + $0x21] sm:$0xff]
        %v771 = vld [vmem:[%s734 + $0x31] sm:$0xff]
        %v772 = vld [vmem:[%s734 + $0x39] sm:$0xff]
        %v773 = vld [vmem:[%s734 + $0x49] sm:$0xff]
        %v774 = vld [vmem:[%s734 + $0x51] sm:$0xff]
        %v775 = vld [vmem:[%s734 + $0x61] sm:$0xff]
        %v776 = vld [vmem:[%s734 + $0x69] sm:$0xff]
        %v777 = vld [vmem:[%s734 + $0x79] sm:$0xff]
        %v778 = vld [vmem:[%s734 + $0x81] sm:$0xff]
        %v779 = vld [vmem:[%s734 + $0x91] sm:$0xff]
        %v780 = vld [vmem:[%s734 + $0x99] sm:$0xff]
        %v781 = vld [vmem:[%s734 + $0xa9] sm:$0xff]
        %v782 = vld [vmem:[%s734 + $0xb1] sm:$0xff]
        %v783 = vld [vmem:[%s734 + $0xc1] sm:$0xff]
        %v784 = vld [vmem:[%s734 + $0xc9] sm:$0xff]
        %v785 = vld [vmem:[%s734 + $0xd9] sm:$0xff]
        %v786 = vld [vmem:[%s734 + $0xe1] sm:$0xff]
        %v787 = vld [vmem:[%s734 + $0xf1] sm:$0xff]
        %v788 = vld [vmem:[%s734 + $0xf9] sm:$0xff]
        %v789 = vld [vmem:[%s734 + $0x109] sm:$0xff]
        %v790 = vld [vmem:[%s734 + $0x111] sm:$0xff]
        %v791 = vld [vmem:[%s734 + $0x121] sm:$0xff]
        %v792 = vld [vmem:[%s734 + $0x129] sm:$0xff]
        %v793 = vld [vmem:[%s734 + $0x139] sm:$0xff]
        %v794 = vld [vmem:[%s734 + $0x141] sm:$0xff]
        %v795 = vld [vmem:[%s734 + $0x151] sm:$0xff]
        %v796 = vld [vmem:[%s734 + $0x159] sm:$0xff]
        %v797 = vld [vmem:[%s734 + $0x169] sm:$0xff]
        %v798 = vld [vmem:[%s734 + $0x171] sm:$0xff]
        %v799 = vld [vmem:[%s734 + $0x2] sm:$0xff]
        %v800 = vld [vmem:[%s734 + $0xa] sm:$0xff]
        %v801 = vld [vmem:[%s734 + $0x1a] sm:$0xff]
        %v802 = vld [vmem:[%s734 + $0x22] sm:$0xff]
        %v803 = vld [vmem:[%s734 + $0x32] sm:$0xff]
        %v804 = vld [vmem:[%s734 + $0x3a] sm:$0xff]
        %v805 = vld [vmem:[%s734 + $0x4a] sm:$0xff]
        %v806 = vld [vmem:[%s734 + $0x52] sm:$0xff]
        %v807 = vld [vmem:[%s734 + $0x62] sm:$0xff]
        %v808 = vld [vmem:[%s734 + $0x6a] sm:$0xff]
        %v809 = vld [vmem:[%s734 + $0x7a] sm:$0xff]
        %v810 = vld [vmem:[%s734 + $0x82] sm:$0xff]
        %v811 = vld [vmem:[%s734 + $0x92] sm:$0xff]
        %v812 = vld [vmem:[%s734 + $0x9a] sm:$0xff]
        %v813 = vld [vmem:[%s734 + $0xaa] sm:$0xff]
        %v814 = vld [vmem:[%s734 + $0xb2] sm:$0xff]
        %v815 = vld [vmem:[%s734 + $0xc2] sm:$0xff]
        %v816 = vld [vmem:[%s734 + $0xca] sm:$0xff]
        %v817 = vld [vmem:[%s734 + $0xda] sm:$0xff]
        %v818 = vld [vmem:[%s734 + $0xe2] sm:$0xff]
        %v819 = vld [vmem:[%s734 + $0xf2] sm:$0xff]
        %v820 = vld [vmem:[%s734 + $0xfa] sm:$0xff]
        %v821 = vld [vmem:[%s734 + $0x10a] sm:$0xff]
        %v822 = vld [vmem:[%s734 + $0x112] sm:$0xff]
        %v823 = vld [vmem:[%s734 + $0x122] sm:$0xff]
        %v824 = vld [vmem:[%s734 + $0x12a] sm:$0xff]
        %v825 = vld [vmem:[%s734 + $0x13a] sm:$0xff]
        %v826 = vld [vmem:[%s734 + $0x142] sm:$0xff]
        %v827 = vld [vmem:[%s734 + $0x152] sm:$0xff]
        %v828 = vld [vmem:[%s734 + $0x15a] sm:$0xff]
        %v829 = vld [vmem:[%s734 + $0x16a] sm:$0xff]
        %v830 = vld [vmem:[%s734 + $0x172] sm:$0xff]
        %v832 = vperm.slane %v541, 0
        %834 = vmatpush.msra.mxu0 %v412
        %835 = vmatpush.msra.mxu0 %v411
        %836 = vmatpush.msra.mxu0 %v410
        %837 = vmatpush.msra.mxu0 %v409
        %838 = vmatpush.msra.mxu0 %v408
        %839 = vmatpush.msra.mxu0 %v407
        %840 = vmatpush.msra.mxu0 %v406
        %841 = vmatpush.msra.mxu0 %v405
        %842 = vmatpush.msra.mxu0 %v404
        %843 = vmatpush.msra.mxu0 %v403
        %844 = vmatpush.msra.mxu0 %v402
        %845 = vmatpush.msra.mxu0 %v401
        %846 = vmatpush.msra.mxu0 %v400
        %847 = vmatpush.msra.mxu0 %v399
        %848 = vmatpush.msra.mxu0 %v398
        %849 = vmatpush.msra.mxu0 %v397
        %850 = vmatmul.f32.gmra.mxu0 %v542
        %v851 = vpop.f32.mrf.mxu0
        %v852 = vadd.f32 %v832, %v851
        %853 = vmatmul.f32.gmra.mxu0 %v543
        %v854 = vpop.f32.mrf.mxu0
        %v855 = vadd.f32 %v832, %v854
        %856 = vmatmul.f32.gmra.mxu0 %v544
        %v857 = vpop.f32.mrf.mxu0
        %v858 = vadd.f32 %v832, %v857
        %859 = vmatmul.f32.gmra.mxu0 %v545
        %v860 = vpop.f32.mrf.mxu0
        %v861 = vadd.f32 %v832, %v860
        %862 = vmatmul.f32.gmra.mxu0 %v546
        %v863 = vpop.f32.mrf.mxu0
        %v864 = vadd.f32 %v832, %v863
        %865 = vmatmul.f32.gmra.mxu0 %v547
        %v866 = vpop.f32.mrf.mxu0
        %v867 = vadd.f32 %v832, %v866
        %868 = vmatmul.f32.gmra.mxu0 %v548
        %v869 = vpop.f32.mrf.mxu0
        %v870 = vadd.f32 %v832, %v869
        %871 = vmatmul.f32.gmra.mxu0 %v549
        %v872 = vpop.f32.mrf.mxu0
        %v873 = vadd.f32 %v832, %v872
        %874 = vmatmul.f32.gmra.mxu0 %v550
        %v875 = vpop.f32.mrf.mxu0
        %v876 = vadd.f32 %v832, %v875
        %877 = vmatmul.f32.gmra.mxu0 %v551
        %v878 = vpop.f32.mrf.mxu0
        %v879 = vadd.f32 %v832, %v878
        %880 = vmatmul.f32.gmra.mxu0 %v552
        %v881 = vpop.f32.mrf.mxu0
        %v882 = vadd.f32 %v832, %v881
        %883 = vmatmul.f32.gmra.mxu0 %v553
        %v884 = vpop.f32.mrf.mxu0
        %v885 = vadd.f32 %v832, %v884
        %886 = vmatmul.f32.gmra.mxu0 %v554
        %v887 = vpop.f32.mrf.mxu0
        %v888 = vadd.f32 %v832, %v887
        %889 = vmatmul.f32.gmra.mxu0 %v555
        %v890 = vpop.f32.mrf.mxu0
        %v891 = vadd.f32 %v832, %v890
        %892 = vmatmul.f32.gmra.mxu0 %v556
        %v893 = vpop.f32.mrf.mxu0
        %v894 = vadd.f32 %v832, %v893
        %895 = vmatmul.f32.gmra.mxu0 %v557
        %v896 = vpop.f32.mrf.mxu0
        %v897 = vadd.f32 %v832, %v896
        %898 = vmatmul.f32.gmra.mxu0 %v558
        %v899 = vpop.f32.mrf.mxu0
        %v900 = vadd.f32 %v832, %v899
        %901 = vmatmul.f32.gmra.mxu0 %v559
        %v902 = vpop.f32.mrf.mxu0
        %v903 = vadd.f32 %v832, %v902
        %904 = vmatmul.f32.gmra.mxu0 %v560
        %v905 = vpop.f32.mrf.mxu0
        %v906 = vadd.f32 %v832, %v905
        %907 = vmatmul.f32.gmra.mxu0 %v561
        %v908 = vpop.f32.mrf.mxu0
        %v909 = vadd.f32 %v832, %v908
        %910 = vmatmul.f32.gmra.mxu0 %v562
        %v911 = vpop.f32.mrf.mxu0
        %v912 = vadd.f32 %v832, %v911
        %913 = vmatmul.f32.gmra.mxu0 %v563
        %v914 = vpop.f32.mrf.mxu0
        %v915 = vadd.f32 %v832, %v914
        %916 = vmatmul.f32.gmra.mxu0 %v564
        %v917 = vpop.f32.mrf.mxu0
        %v918 = vadd.f32 %v832, %v917
        %919 = vmatmul.f32.gmra.mxu0 %v565
        %v920 = vpop.f32.mrf.mxu0
        %v921 = vadd.f32 %v832, %v920
        %922 = vmatmul.f32.gmra.mxu0 %v566
        %v923 = vpop.f32.mrf.mxu0
        %v924 = vadd.f32 %v832, %v923
        %925 = vmatmul.f32.gmra.mxu0 %v567
        %v926 = vpop.f32.mrf.mxu0
        %v927 = vadd.f32 %v832, %v926
        %928 = vmatmul.f32.gmra.mxu0 %v568
        %v929 = vpop.f32.mrf.mxu0
        %v930 = vadd.f32 %v832, %v929
        %931 = vmatmul.f32.gmra.mxu0 %v569
        %v932 = vpop.f32.mrf.mxu0
        %v933 = vadd.f32 %v832, %v932
        %934 = vmatmul.f32.gmra.mxu0 %v570
        %v935 = vpop.f32.mrf.mxu0
        %v936 = vadd.f32 %v832, %v935
        %937 = vmatmul.f32.gmra.mxu0 %v571
        %v938 = vpop.f32.mrf.mxu0
        %v939 = vadd.f32 %v832, %v938
        %940 = vmatmul.f32.gmra.mxu0 %v572
        %v941 = vpop.f32.mrf.mxu0
        %v942 = vadd.f32 %v832, %v941
        %943 = vmatmul.f32.gmra.mxu0 %v573
        %v944 = vpop.f32.mrf.mxu0
        %v945 = vadd.f32 %v832, %v944
        %946 = vdwg.mxu0
        %947 = vmatpush.msra.mxu0 %v428
        %948 = vmatpush.msra.mxu0 %v427
        %949 = vmatpush.msra.mxu0 %v426
        %950 = vmatpush.msra.mxu0 %v425
        %951 = vmatpush.msra.mxu0 %v424
        %952 = vmatpush.msra.mxu0 %v423
        %953 = vmatpush.msra.mxu0 %v422
        %954 = vmatpush.msra.mxu0 %v421
        %955 = vmatpush.msra.mxu0 %v420
        %956 = vmatpush.msra.mxu0 %v419
        %957 = vmatpush.msra.mxu0 %v418
        %958 = vmatpush.msra.mxu0 %v417
        %959 = vmatpush.msra.mxu0 %v416
        %960 = vmatpush.msra.mxu0 %v415
        %961 = vmatpush.msra.mxu0 %v414
        %962 = vmatpush.msra.mxu0 %v413
        %963 = vmatmul.f32.gmra.mxu0 %v574
        %v964 = vpop.f32.mrf.mxu0
        %v965 = vadd.f32 %v852, %v964
        %966 = vmatmul.f32.gmra.mxu0 %v575
        %v967 = vpop.f32.mrf.mxu0
        %v968 = vadd.f32 %v855, %v967
        %969 = vmatmul.f32.gmra.mxu0 %v576
        %v970 = vpop.f32.mrf.mxu0
        %v971 = vadd.f32 %v858, %v970
        %972 = vmatmul.f32.gmra.mxu0 %v577
        %v973 = vpop.f32.mrf.mxu0
        %v974 = vadd.f32 %v861, %v973
        %975 = vmatmul.f32.gmra.mxu0 %v578
        %v976 = vpop.f32.mrf.mxu0
        %v977 = vadd.f32 %v864, %v976
        %978 = vmatmul.f32.gmra.mxu0 %v579
        %v979 = vpop.f32.mrf.mxu0
        %v980 = vadd.f32 %v867, %v979
        %981 = vmatmul.f32.gmra.mxu0 %v580
        %v982 = vpop.f32.mrf.mxu0
        %v983 = vadd.f32 %v870, %v982
        %984 = vmatmul.f32.gmra.mxu0 %v581
        %v985 = vpop.f32.mrf.mxu0
        %v986 = vadd.f32 %v873, %v985
        %987 = vmatmul.f32.gmra.mxu0 %v582
        %v988 = vpop.f32.mrf.mxu0
        %v989 = vadd.f32 %v876, %v988
        %990 = vmatmul.f32.gmra.mxu0 %v583
        %v991 = vpop.f32.mrf.mxu0
        %v992 = vadd.f32 %v879, %v991
        %993 = vmatmul.f32.gmra.mxu0 %v584
        %v994 = vpop.f32.mrf.mxu0
        %v995 = vadd.f32 %v882, %v994
        %996 = vmatmul.f32.gmra.mxu0 %v585
        %v997 = vpop.f32.mrf.mxu0
        %v998 = vadd.f32 %v885, %v997
        %999 = vmatmul.f32.gmra.mxu0 %v586
        %v1000 = vpop.f32.mrf.mxu0
        %v1001 = vadd.f32 %v888, %v1000
        %1002 = vmatmul.f32.gmra.mxu0 %v587
        %v1003 = vpop.f32.mrf.mxu0
        %v1004 = vadd.f32 %v891, %v1003
        %1005 = vmatmul.f32.gmra.mxu0 %v588
        %v1006 = vpop.f32.mrf.mxu0
        %v1007 = vadd.f32 %v894, %v1006
        %1008 = vmatmul.f32.gmra.mxu0 %v589
        %v1009 = vpop.f32.mrf.mxu0
        %v1010 = vadd.f32 %v897, %v1009
        %1011 = vmatmul.f32.gmra.mxu0 %v590
        %v1012 = vpop.f32.mrf.mxu0
        %v1013 = vadd.f32 %v900, %v1012
        %1014 = vmatmul.f32.gmra.mxu0 %v591
        %v1015 = vpop.f32.mrf.mxu0
        %v1016 = vadd.f32 %v903, %v1015
        %1017 = vmatmul.f32.gmra.mxu0 %v592
        %v1018 = vpop.f32.mrf.mxu0
        %v1019 = vadd.f32 %v906, %v1018
        %1020 = vmatmul.f32.gmra.mxu0 %v593
        %v1021 = vpop.f32.mrf.mxu0
        %v1022 = vadd.f32 %v909, %v1021
        %1023 = vmatmul.f32.gmra.mxu0 %v594
        %v1024 = vpop.f32.mrf.mxu0
        %v1025 = vadd.f32 %v912, %v1024
        %1026 = vmatmul.f32.gmra.mxu0 %v595
        %v1027 = vpop.f32.mrf.mxu0
        %v1028 = vadd.f32 %v915, %v1027
        %1029 = vmatmul.f32.gmra.mxu0 %v596
        %v1030 = vpop.f32.mrf.mxu0
        %v1031 = vadd.f32 %v918, %v1030
        %1032 = vmatmul.f32.gmra.mxu0 %v597
        %v1033 = vpop.f32.mrf.mxu0
        %v1034 = vadd.f32 %v921, %v1033
        %1035 = vmatmul.f32.gmra.mxu0 %v598
        %v1036 = vpop.f32.mrf.mxu0
        %v1037 = vadd.f32 %v924, %v1036
        %1038 = vmatmul.f32.gmra.mxu0 %v599
        %v1039 = vpop.f32.mrf.mxu0
        %v1040 = vadd.f32 %v927, %v1039
        %1041 = vmatmul.f32.gmra.mxu0 %v600
        %v1042 = vpop.f32.mrf.mxu0
        %v1043 = vadd.f32 %v930, %v1042
        %1044 = vmatmul.f32.gmra.mxu0 %v601
        %v1045 = vpop.f32.mrf.mxu0
        %v1046 = vadd.f32 %v933, %v1045
        %1047 = vmatmul.f32.gmra.mxu0 %v602
        %v1048 = vpop.f32.mrf.mxu0
        %v1049 = vadd.f32 %v936, %v1048
        %1050 = vmatmul.f32.gmra.mxu0 %v603
        %v1051 = vpop.f32.mrf.mxu0
        %v1052 = vadd.f32 %v939, %v1051
        %1053 = vmatmul.f32.gmra.mxu0 %v604
        %v1054 = vpop.f32.mrf.mxu0
        %v1055 = vadd.f32 %v942, %v1054
        %1056 = vmatmul.f32.gmra.mxu0 %v605
        %v1057 = vpop.f32.mrf.mxu0
        %v1058 = vadd.f32 %v945, %v1057
        %1059 = vdwg.mxu0
        %1060 = vmatpush.msra.mxu0 %v444
        %1061 = vmatpush.msra.mxu0 %v443
        %1062 = vmatpush.msra.mxu0 %v442
        %1063 = vmatpush.msra.mxu0 %v441
        %1064 = vmatpush.msra.mxu0 %v440
        %1065 = vmatpush.msra.mxu0 %v439
        %1066 = vmatpush.msra.mxu0 %v438
        %1067 = vmatpush.msra.mxu0 %v437
        %1068 = vmatpush.msra.mxu0 %v436
        %1069 = vmatpush.msra.mxu0 %v435
        %1070 = vmatpush.msra.mxu0 %v434
        %1071 = vmatpush.msra.mxu0 %v433
        %1072 = vmatpush.msra.mxu0 %v432
        %1073 = vmatpush.msra.mxu0 %v431
        %1074 = vmatpush.msra.mxu0 %v430
        %1075 = vmatpush.msra.mxu0 %v429
        %1076 = vmatmul.f32.gmra.mxu0 %v606
        %v1077 = vpop.f32.mrf.mxu0
        %v1078 = vadd.f32 %v965, %v1077
        %1079 = vmatmul.f32.gmra.mxu0 %v607
        %v1080 = vpop.f32.mrf.mxu0
        %v1081 = vadd.f32 %v968, %v1080
        %1082 = vmatmul.f32.gmra.mxu0 %v608
        %v1083 = vpop.f32.mrf.mxu0
        %v1084 = vadd.f32 %v971, %v1083
        %1085 = vmatmul.f32.gmra.mxu0 %v609
        %v1086 = vpop.f32.mrf.mxu0
        %v1087 = vadd.f32 %v974, %v1086
        %1088 = vmatmul.f32.gmra.mxu0 %v610
        %v1089 = vpop.f32.mrf.mxu0
        %v1090 = vadd.f32 %v977, %v1089
        %1091 = vmatmul.f32.gmra.mxu0 %v611
        %v1092 = vpop.f32.mrf.mxu0
        %v1093 = vadd.f32 %v980, %v1092
        %1094 = vmatmul.f32.gmra.mxu0 %v612
        %v1095 = vpop.f32.mrf.mxu0
        %v1096 = vadd.f32 %v983, %v1095
        %1097 = vmatmul.f32.gmra.mxu0 %v613
        %v1098 = vpop.f32.mrf.mxu0
        %v1099 = vadd.f32 %v986, %v1098
        %1100 = vmatmul.f32.gmra.mxu0 %v614
        %v1101 = vpop.f32.mrf.mxu0
        %v1102 = vadd.f32 %v989, %v1101
        %1103 = vmatmul.f32.gmra.mxu0 %v615
        %v1104 = vpop.f32.mrf.mxu0
        %v1105 = vadd.f32 %v992, %v1104
        %1106 = vmatmul.f32.gmra.mxu0 %v616
        %v1107 = vpop.f32.mrf.mxu0
        %v1108 = vadd.f32 %v995, %v1107
        %1109 = vmatmul.f32.gmra.mxu0 %v617
        %v1110 = vpop.f32.mrf.mxu0
        %v1111 = vadd.f32 %v998, %v1110
        %1112 = vmatmul.f32.gmra.mxu0 %v618
        %v1113 = vpop.f32.mrf.mxu0
        %v1114 = vadd.f32 %v1001, %v1113
        %1115 = vmatmul.f32.gmra.mxu0 %v619
        %v1116 = vpop.f32.mrf.mxu0
        %v1117 = vadd.f32 %v1004, %v1116
        %1118 = vmatmul.f32.gmra.mxu0 %v620
        %v1119 = vpop.f32.mrf.mxu0
        %v1120 = vadd.f32 %v1007, %v1119
        %1121 = vmatmul.f32.gmra.mxu0 %v621
        %v1122 = vpop.f32.mrf.mxu0
        %v1123 = vadd.f32 %v1010, %v1122
        %1124 = vmatmul.f32.gmra.mxu0 %v622
        %v1125 = vpop.f32.mrf.mxu0
        %v1126 = vadd.f32 %v1013, %v1125
        %1127 = vmatmul.f32.gmra.mxu0 %v623
        %v1128 = vpop.f32.mrf.mxu0
        %v1129 = vadd.f32 %v1016, %v1128
        %1130 = vmatmul.f32.gmra.mxu0 %v624
        %v1131 = vpop.f32.mrf.mxu0
        %v1132 = vadd.f32 %v1019, %v1131
        %1133 = vmatmul.f32.gmra.mxu0 %v625
        %v1134 = vpop.f32.mrf.mxu0
        %v1135 = vadd.f32 %v1022, %v1134
        %1136 = vmatmul.f32.gmra.mxu0 %v626
        %v1137 = vpop.f32.mrf.mxu0
        %v1138 = vadd.f32 %v1025, %v1137
        %1139 = vmatmul.f32.gmra.mxu0 %v627
        %v1140 = vpop.f32.mrf.mxu0
        %v1141 = vadd.f32 %v1028, %v1140
        %1142 = vmatmul.f32.gmra.mxu0 %v628
        %v1143 = vpop.f32.mrf.mxu0
        %v1144 = vadd.f32 %v1031, %v1143
        %1145 = vmatmul.f32.gmra.mxu0 %v629
        %v1146 = vpop.f32.mrf.mxu0
        %v1147 = vadd.f32 %v1034, %v1146
        %1148 = vmatmul.f32.gmra.mxu0 %v630
        %v1149 = vpop.f32.mrf.mxu0
        %v1150 = vadd.f32 %v1037, %v1149
        %1151 = vmatmul.f32.gmra.mxu0 %v631
        %v1152 = vpop.f32.mrf.mxu0
        %v1153 = vadd.f32 %v1040, %v1152
        %1154 = vmatmul.f32.gmra.mxu0 %v632
        %v1155 = vpop.f32.mrf.mxu0
        %v1156 = vadd.f32 %v1043, %v1155
        %1157 = vmatmul.f32.gmra.mxu0 %v633
        %v1158 = vpop.f32.mrf.mxu0
        %v1159 = vadd.f32 %v1046, %v1158
        %1160 = vmatmul.f32.gmra.mxu0 %v634
        %v1161 = vpop.f32.mrf.mxu0
        %v1162 = vadd.f32 %v1049, %v1161
        %1163 = vmatmul.f32.gmra.mxu0 %v635
        %v1164 = vpop.f32.mrf.mxu0
        %v1165 = vadd.f32 %v1052, %v1164
        %1166 = vmatmul.f32.gmra.mxu0 %v636
        %v1167 = vpop.f32.mrf.mxu0
        %v1168 = vadd.f32 %v1055, %v1167
        %1169 = vmatmul.f32.gmra.mxu0 %v637
        %v1170 = vpop.f32.mrf.mxu0
        %v1171 = vadd.f32 %v1058, %v1170
        %1172 = vdwg.mxu0
        %1173 = vmatpush.msra.mxu0 %v460
        %1174 = vmatpush.msra.mxu0 %v459
        %1175 = vmatpush.msra.mxu0 %v458
        %1176 = vmatpush.msra.mxu0 %v457
        %1177 = vmatpush.msra.mxu0 %v456
        %1178 = vmatpush.msra.mxu0 %v455
        %1179 = vmatpush.msra.mxu0 %v454
        %1180 = vmatpush.msra.mxu0 %v453
        %1181 = vmatpush.msra.mxu0 %v452
        %1182 = vmatpush.msra.mxu0 %v451
        %1183 = vmatpush.msra.mxu0 %v450
        %1184 = vmatpush.msra.mxu0 %v449
        %1185 = vmatpush.msra.mxu0 %v448
        %1186 = vmatpush.msra.mxu0 %v447
        %1187 = vmatpush.msra.mxu0 %v446
        %1188 = vmatpush.msra.mxu0 %v445
        %1189 = vmatmul.f32.gmra.mxu0 %v638
        %v1190 = vpop.f32.mrf.mxu0
        %v1191 = vadd.f32 %v1078, %v1190
        %1192 = vmatmul.f32.gmra.mxu0 %v639
        %v1193 = vpop.f32.mrf.mxu0
        %v1194 = vadd.f32 %v1081, %v1193
        %1195 = vmatmul.f32.gmra.mxu0 %v640
        %v1196 = vpop.f32.mrf.mxu0
        %v1197 = vadd.f32 %v1084, %v1196
        %1198 = vmatmul.f32.gmra.mxu0 %v641
        %v1199 = vpop.f32.mrf.mxu0
        %v1200 = vadd.f32 %v1087, %v1199
        %1201 = vmatmul.f32.gmra.mxu0 %v642
        %v1202 = vpop.f32.mrf.mxu0
        %v1203 = vadd.f32 %v1090, %v1202
        %1204 = vmatmul.f32.gmra.mxu0 %v643
        %v1205 = vpop.f32.mrf.mxu0
        %v1206 = vadd.f32 %v1093, %v1205
        %1207 = vmatmul.f32.gmra.mxu0 %v644
        %v1208 = vpop.f32.mrf.mxu0
        %v1209 = vadd.f32 %v1096, %v1208
        %1210 = vmatmul.f32.gmra.mxu0 %v645
        %v1211 = vpop.f32.mrf.mxu0
        %v1212 = vadd.f32 %v1099, %v1211
        %1213 = vmatmul.f32.gmra.mxu0 %v646
        %v1214 = vpop.f32.mrf.mxu0
        %v1215 = vadd.f32 %v1102, %v1214
        %1216 = vmatmul.f32.gmra.mxu0 %v647
        %v1217 = vpop.f32.mrf.mxu0
        %v1218 = vadd.f32 %v1105, %v1217
        %1219 = vmatmul.f32.gmra.mxu0 %v648
        %v1220 = vpop.f32.mrf.mxu0
        %v1221 = vadd.f32 %v1108, %v1220
        %1222 = vmatmul.f32.gmra.mxu0 %v649
        %v1223 = vpop.f32.mrf.mxu0
        %v1224 = vadd.f32 %v1111, %v1223
        %1225 = vmatmul.f32.gmra.mxu0 %v650
        %v1226 = vpop.f32.mrf.mxu0
        %v1227 = vadd.f32 %v1114, %v1226
        %1228 = vmatmul.f32.gmra.mxu0 %v651
        %v1229 = vpop.f32.mrf.mxu0
        %v1230 = vadd.f32 %v1117, %v1229
        %1231 = vmatmul.f32.gmra.mxu0 %v652
        %v1232 = vpop.f32.mrf.mxu0
        %v1233 = vadd.f32 %v1120, %v1232
        %1234 = vmatmul.f32.gmra.mxu0 %v653
        %v1235 = vpop.f32.mrf.mxu0
        %v1236 = vadd.f32 %v1123, %v1235
        %1237 = vmatmul.f32.gmra.mxu0 %v654
        %v1238 = vpop.f32.mrf.mxu0
        %v1239 = vadd.f32 %v1126, %v1238
        %1240 = vmatmul.f32.gmra.mxu0 %v655
        %v1241 = vpop.f32.mrf.mxu0
        %v1242 = vadd.f32 %v1129, %v1241
        %1243 = vmatmul.f32.gmra.mxu0 %v656
        %v1244 = vpop.f32.mrf.mxu0
        %v1245 = vadd.f32 %v1132, %v1244
        %1246 = vmatmul.f32.gmra.mxu0 %v657
        %v1247 = vpop.f32.mrf.mxu0
        %v1248 = vadd.f32 %v1135, %v1247
        %1249 = vmatmul.f32.gmra.mxu0 %v658
        %v1250 = vpop.f32.mrf.mxu0
        %v1251 = vadd.f32 %v1138, %v1250
        %1252 = vmatmul.f32.gmra.mxu0 %v659
        %v1253 = vpop.f32.mrf.mxu0
        %v1254 = vadd.f32 %v1141, %v1253
        %1255 = vmatmul.f32.gmra.mxu0 %v660
        %v1256 = vpop.f32.mrf.mxu0
        %v1257 = vadd.f32 %v1144, %v1256
        %1258 = vmatmul.f32.gmra.mxu0 %v661
        %v1259 = vpop.f32.mrf.mxu0
        %v1260 = vadd.f32 %v1147, %v1259
        %1261 = vmatmul.f32.gmra.mxu0 %v662
        %v1262 = vpop.f32.mrf.mxu0
        %v1263 = vadd.f32 %v1150, %v1262
        %1264 = vmatmul.f32.gmra.mxu0 %v663
        %v1265 = vpop.f32.mrf.mxu0
        %v1266 = vadd.f32 %v1153, %v1265
        %1267 = vmatmul.f32.gmra.mxu0 %v664
        %v1268 = vpop.f32.mrf.mxu0
        %v1269 = vadd.f32 %v1156, %v1268
        %1270 = vmatmul.f32.gmra.mxu0 %v665
        %v1271 = vpop.f32.mrf.mxu0
        %v1272 = vadd.f32 %v1159, %v1271
        %1273 = vmatmul.f32.gmra.mxu0 %v666
        %v1274 = vpop.f32.mrf.mxu0
        %v1275 = vadd.f32 %v1162, %v1274
        %1276 = vmatmul.f32.gmra.mxu0 %v667
        %v1277 = vpop.f32.mrf.mxu0
        %v1278 = vadd.f32 %v1165, %v1277
        %1279 = vmatmul.f32.gmra.mxu0 %v668
        %v1280 = vpop.f32.mrf.mxu0
        %v1281 = vadd.f32 %v1168, %v1280
        %1282 = vmatmul.f32.gmra.mxu0 %v669
        %v1283 = vpop.f32.mrf.mxu0
        %v1284 = vadd.f32 %v1171, %v1283
        %1285 = vdwg.mxu0
        %1286 = vmatpush.msra.mxu0 %v476
        %1287 = vmatpush.msra.mxu0 %v475
        %1288 = vmatpush.msra.mxu0 %v474
        %1289 = vmatpush.msra.mxu0 %v473
        %1290 = vmatpush.msra.mxu0 %v472
        %1291 = vmatpush.msra.mxu0 %v471
        %1292 = vmatpush.msra.mxu0 %v470
        %1293 = vmatpush.msra.mxu0 %v469
        %1294 = vmatpush.msra.mxu0 %v468
        %1295 = vmatpush.msra.mxu0 %v467
        %1296 = vmatpush.msra.mxu0 %v466
        %1297 = vmatpush.msra.mxu0 %v465
        %1298 = vmatpush.msra.mxu0 %v464
        %1299 = vmatpush.msra.mxu0 %v463
        %1300 = vmatpush.msra.mxu0 %v462
        %1301 = vmatpush.msra.mxu0 %v461
        %1302 = vmatmul.f32.gmra.mxu0 %v670
        %v1303 = vpop.f32.mrf.mxu0
        %v1304 = vadd.f32 %v1191, %v1303
        %1305 = vmatmul.f32.gmra.mxu0 %v671
        %v1306 = vpop.f32.mrf.mxu0
        %v1307 = vadd.f32 %v1194, %v1306
        %1308 = vmatmul.f32.gmra.mxu0 %v672
        %v1309 = vpop.f32.mrf.mxu0
        %v1310 = vadd.f32 %v1197, %v1309
        %1311 = vmatmul.f32.gmra.mxu0 %v673
        %v1312 = vpop.f32.mrf.mxu0
        %v1313 = vadd.f32 %v1200, %v1312
        %1314 = vmatmul.f32.gmra.mxu0 %v674
        %v1315 = vpop.f32.mrf.mxu0
        %v1316 = vadd.f32 %v1203, %v1315
        %1317 = vmatmul.f32.gmra.mxu0 %v675
        %v1318 = vpop.f32.mrf.mxu0
        %v1319 = vadd.f32 %v1206, %v1318
        %1320 = vmatmul.f32.gmra.mxu0 %v676
        %v1321 = vpop.f32.mrf.mxu0
        %v1322 = vadd.f32 %v1209, %v1321
        %1323 = vmatmul.f32.gmra.mxu0 %v677
        %v1324 = vpop.f32.mrf.mxu0
        %v1325 = vadd.f32 %v1212, %v1324
        %1326 = vmatmul.f32.gmra.mxu0 %v678
        %v1327 = vpop.f32.mrf.mxu0
        %v1328 = vadd.f32 %v1215, %v1327
        %1329 = vmatmul.f32.gmra.mxu0 %v679
        %v1330 = vpop.f32.mrf.mxu0
        %v1331 = vadd.f32 %v1218, %v1330
        %1332 = vmatmul.f32.gmra.mxu0 %v680
        %v1333 = vpop.f32.mrf.mxu0
        %v1334 = vadd.f32 %v1221, %v1333
        %1335 = vmatmul.f32.gmra.mxu0 %v681
        %v1336 = vpop.f32.mrf.mxu0
        %v1337 = vadd.f32 %v1224, %v1336
        %1338 = vmatmul.f32.gmra.mxu0 %v682
        %v1339 = vpop.f32.mrf.mxu0
        %v1340 = vadd.f32 %v1227, %v1339
        %1341 = vmatmul.f32.gmra.mxu0 %v683
        %v1342 = vpop.f32.mrf.mxu0
        %v1343 = vadd.f32 %v1230, %v1342
        %1344 = vmatmul.f32.gmra.mxu0 %v684
        %v1345 = vpop.f32.mrf.mxu0
        %v1346 = vadd.f32 %v1233, %v1345
        %1347 = vmatmul.f32.gmra.mxu0 %v685
        %v1348 = vpop.f32.mrf.mxu0
        %v1349 = vadd.f32 %v1236, %v1348
        %1350 = vmatmul.f32.gmra.mxu0 %v686
        %v1351 = vpop.f32.mrf.mxu0
        %v1352 = vadd.f32 %v1239, %v1351
        %1353 = vmatmul.f32.gmra.mxu0 %v687
        %v1354 = vpop.f32.mrf.mxu0
        %v1355 = vadd.f32 %v1242, %v1354
        %1356 = vmatmul.f32.gmra.mxu0 %v688
        %v1357 = vpop.f32.mrf.mxu0
        %v1358 = vadd.f32 %v1245, %v1357
        %1359 = vmatmul.f32.gmra.mxu0 %v689
        %v1360 = vpop.f32.mrf.mxu0
        %v1361 = vadd.f32 %v1248, %v1360
        %1362 = vmatmul.f32.gmra.mxu0 %v690
        %v1363 = vpop.f32.mrf.mxu0
        %v1364 = vadd.f32 %v1251, %v1363
        %1365 = vmatmul.f32.gmra.mxu0 %v691
        %v1366 = vpop.f32.mrf.mxu0
        %v1367 = vadd.f32 %v1254, %v1366
        %1368 = vmatmul.f32.gmra.mxu0 %v692
        %v1369 = vpop.f32.mrf.mxu0
        %v1370 = vadd.f32 %v1257, %v1369
        %1371 = vmatmul.f32.gmra.mxu0 %v693
        %v1372 = vpop.f32.mrf.mxu0
        %v1373 = vadd.f32 %v1260, %v1372
        %1374 = vmatmul.f32.gmra.mxu0 %v694
        %v1375 = vpop.f32.mrf.mxu0
        %v1376 = vadd.f32 %v1263, %v1375
        %1377 = vmatmul.f32.gmra.mxu0 %v695
        %v1378 = vpop.f32.mrf.mxu0
        %v1379 = vadd.f32 %v1266, %v1378
        %1380 = vmatmul.f32.gmra.mxu0 %v696
        %v1381 = vpop.f32.mrf.mxu0
        %v1382 = vadd.f32 %v1269, %v1381
        %1383 = vmatmul.f32.gmra.mxu0 %v697
        %v1384 = vpop.f32.mrf.mxu0
        %v1385 = vadd.f32 %v1272, %v1384
        %1386 = vmatmul.f32.gmra.mxu0 %v698
        %v1387 = vpop.f32.mrf.mxu0
        %v1388 = vadd.f32 %v1275, %v1387
        %1389 = vmatmul.f32.gmra.mxu0 %v699
        %v1390 = vpop.f32.mrf.mxu0
        %v1391 = vadd.f32 %v1278, %v1390
        %1392 = vmatmul.f32.gmra.mxu0 %v700
        %v1393 = vpop.f32.mrf.mxu0
        %v1394 = vadd.f32 %v1281, %v1393
        %1395 = vmatmul.f32.gmra.mxu0 %v701
        %v1396 = vpop.f32.mrf.mxu0
        %v1397 = vadd.f32 %v1284, %v1396
        %1398 = vdwg.mxu0
        %1399 = vmatpush.msra.mxu0 %v492
        %1400 = vmatpush.msra.mxu0 %v491
        %1401 = vmatpush.msra.mxu0 %v490
        %1402 = vmatpush.msra.mxu0 %v489
        %1403 = vmatpush.msra.mxu0 %v488
        %1404 = vmatpush.msra.mxu0 %v487
        %1405 = vmatpush.msra.mxu0 %v486
        %1406 = vmatpush.msra.mxu0 %v485
        %1407 = vmatpush.msra.mxu0 %v484
        %1408 = vmatpush.msra.mxu0 %v483
        %1409 = vmatpush.msra.mxu0 %v482
        %1410 = vmatpush.msra.mxu0 %v481
        %1411 = vmatpush.msra.mxu0 %v480
        %1412 = vmatpush.msra.mxu0 %v479
        %1413 = vmatpush.msra.mxu0 %v478
        %1414 = vmatpush.msra.mxu0 %v477
        %1415 = vmatmul.f32.gmra.mxu0 %v702
        %v1416 = vpop.f32.mrf.mxu0
        %v1417 = vadd.f32 %v1304, %v1416
        %1418 = vmatmul.f32.gmra.mxu0 %v703
        %v1419 = vpop.f32.mrf.mxu0
        %v1420 = vadd.f32 %v1307, %v1419
        %1421 = vmatmul.f32.gmra.mxu0 %v704
        %v1422 = vpop.f32.mrf.mxu0
        %v1423 = vadd.f32 %v1310, %v1422
        %1424 = vmatmul.f32.gmra.mxu0 %v705
        %v1425 = vpop.f32.mrf.mxu0
        %v1426 = vadd.f32 %v1313, %v1425
        %1427 = vmatmul.f32.gmra.mxu0 %v706
        %v1428 = vpop.f32.mrf.mxu0
        %v1429 = vadd.f32 %v1316, %v1428
        %1430 = vmatmul.f32.gmra.mxu0 %v707
        %v1431 = vpop.f32.mrf.mxu0
        %v1432 = vadd.f32 %v1319, %v1431
        %1433 = vmatmul.f32.gmra.mxu0 %v708
        %v1434 = vpop.f32.mrf.mxu0
        %v1435 = vadd.f32 %v1322, %v1434
        %1436 = vmatmul.f32.gmra.mxu0 %v709
        %v1437 = vpop.f32.mrf.mxu0
        %v1438 = vadd.f32 %v1325, %v1437
        %1439 = vmatmul.f32.gmra.mxu0 %v710
        %v1440 = vpop.f32.mrf.mxu0
        %v1441 = vadd.f32 %v1328, %v1440
        %1442 = vmatmul.f32.gmra.mxu0 %v711
        %v1443 = vpop.f32.mrf.mxu0
        %v1444 = vadd.f32 %v1331, %v1443
        %1445 = vmatmul.f32.gmra.mxu0 %v712
        %v1446 = vpop.f32.mrf.mxu0
        %v1447 = vadd.f32 %v1334, %v1446
        %1448 = vmatmul.f32.gmra.mxu0 %v713
        %v1449 = vpop.f32.mrf.mxu0
        %v1450 = vadd.f32 %v1337, %v1449
        %1451 = vmatmul.f32.gmra.mxu0 %v714
        %v1452 = vpop.f32.mrf.mxu0
        %v1453 = vadd.f32 %v1340, %v1452
        %1454 = vmatmul.f32.gmra.mxu0 %v715
        %v1455 = vpop.f32.mrf.mxu0
        %v1456 = vadd.f32 %v1343, %v1455
        %1457 = vmatmul.f32.gmra.mxu0 %v716
        %v1458 = vpop.f32.mrf.mxu0
        %v1459 = vadd.f32 %v1346, %v1458
        %1460 = vmatmul.f32.gmra.mxu0 %v717
        %v1461 = vpop.f32.mrf.mxu0
        %v1462 = vadd.f32 %v1349, %v1461
        %1463 = vmatmul.f32.gmra.mxu0 %v718
        %v1464 = vpop.f32.mrf.mxu0
        %v1465 = vadd.f32 %v1352, %v1464
        %1466 = vmatmul.f32.gmra.mxu0 %v719
        %v1467 = vpop.f32.mrf.mxu0
        %v1468 = vadd.f32 %v1355, %v1467
        %1469 = vmatmul.f32.gmra.mxu0 %v720
        %v1470 = vpop.f32.mrf.mxu0
        %v1471 = vadd.f32 %v1358, %v1470
        %1472 = vmatmul.f32.gmra.mxu0 %v721
        %v1473 = vpop.f32.mrf.mxu0
        %v1474 = vadd.f32 %v1361, %v1473
        %1475 = vmatmul.f32.gmra.mxu0 %v722
        %v1476 = vpop.f32.mrf.mxu0
        %v1477 = vadd.f32 %v1364, %v1476
        %1478 = vmatmul.f32.gmra.mxu0 %v723
        %v1479 = vpop.f32.mrf.mxu0
        %v1480 = vadd.f32 %v1367, %v1479
        %1481 = vmatmul.f32.gmra.mxu0 %v724
        %v1482 = vpop.f32.mrf.mxu0
        %v1483 = vadd.f32 %v1370, %v1482
        %1484 = vmatmul.f32.gmra.mxu0 %v725
        %v1485 = vpop.f32.mrf.mxu0
        %v1486 = vadd.f32 %v1373, %v1485
        %1487 = vmatmul.f32.gmra.mxu0 %v726
        %v1488 = vpop.f32.mrf.mxu0
        %v1489 = vadd.f32 %v1376, %v1488
        %1490 = vmatmul.f32.gmra.mxu0 %v727
        %v1491 = vpop.f32.mrf.mxu0
        %v1492 = vadd.f32 %v1379, %v1491
        %1493 = vmatmul.f32.gmra.mxu0 %v728
        %v1494 = vpop.f32.mrf.mxu0
        %v1495 = vadd.f32 %v1382, %v1494
        %1496 = vmatmul.f32.gmra.mxu0 %v729
        %v1497 = vpop.f32.mrf.mxu0
        %v1498 = vadd.f32 %v1385, %v1497
        %1499 = vmatmul.f32.gmra.mxu0 %v730
        %v1500 = vpop.f32.mrf.mxu0
        %v1501 = vadd.f32 %v1388, %v1500
        %1502 = vmatmul.f32.gmra.mxu0 %v731
        %v1503 = vpop.f32.mrf.mxu0
        %v1504 = vadd.f32 %v1391, %v1503
        %1505 = vmatmul.f32.gmra.mxu0 %v732
        %v1506 = vpop.f32.mrf.mxu0
        %v1507 = vadd.f32 %v1394, %v1506
        %1508 = vmatmul.f32.gmra.mxu0 %v733
        %v1509 = vpop.f32.mrf.mxu0
        %v1510 = vadd.f32 %v1397, %v1509
        %1511 = vdwg.mxu0
        %1512 = vmatpush.msra.mxu0 %v508
        %1513 = vmatpush.msra.mxu0 %v507
        %1514 = vmatpush.msra.mxu0 %v506
        %1515 = vmatpush.msra.mxu0 %v505
        %1516 = vmatpush.msra.mxu0 %v504
        %1517 = vmatpush.msra.mxu0 %v503
        %1518 = vmatpush.msra.mxu0 %v502
        %1519 = vmatpush.msra.mxu0 %v501
        %1520 = vmatpush.msra.mxu0 %v500
        %1521 = vmatpush.msra.mxu0 %v499
        %1522 = vmatpush.msra.mxu0 %v498
        %1523 = vmatpush.msra.mxu0 %v497
        %1524 = vmatpush.msra.mxu0 %v496
        %1525 = vmatpush.msra.mxu0 %v495
        %1526 = vmatpush.msra.mxu0 %v494
        %1527 = vmatpush.msra.mxu0 %v493
        %1528 = vmatmul.f32.gmra.mxu0 %v735
        %v1529 = vpop.f32.mrf.mxu0
        %v1530 = vadd.f32 %v1417, %v1529
        %1531 = vmatmul.f32.gmra.mxu0 %v736
        %v1532 = vpop.f32.mrf.mxu0
        %v1533 = vadd.f32 %v1420, %v1532
        %1534 = vmatmul.f32.gmra.mxu0 %v737
        %v1535 = vpop.f32.mrf.mxu0
        %v1536 = vadd.f32 %v1423, %v1535
        %1537 = vmatmul.f32.gmra.mxu0 %v738
        %v1538 = vpop.f32.mrf.mxu0
        %v1539 = vadd.f32 %v1426, %v1538
        %1540 = vmatmul.f32.gmra.mxu0 %v739
        %v1541 = vpop.f32.mrf.mxu0
        %v1542 = vadd.f32 %v1429, %v1541
        %1543 = vmatmul.f32.gmra.mxu0 %v740
        %v1544 = vpop.f32.mrf.mxu0
        %v1545 = vadd.f32 %v1432, %v1544
        %1546 = vmatmul.f32.gmra.mxu0 %v741
        %v1547 = vpop.f32.mrf.mxu0
        %v1548 = vadd.f32 %v1435, %v1547
        %1549 = vmatmul.f32.gmra.mxu0 %v742
        %v1550 = vpop.f32.mrf.mxu0
        %v1551 = vadd.f32 %v1438, %v1550
        %1552 = vmatmul.f32.gmra.mxu0 %v743
        %v1553 = vpop.f32.mrf.mxu0
        %v1554 = vadd.f32 %v1441, %v1553
        %1555 = vmatmul.f32.gmra.mxu0 %v744
        %v1556 = vpop.f32.mrf.mxu0
        %v1557 = vadd.f32 %v1444, %v1556
        %1558 = vmatmul.f32.gmra.mxu0 %v745
        %v1559 = vpop.f32.mrf.mxu0
        %v1560 = vadd.f32 %v1447, %v1559
        %1561 = vmatmul.f32.gmra.mxu0 %v746
        %v1562 = vpop.f32.mrf.mxu0
        %v1563 = vadd.f32 %v1450, %v1562
        %1564 = vmatmul.f32.gmra.mxu0 %v747
        %v1565 = vpop.f32.mrf.mxu0
        %v1566 = vadd.f32 %v1453, %v1565
        %1567 = vmatmul.f32.gmra.mxu0 %v748
        %v1568 = vpop.f32.mrf.mxu0
        %v1569 = vadd.f32 %v1456, %v1568
        %1570 = vmatmul.f32.gmra.mxu0 %v749
        %v1571 = vpop.f32.mrf.mxu0
        %v1572 = vadd.f32 %v1459, %v1571
        %1573 = vmatmul.f32.gmra.mxu0 %v750
        %v1574 = vpop.f32.mrf.mxu0
        %v1575 = vadd.f32 %v1462, %v1574
        %1576 = vmatmul.f32.gmra.mxu0 %v751
        %v1577 = vpop.f32.mrf.mxu0
        %v1578 = vadd.f32 %v1465, %v1577
        %1579 = vmatmul.f32.gmra.mxu0 %v752
        %v1580 = vpop.f32.mrf.mxu0
        %v1581 = vadd.f32 %v1468, %v1580
        %1582 = vmatmul.f32.gmra.mxu0 %v753
        %v1583 = vpop.f32.mrf.mxu0
        %v1584 = vadd.f32 %v1471, %v1583
        %1585 = vmatmul.f32.gmra.mxu0 %v754
        %v1586 = vpop.f32.mrf.mxu0
        %v1587 = vadd.f32 %v1474, %v1586
        %1588 = vmatmul.f32.gmra.mxu0 %v755
        %v1589 = vpop.f32.mrf.mxu0
        %v1590 = vadd.f32 %v1477, %v1589
        %1591 = vmatmul.f32.gmra.mxu0 %v756
        %v1592 = vpop.f32.mrf.mxu0
        %v1593 = vadd.f32 %v1480, %v1592
        %1594 = vmatmul.f32.gmra.mxu0 %v757
        %v1595 = vpop.f32.mrf.mxu0
        %v1596 = vadd.f32 %v1483, %v1595
        %1597 = vmatmul.f32.gmra.mxu0 %v758
        %v1598 = vpop.f32.mrf.mxu0
        %v1599 = vadd.f32 %v1486, %v1598
        %1600 = vmatmul.f32.gmra.mxu0 %v759
        %v1601 = vpop.f32.mrf.mxu0
        %v1602 = vadd.f32 %v1489, %v1601
        %1603 = vmatmul.f32.gmra.mxu0 %v760
        %v1604 = vpop.f32.mrf.mxu0
        %v1605 = vadd.f32 %v1492, %v1604
        %1606 = vmatmul.f32.gmra.mxu0 %v761
        %v1607 = vpop.f32.mrf.mxu0
        %v1608 = vadd.f32 %v1495, %v1607
        %1609 = vmatmul.f32.gmra.mxu0 %v762
        %v1610 = vpop.f32.mrf.mxu0
        %v1611 = vadd.f32 %v1498, %v1610
        %1612 = vmatmul.f32.gmra.mxu0 %v763
        %v1613 = vpop.f32.mrf.mxu0
        %v1614 = vadd.f32 %v1501, %v1613
        %1615 = vmatmul.f32.gmra.mxu0 %v764
        %v1616 = vpop.f32.mrf.mxu0
        %v1617 = vadd.f32 %v1504, %v1616
        %1618 = vmatmul.f32.gmra.mxu0 %v765
        %v1619 = vpop.f32.mrf.mxu0
        %v1620 = vadd.f32 %v1507, %v1619
        %1621 = vmatmul.f32.gmra.mxu0 %v766
        %v1622 = vpop.f32.mrf.mxu0
        %v1623 = vadd.f32 %v1510, %v1622
        %1624 = vdwg.mxu0
        %1625 = vmatpush.msra.mxu0 %v524
        %1626 = vmatpush.msra.mxu0 %v523
        %1627 = vmatpush.msra.mxu0 %v522
        %1628 = vmatpush.msra.mxu0 %v521
        %1629 = vmatpush.msra.mxu0 %v520
        %1630 = vmatpush.msra.mxu0 %v519
        %1631 = vmatpush.msra.mxu0 %v518
        %1632 = vmatpush.msra.mxu0 %v517
        %1633 = vmatpush.msra.mxu0 %v516
        %1634 = vmatpush.msra.mxu0 %v515
        %1635 = vmatpush.msra.mxu0 %v514
        %1636 = vmatpush.msra.mxu0 %v513
        %1637 = vmatpush.msra.mxu0 %v512
        %1638 = vmatpush.msra.mxu0 %v511
        %1639 = vmatpush.msra.mxu0 %v510
        %1640 = vmatpush.msra.mxu0 %v509
        %1641 = vmatmul.f32.gmra.mxu0 %v767
        %v1642 = vpop.f32.mrf.mxu0
        %v1643 = vadd.f32 %v1530, %v1642
        %1644 = vmatmul.f32.gmra.mxu0 %v768
        %v1645 = vpop.f32.mrf.mxu0
        %v1646 = vadd.f32 %v1533, %v1645
        %1647 = vmatmul.f32.gmra.mxu0 %v769
        %v1648 = vpop.f32.mrf.mxu0
        %v1649 = vadd.f32 %v1536, %v1648
        %1650 = vmatmul.f32.gmra.mxu0 %v770
        %v1651 = vpop.f32.mrf.mxu0
        %v1652 = vadd.f32 %v1539, %v1651
        %1653 = vmatmul.f32.gmra.mxu0 %v771
        %v1654 = vpop.f32.mrf.mxu0
        %v1655 = vadd.f32 %v1542, %v1654
        %1656 = vmatmul.f32.gmra.mxu0 %v772
        %v1657 = vpop.f32.mrf.mxu0
        %v1658 = vadd.f32 %v1545, %v1657
        %1659 = vmatmul.f32.gmra.mxu0 %v773
        %v1660 = vpop.f32.mrf.mxu0
        %v1661 = vadd.f32 %v1548, %v1660
        %1662 = vmatmul.f32.gmra.mxu0 %v774
        %v1663 = vpop.f32.mrf.mxu0
        %v1664 = vadd.f32 %v1551, %v1663
        %1665 = vmatmul.f32.gmra.mxu0 %v775
        %v1666 = vpop.f32.mrf.mxu0
        %v1667 = vadd.f32 %v1554, %v1666
        %1668 = vmatmul.f32.gmra.mxu0 %v776
        %v1669 = vpop.f32.mrf.mxu0
        %v1670 = vadd.f32 %v1557, %v1669
        %1671 = vmatmul.f32.gmra.mxu0 %v777
        %v1672 = vpop.f32.mrf.mxu0
        %v1673 = vadd.f32 %v1560, %v1672
        %1674 = vmatmul.f32.gmra.mxu0 %v778
        %v1675 = vpop.f32.mrf.mxu0
        %v1676 = vadd.f32 %v1563, %v1675
        %1677 = vmatmul.f32.gmra.mxu0 %v779
        %v1678 = vpop.f32.mrf.mxu0
        %v1679 = vadd.f32 %v1566, %v1678
        %1680 = vmatmul.f32.gmra.mxu0 %v780
        %v1681 = vpop.f32.mrf.mxu0
        %v1682 = vadd.f32 %v1569, %v1681
        %1683 = vmatmul.f32.gmra.mxu0 %v781
        %v1684 = vpop.f32.mrf.mxu0
        %v1685 = vadd.f32 %v1572, %v1684
        %1686 = vmatmul.f32.gmra.mxu0 %v782
        %v1687 = vpop.f32.mrf.mxu0
        %v1688 = vadd.f32 %v1575, %v1687
        %1689 = vmatmul.f32.gmra.mxu0 %v783
        %v1690 = vpop.f32.mrf.mxu0
        %v1691 = vadd.f32 %v1578, %v1690
        %1692 = vmatmul.f32.gmra.mxu0 %v784
        %v1693 = vpop.f32.mrf.mxu0
        %v1694 = vadd.f32 %v1581, %v1693
        %1695 = vmatmul.f32.gmra.mxu0 %v785
        %v1696 = vpop.f32.mrf.mxu0
        %v1697 = vadd.f32 %v1584, %v1696
        %1698 = vmatmul.f32.gmra.mxu0 %v786
        %v1699 = vpop.f32.mrf.mxu0
        %v1700 = vadd.f32 %v1587, %v1699
        %1701 = vmatmul.f32.gmra.mxu0 %v787
        %v1702 = vpop.f32.mrf.mxu0
        %v1703 = vadd.f32 %v1590, %v1702
        %1704 = vmatmul.f32.gmra.mxu0 %v788
        %v1705 = vpop.f32.mrf.mxu0
        %v1706 = vadd.f32 %v1593, %v1705
        %1707 = vmatmul.f32.gmra.mxu0 %v789
        %v1708 = vpop.f32.mrf.mxu0
        %v1709 = vadd.f32 %v1596, %v1708
        %1710 = vmatmul.f32.gmra.mxu0 %v790
        %v1711 = vpop.f32.mrf.mxu0
        %v1712 = vadd.f32 %v1599, %v1711
        %1713 = vmatmul.f32.gmra.mxu0 %v791
        %v1714 = vpop.f32.mrf.mxu0
        %v1715 = vadd.f32 %v1602, %v1714
        %1716 = vmatmul.f32.gmra.mxu0 %v792
        %v1717 = vpop.f32.mrf.mxu0
        %v1718 = vadd.f32 %v1605, %v1717
        %1719 = vmatmul.f32.gmra.mxu0 %v793
        %v1720 = vpop.f32.mrf.mxu0
        %v1721 = vadd.f32 %v1608, %v1720
        %1722 = vmatmul.f32.gmra.mxu0 %v794
        %v1723 = vpop.f32.mrf.mxu0
        %v1724 = vadd.f32 %v1611, %v1723
        %1725 = vmatmul.f32.gmra.mxu0 %v795
        %v1726 = vpop.f32.mrf.mxu0
        %v1727 = vadd.f32 %v1614, %v1726
        %1728 = vmatmul.f32.gmra.mxu0 %v796
        %v1729 = vpop.f32.mrf.mxu0
        %v1730 = vadd.f32 %v1617, %v1729
        %1731 = vmatmul.f32.gmra.mxu0 %v797
        %v1732 = vpop.f32.mrf.mxu0
        %v1733 = vadd.f32 %v1620, %v1732
        %1734 = vmatmul.f32.gmra.mxu0 %v798
        %v1735 = vpop.f32.mrf.mxu0
        %v1736 = vadd.f32 %v1623, %v1735
        %1737 = vdwg.mxu0
        %1738 = vmatpush.msra.mxu0 %v540
        %1739 = vmatpush.msra.mxu0 %v539
        %1740 = vmatpush.msra.mxu0 %v538
        %1741 = vmatpush.msra.mxu0 %v537
        %1742 = vmatpush.msra.mxu0 %v536
        %1743 = vmatpush.msra.mxu0 %v535
        %1744 = vmatpush.msra.mxu0 %v534
        %1745 = vmatpush.msra.mxu0 %v533
        %1746 = vmatpush.msra.mxu0 %v532
        %1747 = vmatpush.msra.mxu0 %v531
        %1748 = vmatpush.msra.mxu0 %v530
        %1749 = vmatpush.msra.mxu0 %v529
        %1750 = vmatpush.msra.mxu0 %v528
        %1751 = vmatpush.msra.mxu0 %v527
        %1752 = vmatpush.msra.mxu0 %v526
        %1753 = vmatpush.msra.mxu0 %v525
        %1754 = vmatmul.f32.gmra.mxu0 %v799
        %v1755 = vpop.f32.mrf.mxu0
        %v1756 = vadd.f32 %v1643, %v1755
        %1757 = vmatmul.f32.gmra.mxu0 %v800
        %v1758 = vpop.f32.mrf.mxu0
        %v1759 = vadd.f32 %v1646, %v1758
        %1760 = vmatmul.f32.gmra.mxu0 %v801
        %v1761 = vpop.f32.mrf.mxu0
        %v1762 = vadd.f32 %v1649, %v1761
        %1763 = vmatmul.f32.gmra.mxu0 %v802
        %v1764 = vpop.f32.mrf.mxu0
        %v1765 = vadd.f32 %v1652, %v1764
        %1766 = vmatmul.f32.gmra.mxu0 %v803
        %v1767 = vpop.f32.mrf.mxu0
        %v1768 = vadd.f32 %v1655, %v1767
        %1769 = vmatmul.f32.gmra.mxu0 %v804
        %v1770 = vpop.f32.mrf.mxu0
        %v1771 = vadd.f32 %v1658, %v1770
        %1772 = vmatmul.f32.gmra.mxu0 %v805
        %v1773 = vpop.f32.mrf.mxu0
        %v1774 = vadd.f32 %v1661, %v1773
        %1775 = vmatmul.f32.gmra.mxu0 %v806
        %v1776 = vpop.f32.mrf.mxu0
        %v1777 = vadd.f32 %v1664, %v1776
        %1778 = vmatmul.f32.gmra.mxu0 %v807
        %v1779 = vpop.f32.mrf.mxu0
        %v1780 = vadd.f32 %v1667, %v1779
        %1781 = vmatmul.f32.gmra.mxu0 %v808
        %v1782 = vpop.f32.mrf.mxu0
        %v1783 = vadd.f32 %v1670, %v1782
        %1784 = vmatmul.f32.gmra.mxu0 %v809
        %v1785 = vpop.f32.mrf.mxu0
        %v1786 = vadd.f32 %v1673, %v1785
        %1787 = vmatmul.f32.gmra.mxu0 %v810
        %v1788 = vpop.f32.mrf.mxu0
        %v1789 = vadd.f32 %v1676, %v1788
        %1790 = vmatmul.f32.gmra.mxu0 %v811
        %v1791 = vpop.f32.mrf.mxu0
        %v1792 = vadd.f32 %v1679, %v1791
        %1793 = vmatmul.f32.gmra.mxu0 %v812
        %v1794 = vpop.f32.mrf.mxu0
        %v1795 = vadd.f32 %v1682, %v1794
        %1796 = vmatmul.f32.gmra.mxu0 %v813
        %v1797 = vpop.f32.mrf.mxu0
        %v1798 = vadd.f32 %v1685, %v1797
        %1799 = vmatmul.f32.gmra.mxu0 %v814
        %v1800 = vpop.f32.mrf.mxu0
        %v1801 = vadd.f32 %v1688, %v1800
        %1802 = vmatmul.f32.gmra.mxu0 %v815
        %v1803 = vpop.f32.mrf.mxu0
        %v1804 = vadd.f32 %v1691, %v1803
        %1805 = vmatmul.f32.gmra.mxu0 %v816
        %v1806 = vpop.f32.mrf.mxu0
        %v1807 = vadd.f32 %v1694, %v1806
        %1808 = vmatmul.f32.gmra.mxu0 %v817
        %v1809 = vpop.f32.mrf.mxu0
        %v1810 = vadd.f32 %v1697, %v1809
        %1811 = vmatmul.f32.gmra.mxu0 %v818
        %v1812 = vpop.f32.mrf.mxu0
        %v1813 = vadd.f32 %v1700, %v1812
        %1814 = vmatmul.f32.gmra.mxu0 %v819
        %v1815 = vpop.f32.mrf.mxu0
        %v1816 = vadd.f32 %v1703, %v1815
        %1817 = vmatmul.f32.gmra.mxu0 %v820
        %v1818 = vpop.f32.mrf.mxu0
        %v1819 = vadd.f32 %v1706, %v1818
        %1820 = vmatmul.f32.gmra.mxu0 %v821
        %v1821 = vpop.f32.mrf.mxu0
        %v1822 = vadd.f32 %v1709, %v1821
        %1823 = vmatmul.f32.gmra.mxu0 %v822
        %v1824 = vpop.f32.mrf.mxu0
        %v1825 = vadd.f32 %v1712, %v1824
        %1826 = vmatmul.f32.gmra.mxu0 %v823
        %v1827 = vpop.f32.mrf.mxu0
        %v1828 = vadd.f32 %v1715, %v1827
        %1829 = vmatmul.f32.gmra.mxu0 %v824
        %v1830 = vpop.f32.mrf.mxu0
        %v1831 = vadd.f32 %v1718, %v1830
        %1832 = vmatmul.f32.gmra.mxu0 %v825
        %v1833 = vpop.f32.mrf.mxu0
        %v1834 = vadd.f32 %v1721, %v1833
        %1835 = vmatmul.f32.gmra.mxu0 %v826
        %v1836 = vpop.f32.mrf.mxu0
        %v1837 = vadd.f32 %v1724, %v1836
        %1838 = vmatmul.f32.gmra.mxu0 %v827
        %v1839 = vpop.f32.mrf.mxu0
        %v1840 = vadd.f32 %v1727, %v1839
        %1841 = vmatmul.f32.gmra.mxu0 %v828
        %v1842 = vpop.f32.mrf.mxu0
        %v1843 = vadd.f32 %v1730, %v1842
        %1844 = vmatmul.f32.gmra.mxu0 %v829
        %v1845 = vpop.f32.mrf.mxu0
        %v1846 = vadd.f32 %v1733, %v1845
        %1847 = vmatmul.f32.gmra.mxu0 %v830
        %v1848 = vpop.f32.mrf.mxu0
        %v1849 = vadd.f32 %v1736, %v1848
        %1850 = vdwg.mxu0
        %vm1851 = vcmp.ge.f32.partialorder %v1756, 0.0
        %vm1852 = vcmp.ge.f32.partialorder %v1759, 0.0
        %vm1853 = vcmp.ge.f32.partialorder %v1762, 0.0
        %vm1854 = vcmp.ge.f32.partialorder %v1765, 0.0
        %vm1855 = vcmp.ge.f32.partialorder %v1768, 0.0
        %vm1856 = vcmp.ge.f32.partialorder %v1771, 0.0
        %vm1857 = vcmp.ge.f32.partialorder %v1774, 0.0
        %vm1858 = vcmp.ge.f32.partialorder %v1777, 0.0
        %vm1859 = vcmp.ge.f32.partialorder %v1780, 0.0
        %vm1860 = vcmp.ge.f32.partialorder %v1783, 0.0
        %vm1861 = vcmp.ge.f32.partialorder %v1786, 0.0
        %vm1862 = vcmp.ge.f32.partialorder %v1789, 0.0
        %vm1863 = vcmp.ge.f32.partialorder %v1792, 0.0
        %vm1864 = vcmp.ge.f32.partialorder %v1795, 0.0
        %vm1865 = vcmp.ge.f32.partialorder %v1798, 0.0
        %vm1866 = vcmp.ge.f32.partialorder %v1801, 0.0
        %vm1867 = vcmp.ge.f32.partialorder %v1804, 0.0
        %vm1868 = vcmp.ge.f32.partialorder %v1807, 0.0
        %vm1869 = vcmp.ge.f32.partialorder %v1810, 0.0
        %vm1870 = vcmp.ge.f32.partialorder %v1813, 0.0
        %vm1871 = vcmp.ge.f32.partialorder %v1816, 0.0
        %vm1872 = vcmp.ge.f32.partialorder %v1819, 0.0
        %vm1873 = vcmp.ge.f32.partialorder %v1822, 0.0
        %vm1874 = vcmp.ge.f32.partialorder %v1825, 0.0
        %vm1875 = vcmp.ge.f32.partialorder %v1828, 0.0
        %vm1876 = vcmp.ge.f32.partialorder %v1831, 0.0
        %vm1877 = vcmp.ge.f32.partialorder %v1834, 0.0
        %vm1878 = vcmp.ge.f32.partialorder %v1837, 0.0
        %vm1879 = vcmp.ge.f32.partialorder %v1840, 0.0
        %vm1880 = vcmp.ge.f32.partialorder %v1843, 0.0
        %vm1881 = vcmp.ge.f32.partialorder %v1846, 0.0
        %vm1882 = vcmp.ge.f32.partialorder %v1849, 0.0
        %v1883 = vmul.f32 %v1756, 0.2
        %v1884 = vmul.f32 %v1759, 0.2
        %v1885 = vmul.f32 %v1762, 0.2
        %v1886 = vmul.f32 %v1765, 0.2
        %v1887 = vmul.f32 %v1768, 0.2
        %v1888 = vmul.f32 %v1771, 0.2
        %v1889 = vmul.f32 %v1774, 0.2
        %v1890 = vmul.f32 %v1777, 0.2
        %v1891 = vmul.f32 %v1780, 0.2
        %v1892 = vmul.f32 %v1783, 0.2
        %v1893 = vmul.f32 %v1786, 0.2
        %v1894 = vmul.f32 %v1789, 0.2
        %v1895 = vmul.f32 %v1792, 0.2
        %v1896 = vmul.f32 %v1795, 0.2
        %v1897 = vmul.f32 %v1798, 0.2
        %v1898 = vmul.f32 %v1801, 0.2
        %v1899 = vmul.f32 %v1804, 0.2
        %v1900 = vmul.f32 %v1807, 0.2
        %v1901 = vmul.f32 %v1810, 0.2
        %v1902 = vmul.f32 %v1813, 0.2
        %v1903 = vmul.f32 %v1816, 0.2
        %v1904 = vmul.f32 %v1819, 0.2
        %v1905 = vmul.f32 %v1822, 0.2
        %v1906 = vmul.f32 %v1825, 0.2
        %v1907 = vmul.f32 %v1828, 0.2
        %v1908 = vmul.f32 %v1831, 0.2
        %v1909 = vmul.f32 %v1834, 0.2
        %v1910 = vmul.f32 %v1837, 0.2
        %v1911 = vmul.f32 %v1840, 0.2
        %v1912 = vmul.f32 %v1843, 0.2
        %v1913 = vmul.f32 %v1846, 0.2
        %v1914 = vmul.f32 %v1849, 0.2
        %v1915 = vsel %vm1851, %v1756, %v1883
        %v1916 = vsel %vm1852, %v1759, %v1884
        %v1917 = vsel %vm1853, %v1762, %v1885
        %v1918 = vsel %vm1854, %v1765, %v1886
        %v1919 = vsel %vm1855, %v1768, %v1887
        %v1920 = vsel %vm1856, %v1771, %v1888
        %v1921 = vsel %vm1857, %v1774, %v1889
        %v1922 = vsel %vm1858, %v1777, %v1890
        %v1923 = vsel %vm1859, %v1780, %v1891
        %v1924 = vsel %vm1860, %v1783, %v1892
        %v1925 = vsel %vm1861, %v1786, %v1893
        %v1926 = vsel %vm1862, %v1789, %v1894
        %v1927 = vsel %vm1863, %v1792, %v1895
        %v1928 = vsel %vm1864, %v1795, %v1896
        %v1929 = vsel %vm1865, %v1798, %v1897
        %v1930 = vsel %vm1866, %v1801, %v1898
        %v1931 = vsel %vm1867, %v1804, %v1899
        %v1932 = vsel %vm1868, %v1807, %v1900
        %v1933 = vsel %vm1869, %v1810, %v1901
        %v1934 = vsel %vm1870, %v1813, %v1902
        %v1935 = vsel %vm1871, %v1816, %v1903
        %v1936 = vsel %vm1872, %v1819, %v1904
        %v1937 = vsel %vm1873, %v1822, %v1905
        %v1938 = vsel %vm1874, %v1825, %v1906
        %v1939 = vsel %vm1875, %v1828, %v1907
        %v1940 = vsel %vm1876, %v1831, %v1908
        %v1941 = vsel %vm1877, %v1834, %v1909
        %v1942 = vsel %vm1878, %v1837, %v1910
        %v1943 = vsel %vm1879, %v1840, %v1911
        %v1944 = vsel %vm1880, %v1843, %v1912
        %v1945 = vsel %vm1881, %v1846, %v1913
        %v1946 = vsel %vm1882, %v1849, %v1914
        %1947 = vst [vmem:[%s364 + $0x1] sm:$0xff] %v1915
        %1948 = vst [vmem:[%s364 + $0x9] sm:$0xff] %v1916
        %1949 = vst [vmem:[%s364 + $0x19] sm:$0xff] %v1917
        %1950 = vst [vmem:[%s364 + $0x21] sm:$0xff] %v1918
        %1951 = vst [vmem:[%s364 + $0x31] sm:$0xff] %v1919
        %1952 = vst [vmem:[%s364 + $0x39] sm:$0xff] %v1920
        %1953 = vst [vmem:[%s364 + $0x49] sm:$0xff] %v1921
        %1954 = vst [vmem:[%s364 + $0x51] sm:$0xff] %v1922
        %1955 = vst [vmem:[%s364 + $0x61] sm:$0xff] %v1923
        %1956 = vst [vmem:[%s364 + $0x69] sm:$0xff] %v1924
        %1957 = vst [vmem:[%s364 + $0x79] sm:$0xff] %v1925
        %1958 = vst [vmem:[%s364 + $0x81] sm:$0xff] %v1926
        %1959 = vst [vmem:[%s364 + $0x91] sm:$0xff] %v1927
        %1960 = vst [vmem:[%s364 + $0x99] sm:$0xff] %v1928
        %1961 = vst [vmem:[%s364 + $0xa9] sm:$0xff] %v1929
        %1962 = vst [vmem:[%s364 + $0xb1] sm:$0xff] %v1930
        %1963 = vst [vmem:[%s364 + $0xc1] sm:$0xff] %v1931
        %1964 = vst [vmem:[%s364 + $0xc9] sm:$0xff] %v1932
        %1965 = vst [vmem:[%s364 + $0xd9] sm:$0xff] %v1933
        %1966 = vst [vmem:[%s364 + $0xe1] sm:$0xff] %v1934
        %1967 = vst [vmem:[%s364 + $0xf1] sm:$0xff] %v1935
        %1968 = vst [vmem:[%s364 + $0xf9] sm:$0xff] %v1936
        %1969 = vst [vmem:[%s364 + $0x109] sm:$0xff] %v1937
        %1970 = vst [vmem:[%s364 + $0x111] sm:$0xff] %v1938
        %1971 = vst [vmem:[%s364 + $0x121] sm:$0xff] %v1939
        %1972 = vst [vmem:[%s364 + $0x129] sm:$0xff] %v1940
        %1973 = vst [vmem:[%s364 + $0x139] sm:$0xff] %v1941
        %1974 = vst [vmem:[%s364 + $0x141] sm:$0xff] %v1942
        %1975 = vst [vmem:[%s364 + $0x151] sm:$0xff] %v1943
        %1976 = vst [vmem:[%s364 + $0x159] sm:$0xff] %v1944
        %1977 = vst [vmem:[%s364 + $0x169] sm:$0xff] %v1945
        %1978 = vst [vmem:[%s364 + $0x171] sm:$0xff] %v1946
        %v1979 = vld [vmem:[#allocation8] sm:$0xff]
        %v1980 = vld [vmem:[#allocation8 + $0x8] sm:$0xff]
        %v1981 = vld [vmem:[#allocation8 + $0x10] sm:$0xff]
        %v1982 = vld [vmem:[#allocation8 + $0x18] sm:$0xff]
        %v1983 = vld [vmem:[#allocation8 + $0x20] sm:$0xff]
        %v1984 = vld [vmem:[#allocation8 + $0x28] sm:$0xff]
        %v1985 = vld [vmem:[#allocation8 + $0x30] sm:$0xff]
        %v1986 = vld [vmem:[#allocation8 + $0x38] sm:$0xff]
        %v1987 = vld [vmem:[#allocation8 + $0x40] sm:$0xff]
        %v1988 = vld [vmem:[#allocation8 + $0x48] sm:$0xff]
        %v1989 = vld [vmem:[#allocation8 + $0x50] sm:$0xff]
        %v1990 = vld [vmem:[#allocation8 + $0x58] sm:$0xff]
        %v1991 = vld [vmem:[#allocation8 + $0x60] sm:$0xff]
        %v1992 = vld [vmem:[#allocation8 + $0x68] sm:$0xff]
        %v1993 = vld [vmem:[#allocation8 + $0x70] sm:$0xff]
        %v1994 = vld [vmem:[#allocation8 + $0x78] sm:$0xff]
        %v1995 = vld [vmem:[#allocation8 + $0x80] sm:$0xff]
        %v1996 = vld [vmem:[#allocation8 + $0x88] sm:$0xff]
        %v1997 = vld [vmem:[#allocation8 + $0x90] sm:$0xff]
        %v1998 = vld [vmem:[#allocation8 + $0x98] sm:$0xff]
        %v1999 = vld [vmem:[#allocation8 + $0xa0] sm:$0xff]
        %v2000 = vld [vmem:[#allocation8 + $0xa8] sm:$0xff]
        %v2001 = vld [vmem:[#allocation8 + $0xb0] sm:$0xff]
        %v2002 = vld [vmem:[#allocation8 + $0xb8] sm:$0xff]
        %v2003 = vld [vmem:[#allocation8 + $0xc0] sm:$0xff]
        %v2004 = vld [vmem:[#allocation8 + $0xc8] sm:$0xff]
        %v2005 = vld [vmem:[#allocation8 + $0xd0] sm:$0xff]
        %v2006 = vld [vmem:[#allocation8 + $0xd8] sm:$0xff]
        %v2007 = vld [vmem:[#allocation8 + $0xe0] sm:$0xff]
        %v2008 = vld [vmem:[#allocation8 + $0xe8] sm:$0xff]
        %v2009 = vld [vmem:[#allocation8 + $0xf0] sm:$0xff]
        %v2010 = vld [vmem:[#allocation8 + $0xf8] sm:$0xff]
        %v2011 = vld [vmem:[#allocation8 + $0x100] sm:$0xff]
        %v2012 = vld [vmem:[#allocation8 + $0x108] sm:$0xff]
        %v2013 = vld [vmem:[#allocation8 + $0x110] sm:$0xff]
        %v2014 = vld [vmem:[#allocation8 + $0x118] sm:$0xff]
        %v2015 = vld [vmem:[#allocation8 + $0x120] sm:$0xff]
        %v2016 = vld [vmem:[#allocation8 + $0x128] sm:$0xff]
        %v2017 = vld [vmem:[#allocation8 + $0x130] sm:$0xff]
        %v2018 = vld [vmem:[#allocation8 + $0x138] sm:$0xff]
        %v2019 = vld [vmem:[#allocation8 + $0x140] sm:$0xff]
        %v2020 = vld [vmem:[#allocation8 + $0x148] sm:$0xff]
        %v2021 = vld [vmem:[#allocation8 + $0x150] sm:$0xff]
        %v2022 = vld [vmem:[#allocation8 + $0x158] sm:$0xff]
        %v2023 = vld [vmem:[#allocation8 + $0x160] sm:$0xff]
        %v2024 = vld [vmem:[#allocation8 + $0x168] sm:$0xff]
        %v2025 = vld [vmem:[#allocation8 + $0x170] sm:$0xff]
        %v2026 = vld [vmem:[#allocation8 + $0x178] sm:$0xff]
        %v2027 = vld [vmem:[#allocation8 + $0x180] sm:$0xff]
        %v2028 = vld [vmem:[#allocation8 + $0x188] sm:$0xff]
        %v2029 = vld [vmem:[#allocation8 + $0x190] sm:$0xff]
        %v2030 = vld [vmem:[#allocation8 + $0x198] sm:$0xff]
        %v2031 = vld [vmem:[#allocation8 + $0x1a0] sm:$0xff]
        %v2032 = vld [vmem:[#allocation8 + $0x1a8] sm:$0xff]
        %v2033 = vld [vmem:[#allocation8 + $0x1b0] sm:$0xff]
        %v2034 = vld [vmem:[#allocation8 + $0x1b8] sm:$0xff]
        %v2035 = vld [vmem:[#allocation8 + $0x1c0] sm:$0xff]
        %v2036 = vld [vmem:[#allocation8 + $0x1c8] sm:$0xff]
        %v2037 = vld [vmem:[#allocation8 + $0x1d0] sm:$0xff]
        %v2038 = vld [vmem:[#allocation8 + $0x1d8] sm:$0xff]
        %v2039 = vld [vmem:[#allocation8 + $0x1e0] sm:$0xff]
        %v2040 = vld [vmem:[#allocation8 + $0x1e8] sm:$0xff]
        %v2041 = vld [vmem:[#allocation8 + $0x1f0] sm:$0xff]
        %v2042 = vld [vmem:[#allocation8 + $0x1f8] sm:$0xff]
        %v2043 = vld [vmem:[#allocation8 + $0x200] sm:$0xff]
        %v2044 = vld [vmem:[#allocation8 + $0x208] sm:$0xff]
        %v2045 = vld [vmem:[#allocation8 + $0x210] sm:$0xff]
        %v2046 = vld [vmem:[#allocation8 + $0x218] sm:$0xff]
        %v2047 = vld [vmem:[#allocation8 + $0x220] sm:$0xff]
        %v2048 = vld [vmem:[#allocation8 + $0x228] sm:$0xff]
        %v2049 = vld [vmem:[#allocation8 + $0x230] sm:$0xff]
        %v2050 = vld [vmem:[#allocation8 + $0x238] sm:$0xff]
        %v2051 = vld [vmem:[#allocation8 + $0x240] sm:$0xff]
        %v2052 = vld [vmem:[#allocation8 + $0x248] sm:$0xff]
        %v2053 = vld [vmem:[#allocation8 + $0x250] sm:$0xff]
        %v2054 = vld [vmem:[#allocation8 + $0x258] sm:$0xff]
        %v2055 = vld [vmem:[#allocation8 + $0x260] sm:$0xff]
        %v2056 = vld [vmem:[#allocation8 + $0x268] sm:$0xff]
        %v2057 = vld [vmem:[#allocation8 + $0x270] sm:$0xff]
        %v2058 = vld [vmem:[#allocation8 + $0x278] sm:$0xff]
        %v2059 = vld [vmem:[#allocation8 + $0x280] sm:$0xff]
        %v2060 = vld [vmem:[#allocation8 + $0x288] sm:$0xff]
        %v2061 = vld [vmem:[#allocation8 + $0x290] sm:$0xff]
        %v2062 = vld [vmem:[#allocation8 + $0x298] sm:$0xff]
        %v2063 = vld [vmem:[#allocation8 + $0x2a0] sm:$0xff]
        %v2064 = vld [vmem:[#allocation8 + $0x2a8] sm:$0xff]
        %v2065 = vld [vmem:[#allocation8 + $0x2b0] sm:$0xff]
        %v2066 = vld [vmem:[#allocation8 + $0x2b8] sm:$0xff]
        %v2067 = vld [vmem:[#allocation8 + $0x2c0] sm:$0xff]
        %v2068 = vld [vmem:[#allocation8 + $0x2c8] sm:$0xff]
        %v2069 = vld [vmem:[#allocation8 + $0x2d0] sm:$0xff]
        %v2070 = vld [vmem:[#allocation8 + $0x2d8] sm:$0xff]
        %v2071 = vld [vmem:[#allocation8 + $0x2e0] sm:$0xff]
        %v2072 = vld [vmem:[#allocation8 + $0x2e8] sm:$0xff]
        %v2073 = vld [vmem:[#allocation8 + $0x2f0] sm:$0xff]
        %v2074 = vld [vmem:[#allocation8 + $0x2f8] sm:$0xff]
        %v2075 = vld [vmem:[#allocation8 + $0x300] sm:$0xff]
        %v2076 = vld [vmem:[#allocation8 + $0x308] sm:$0xff]
        %v2077 = vld [vmem:[#allocation8 + $0x310] sm:$0xff]
        %v2078 = vld [vmem:[#allocation8 + $0x318] sm:$0xff]
        %v2079 = vld [vmem:[#allocation8 + $0x320] sm:$0xff]
        %v2080 = vld [vmem:[#allocation8 + $0x328] sm:$0xff]
        %v2081 = vld [vmem:[#allocation8 + $0x330] sm:$0xff]
        %v2082 = vld [vmem:[#allocation8 + $0x338] sm:$0xff]
        %v2083 = vld [vmem:[#allocation8 + $0x340] sm:$0xff]
        %v2084 = vld [vmem:[#allocation8 + $0x348] sm:$0xff]
        %v2085 = vld [vmem:[#allocation8 + $0x350] sm:$0xff]
        %v2086 = vld [vmem:[#allocation8 + $0x358] sm:$0xff]
        %v2087 = vld [vmem:[#allocation8 + $0x360] sm:$0xff]
        %v2088 = vld [vmem:[#allocation8 + $0x368] sm:$0xff]
        %v2089 = vld [vmem:[#allocation8 + $0x370] sm:$0xff]
        %v2090 = vld [vmem:[#allocation8 + $0x378] sm:$0xff]
        %v2091 = vld [vmem:[#allocation8 + $0x380] sm:$0xff]
        %v2092 = vld [vmem:[#allocation8 + $0x388] sm:$0xff]
        %v2093 = vld [vmem:[#allocation8 + $0x390] sm:$0xff]
        %v2094 = vld [vmem:[#allocation8 + $0x398] sm:$0xff]
        %v2095 = vld [vmem:[#allocation8 + $0x3a0] sm:$0xff]
        %v2096 = vld [vmem:[#allocation8 + $0x3a8] sm:$0xff]
        %v2097 = vld [vmem:[#allocation8 + $0x3b0] sm:$0xff]
        %v2098 = vld [vmem:[#allocation8 + $0x3b8] sm:$0xff]
        %v2099 = vld [vmem:[#allocation8 + $0x3c0] sm:$0xff]
        %v2100 = vld [vmem:[#allocation8 + $0x3c8] sm:$0xff]
        %v2101 = vld [vmem:[#allocation8 + $0x3d0] sm:$0xff]
        %v2102 = vld [vmem:[#allocation8 + $0x3d8] sm:$0xff]
        %v2103 = vld [vmem:[#allocation8 + $0x3e0] sm:$0xff]
        %v2104 = vld [vmem:[#allocation8 + $0x3e8] sm:$0xff]
        %v2105 = vld [vmem:[#allocation8 + $0x3f0] sm:$0xff]
        %v2106 = vld [vmem:[#allocation8 + $0x3f8] sm:$0xff]
        %v2107 = vld [vmem:[#allocation8 + $0x400] sm:$0xff]
        %v2108 = vld [vmem:[#allocation8 + $0x408] sm:$0xff]
        %v2109 = vld [vmem:[#allocation8 + $0x410] sm:$0xff]
        %v2110 = vld [vmem:[#allocation8 + $0x418] sm:$0xff]
        %v2111 = vld [vmem:[#allocation8 + $0x420] sm:$0xff]
        %v2112 = vld [vmem:[#allocation8 + $0x428] sm:$0xff]
        %v2113 = vld [vmem:[#allocation8 + $0x430] sm:$0xff]
        %v2114 = vld [vmem:[#allocation8 + $0x438] sm:$0xff]
        %v2115 = vld [vmem:[#allocation8 + $0x440] sm:$0xff]
        %v2116 = vld [vmem:[#allocation8 + $0x448] sm:$0xff]
        %v2117 = vld [vmem:[#allocation8 + $0x450] sm:$0xff]
        %v2118 = vld [vmem:[#allocation8 + $0x458] sm:$0xff]
        %v2119 = vld [vmem:[#allocation8 + $0x460] sm:$0xff]
        %v2120 = vld [vmem:[#allocation8 + $0x468] sm:$0xff]
        %v2121 = vld [vmem:[#allocation8 + $0x470] sm:$0xff]
        %v2122 = vld [vmem:[#allocation8 + $0x478] sm:$0xff]
        %v2123 = vld [vmem:[%s4] sm:$0x1]
        %v2124 = vld [vmem:[#allocation2] sm:$0xff]
        %v2125 = vld [vmem:[#allocation2 + $0x8] sm:$0xff]
        %v2126 = vld [vmem:[#allocation2 + $0x18] sm:$0xff]
        %v2127 = vld [vmem:[#allocation2 + $0x20] sm:$0xff]
        %v2128 = vld [vmem:[#allocation2 + $0x30] sm:$0xff]
        %v2129 = vld [vmem:[#allocation2 + $0x38] sm:$0xff]
        %v2130 = vld [vmem:[#allocation2 + $0x48] sm:$0xff]
        %v2131 = vld [vmem:[#allocation2 + $0x50] sm:$0xff]
        %v2132 = vld [vmem:[#allocation2 + $0x60] sm:$0xff]
        %v2133 = vld [vmem:[#allocation2 + $0x68] sm:$0xff]
        %v2134 = vld [vmem:[#allocation2 + $0x78] sm:$0xff]
        %v2135 = vld [vmem:[#allocation2 + $0x80] sm:$0xff]
        %v2136 = vld [vmem:[#allocation2 + $0x90] sm:$0xff]
        %v2137 = vld [vmem:[#allocation2 + $0x98] sm:$0xff]
        %v2138 = vld [vmem:[#allocation2 + $0xa8] sm:$0xff]
        %v2139 = vld [vmem:[#allocation2 + $0xb0] sm:$0xff]
        %v2140 = vld [vmem:[#allocation2 + $0xc0] sm:$0xff]
        %v2141 = vld [vmem:[#allocation2 + $0xc8] sm:$0xff]
        %v2142 = vld [vmem:[#allocation2 + $0xd8] sm:$0xff]
        %v2143 = vld [vmem:[#allocation2 + $0xe0] sm:$0xff]
        %v2144 = vld [vmem:[#allocation2 + $0xf0] sm:$0xff]
        %v2145 = vld [vmem:[#allocation2 + $0xf8] sm:$0xff]
        %v2146 = vld [vmem:[#allocation2 + $0x108] sm:$0xff]
        %v2147 = vld [vmem:[#allocation2 + $0x110] sm:$0xff]
        %v2148 = vld [vmem:[#allocation2 + $0x120] sm:$0xff]
        %v2149 = vld [vmem:[#allocation2 + $0x128] sm:$0xff]
        %v2150 = vld [vmem:[#allocation2 + $0x138] sm:$0xff]
        %v2151 = vld [vmem:[#allocation2 + $0x140] sm:$0xff]
        %v2152 = vld [vmem:[#allocation2 + $0x150] sm:$0xff]
        %v2153 = vld [vmem:[#allocation2 + $0x158] sm:$0xff]
        %v2154 = vld [vmem:[#allocation2 + $0x168] sm:$0xff]
        %v2155 = vld [vmem:[#allocation2 + $0x170] sm:$0xff]
        %v2156 = vld [vmem:[#allocation2 + $0x1] sm:$0xff]
        %v2157 = vld [vmem:[#allocation2 + $0x9] sm:$0xff]
        %v2158 = vld [vmem:[#allocation2 + $0x19] sm:$0xff]
        %v2159 = vld [vmem:[#allocation2 + $0x21] sm:$0xff]
        %v2160 = vld [vmem:[#allocation2 + $0x31] sm:$0xff]
        %v2161 = vld [vmem:[#allocation2 + $0x39] sm:$0xff]
        %v2162 = vld [vmem:[#allocation2 + $0x49] sm:$0xff]
        %v2163 = vld [vmem:[#allocation2 + $0x51] sm:$0xff]
        %v2164 = vld [vmem:[#allocation2 + $0x61] sm:$0xff]
        %v2165 = vld [vmem:[#allocation2 + $0x69] sm:$0xff]
        %v2166 = vld [vmem:[#allocation2 + $0x79] sm:$0xff]
        %v2167 = vld [vmem:[#allocation2 + $0x81] sm:$0xff]
        %v2168 = vld [vmem:[#allocation2 + $0x91] sm:$0xff]
        %v2169 = vld [vmem:[#allocation2 + $0x99] sm:$0xff]
        %v2170 = vld [vmem:[#allocation2 + $0xa9] sm:$0xff]
        %v2171 = vld [vmem:[#allocation2 + $0xb1] sm:$0xff]
        %v2172 = vld [vmem:[#allocation2 + $0xc1] sm:$0xff]
        %v2173 = vld [vmem:[#allocation2 + $0xc9] sm:$0xff]
        %v2174 = vld [vmem:[#allocation2 + $0xd9] sm:$0xff]
        %v2175 = vld [vmem:[#allocation2 + $0xe1] sm:$0xff]
        %v2176 = vld [vmem:[#allocation2 + $0xf1] sm:$0xff]
        %v2177 = vld [vmem:[#allocation2 + $0xf9] sm:$0xff]
        %v2178 = vld [vmem:[#allocation2 + $0x109] sm:$0xff]
        %v2179 = vld [vmem:[#allocation2 + $0x111] sm:$0xff]
        %v2180 = vld [vmem:[#allocation2 + $0x121] sm:$0xff]
        %v2181 = vld [vmem:[#allocation2 + $0x129] sm:$0xff]
        %v2182 = vld [vmem:[#allocation2 + $0x139] sm:$0xff]
        %v2183 = vld [vmem:[#allocation2 + $0x141] sm:$0xff]
        %v2184 = vld [vmem:[#allocation2 + $0x151] sm:$0xff]
        %v2185 = vld [vmem:[#allocation2 + $0x159] sm:$0xff]
        %v2186 = vld [vmem:[#allocation2 + $0x169] sm:$0xff]
        %v2187 = vld [vmem:[#allocation2 + $0x171] sm:$0xff]
        %v2188 = vld [vmem:[#allocation2 + $0x2] sm:$0xff]
        %v2189 = vld [vmem:[#allocation2 + $0xa] sm:$0xff]
        %v2190 = vld [vmem:[#allocation2 + $0x1a] sm:$0xff]
        %v2191 = vld [vmem:[#allocation2 + $0x22] sm:$0xff]
        %v2192 = vld [vmem:[#allocation2 + $0x32] sm:$0xff]
        %v2193 = vld [vmem:[#allocation2 + $0x3a] sm:$0xff]
        %v2194 = vld [vmem:[#allocation2 + $0x4a] sm:$0xff]
        %v2195 = vld [vmem:[#allocation2 + $0x52] sm:$0xff]
        %v2196 = vld [vmem:[#allocation2 + $0x62] sm:$0xff]
        %v2197 = vld [vmem:[#allocation2 + $0x6a] sm:$0xff]
        %v2198 = vld [vmem:[#allocation2 + $0x7a] sm:$0xff]
        %v2199 = vld [vmem:[#allocation2 + $0x82] sm:$0xff]
        %v2200 = vld [vmem:[#allocation2 + $0x92] sm:$0xff]
        %v2201 = vld [vmem:[#allocation2 + $0x9a] sm:$0xff]
        %v2202 = vld [vmem:[#allocation2 + $0xaa] sm:$0xff]
        %v2203 = vld [vmem:[#allocation2 + $0xb2] sm:$0xff]
        %v2204 = vld [vmem:[#allocation2 + $0xc2] sm:$0xff]
        %v2205 = vld [vmem:[#allocation2 + $0xca] sm:$0xff]
        %v2206 = vld [vmem:[#allocation2 + $0xda] sm:$0xff]
        %v2207 = vld [vmem:[#allocation2 + $0xe2] sm:$0xff]
        %v2208 = vld [vmem:[#allocation2 + $0xf2] sm:$0xff]
        %v2209 = vld [vmem:[#allocation2 + $0xfa] sm:$0xff]
        %v2210 = vld [vmem:[#allocation2 + $0x10a] sm:$0xff]
        %v2211 = vld [vmem:[#allocation2 + $0x112] sm:$0xff]
        %v2212 = vld [vmem:[#allocation2 + $0x122] sm:$0xff]
        %v2213 = vld [vmem:[#allocation2 + $0x12a] sm:$0xff]
        %v2214 = vld [vmem:[#allocation2 + $0x13a] sm:$0xff]
        %v2215 = vld [vmem:[#allocation2 + $0x142] sm:$0xff]
        %v2216 = vld [vmem:[#allocation2 + $0x152] sm:$0xff]
        %v2217 = vld [vmem:[#allocation2 + $0x15a] sm:$0xff]
        %v2218 = vld [vmem:[#allocation2 + $0x16a] sm:$0xff]
        %v2219 = vld [vmem:[#allocation2 + $0x172] sm:$0xff]
        %v2220 = vld [vmem:[%s364] sm:$0xff]
        %v2221 = vld [vmem:[%s364 + $0x8] sm:$0xff]
        %v2222 = vld [vmem:[%s364 + $0x18] sm:$0xff]
        %v2223 = vld [vmem:[%s364 + $0x20] sm:$0xff]
        %v2224 = vld [vmem:[%s364 + $0x30] sm:$0xff]
        %v2225 = vld [vmem:[%s364 + $0x38] sm:$0xff]
        %v2226 = vld [vmem:[%s364 + $0x48] sm:$0xff]
        %v2227 = vld [vmem:[%s364 + $0x50] sm:$0xff]
        %v2228 = vld [vmem:[%s364 + $0x60] sm:$0xff]
        %v2229 = vld [vmem:[%s364 + $0x68] sm:$0xff]
        %v2230 = vld [vmem:[%s364 + $0x78] sm:$0xff]
        %v2231 = vld [vmem:[%s364 + $0x80] sm:$0xff]
        %v2232 = vld [vmem:[%s364 + $0x90] sm:$0xff]
        %v2233 = vld [vmem:[%s364 + $0x98] sm:$0xff]
        %v2234 = vld [vmem:[%s364 + $0xa8] sm:$0xff]
        %v2235 = vld [vmem:[%s364 + $0xb0] sm:$0xff]
        %v2236 = vld [vmem:[%s364 + $0xc0] sm:$0xff]
        %v2237 = vld [vmem:[%s364 + $0xc8] sm:$0xff]
        %v2238 = vld [vmem:[%s364 + $0xd8] sm:$0xff]
        %v2239 = vld [vmem:[%s364 + $0xe0] sm:$0xff]
        %v2240 = vld [vmem:[%s364 + $0xf0] sm:$0xff]
        %v2241 = vld [vmem:[%s364 + $0xf8] sm:$0xff]
        %v2242 = vld [vmem:[%s364 + $0x108] sm:$0xff]
        %v2243 = vld [vmem:[%s364 + $0x110] sm:$0xff]
        %v2244 = vld [vmem:[%s364 + $0x120] sm:$0xff]
        %v2245 = vld [vmem:[%s364 + $0x128] sm:$0xff]
        %v2246 = vld [vmem:[%s364 + $0x138] sm:$0xff]
        %v2247 = vld [vmem:[%s364 + $0x140] sm:$0xff]
        %v2248 = vld [vmem:[%s364 + $0x150] sm:$0xff]
        %v2249 = vld [vmem:[%s364 + $0x158] sm:$0xff]
        %v2250 = vld [vmem:[%s364 + $0x168] sm:$0xff]
        %v2251 = vld [vmem:[%s364 + $0x170] sm:$0xff]
        %v2252 = vld [vmem:[%s364 + $0x1] sm:$0xff]
        %v2253 = vld [vmem:[%s364 + $0x9] sm:$0xff]
        %v2254 = vld [vmem:[%s364 + $0x19] sm:$0xff]
        %v2255 = vld [vmem:[%s364 + $0x21] sm:$0xff]
        %v2256 = vld [vmem:[%s364 + $0x31] sm:$0xff]
        %v2257 = vld [vmem:[%s364 + $0x39] sm:$0xff]
        %v2258 = vld [vmem:[%s364 + $0x49] sm:$0xff]
        %v2259 = vld [vmem:[%s364 + $0x51] sm:$0xff]
        %v2260 = vld [vmem:[%s364 + $0x61] sm:$0xff]
        %v2261 = vld [vmem:[%s364 + $0x69] sm:$0xff]
        %v2262 = vld [vmem:[%s364 + $0x79] sm:$0xff]
        %v2263 = vld [vmem:[%s364 + $0x81] sm:$0xff]
        %v2264 = vld [vmem:[%s364 + $0x91] sm:$0xff]
        %v2265 = vld [vmem:[%s364 + $0x99] sm:$0xff]
        %v2266 = vld [vmem:[%s364 + $0xa9] sm:$0xff]
        %v2267 = vld [vmem:[%s364 + $0xb1] sm:$0xff]
        %v2268 = vld [vmem:[%s364 + $0xc1] sm:$0xff]
        %v2269 = vld [vmem:[%s364 + $0xc9] sm:$0xff]
        %v2270 = vld [vmem:[%s364 + $0xd9] sm:$0xff]
        %v2271 = vld [vmem:[%s364 + $0xe1] sm:$0xff]
        %v2272 = vld [vmem:[%s364 + $0xf1] sm:$0xff]
        %v2273 = vld [vmem:[%s364 + $0xf9] sm:$0xff]
        %v2274 = vld [vmem:[%s364 + $0x109] sm:$0xff]
        %v2275 = vld [vmem:[%s364 + $0x111] sm:$0xff]
        %v2276 = vld [vmem:[%s364 + $0x121] sm:$0xff]
        %v2277 = vld [vmem:[%s364 + $0x129] sm:$0xff]
        %v2278 = vld [vmem:[%s364 + $0x139] sm:$0xff]
        %v2279 = vld [vmem:[%s364 + $0x141] sm:$0xff]
        %v2280 = vld [vmem:[%s364 + $0x151] sm:$0xff]
        %v2281 = vld [vmem:[%s364 + $0x159] sm:$0xff]
        %v2282 = vld [vmem:[%s364 + $0x169] sm:$0xff]
        %v2283 = vld [vmem:[%s364 + $0x171] sm:$0xff]
        %v2284 = vld [vmem:[%s364 + $0x2] sm:$0xff]
        %v2285 = vld [vmem:[%s364 + $0xa] sm:$0xff]
        %v2286 = vld [vmem:[%s364 + $0x1a] sm:$0xff]
        %v2287 = vld [vmem:[%s364 + $0x22] sm:$0xff]
        %v2288 = vld [vmem:[%s364 + $0x32] sm:$0xff]
        %v2289 = vld [vmem:[%s364 + $0x3a] sm:$0xff]
        %v2290 = vld [vmem:[%s364 + $0x4a] sm:$0xff]
        %v2291 = vld [vmem:[%s364 + $0x52] sm:$0xff]
        %v2292 = vld [vmem:[%s364 + $0x62] sm:$0xff]
        %v2293 = vld [vmem:[%s364 + $0x6a] sm:$0xff]
        %v2294 = vld [vmem:[%s364 + $0x7a] sm:$0xff]
        %v2295 = vld [vmem:[%s364 + $0x82] sm:$0xff]
        %v2296 = vld [vmem:[%s364 + $0x92] sm:$0xff]
        %v2297 = vld [vmem:[%s364 + $0x9a] sm:$0xff]
        %v2298 = vld [vmem:[%s364 + $0xaa] sm:$0xff]
        %v2299 = vld [vmem:[%s364 + $0xb2] sm:$0xff]
        %v2300 = vld [vmem:[%s364 + $0xc2] sm:$0xff]
        %v2301 = vld [vmem:[%s364 + $0xca] sm:$0xff]
        %v2302 = vld [vmem:[%s364 + $0xda] sm:$0xff]
        %v2303 = vld [vmem:[%s364 + $0xe2] sm:$0xff]
        %v2304 = vld [vmem:[%s364 + $0xf2] sm:$0xff]
        %v2305 = vld [vmem:[%s364 + $0xfa] sm:$0xff]
        %v2306 = vld [vmem:[%s364 + $0x10a] sm:$0xff]
        %v2307 = vld [vmem:[%s364 + $0x112] sm:$0xff]
        %v2308 = vld [vmem:[%s364 + $0x122] sm:$0xff]
        %v2309 = vld [vmem:[%s364 + $0x12a] sm:$0xff]
        %v2310 = vld [vmem:[%s364 + $0x13a] sm:$0xff]
        %v2311 = vld [vmem:[%s364 + $0x142] sm:$0xff]
        %v2312 = vld [vmem:[%s364 + $0x152] sm:$0xff]
        %v2313 = vld [vmem:[%s364 + $0x15a] sm:$0xff]
        %v2314 = vld [vmem:[%s364 + $0x16a] sm:$0xff]
        %v2315 = vld [vmem:[%s364 + $0x172] sm:$0xff]
        %v2316 = vld [vmem:[%s734] sm:$0xff]
        %v2317 = vld [vmem:[%s734 + $0x8] sm:$0xff]
        %v2318 = vld [vmem:[%s734 + $0x18] sm:$0xff]
        %v2319 = vld [vmem:[%s734 + $0x20] sm:$0xff]
        %v2320 = vld [vmem:[%s734 + $0x30] sm:$0xff]
        %v2321 = vld [vmem:[%s734 + $0x38] sm:$0xff]
        %v2322 = vld [vmem:[%s734 + $0x48] sm:$0xff]
        %v2323 = vld [vmem:[%s734 + $0x50] sm:$0xff]
        %v2324 = vld [vmem:[%s734 + $0x60] sm:$0xff]
        %v2325 = vld [vmem:[%s734 + $0x68] sm:$0xff]
        %v2326 = vld [vmem:[%s734 + $0x78] sm:$0xff]
        %v2327 = vld [vmem:[%s734 + $0x80] sm:$0xff]
        %v2328 = vld [vmem:[%s734 + $0x90] sm:$0xff]
        %v2329 = vld [vmem:[%s734 + $0x98] sm:$0xff]
        %v2330 = vld [vmem:[%s734 + $0xa8] sm:$0xff]
        %v2331 = vld [vmem:[%s734 + $0xb0] sm:$0xff]
        %v2332 = vld [vmem:[%s734 + $0xc0] sm:$0xff]
        %v2333 = vld [vmem:[%s734 + $0xc8] sm:$0xff]
        %v2334 = vld [vmem:[%s734 + $0xd8] sm:$0xff]
        %v2335 = vld [vmem:[%s734 + $0xe0] sm:$0xff]
        %v2336 = vld [vmem:[%s734 + $0xf0] sm:$0xff]
        %v2337 = vld [vmem:[%s734 + $0xf8] sm:$0xff]
        %v2338 = vld [vmem:[%s734 + $0x108] sm:$0xff]
        %v2339 = vld [vmem:[%s734 + $0x110] sm:$0xff]
        %v2340 = vld [vmem:[%s734 + $0x120] sm:$0xff]
        %v2341 = vld [vmem:[%s734 + $0x128] sm:$0xff]
        %v2342 = vld [vmem:[%s734 + $0x138] sm:$0xff]
        %v2343 = vld [vmem:[%s734 + $0x140] sm:$0xff]
        %v2344 = vld [vmem:[%s734 + $0x150] sm:$0xff]
        %v2345 = vld [vmem:[%s734 + $0x158] sm:$0xff]
        %v2346 = vld [vmem:[%s734 + $0x168] sm:$0xff]
        %v2347 = vld [vmem:[%s734 + $0x170] sm:$0xff]
        %v2348 = vld [vmem:[%s734 + $0x1] sm:$0xff]
        %v2349 = vld [vmem:[%s734 + $0x9] sm:$0xff]
        %v2350 = vld [vmem:[%s734 + $0x19] sm:$0xff]
        %v2351 = vld [vmem:[%s734 + $0x21] sm:$0xff]
        %v2352 = vld [vmem:[%s734 + $0x31] sm:$0xff]
        %v2353 = vld [vmem:[%s734 + $0x39] sm:$0xff]
        %v2354 = vld [vmem:[%s734 + $0x49] sm:$0xff]
        %v2355 = vld [vmem:[%s734 + $0x51] sm:$0xff]
        %v2356 = vld [vmem:[%s734 + $0x61] sm:$0xff]
        %v2357 = vld [vmem:[%s734 + $0x69] sm:$0xff]
        %v2358 = vld [vmem:[%s734 + $0x79] sm:$0xff]
        %v2359 = vld [vmem:[%s734 + $0x81] sm:$0xff]
        %v2360 = vld [vmem:[%s734 + $0x91] sm:$0xff]
        %v2361 = vld [vmem:[%s734 + $0x99] sm:$0xff]
        %v2362 = vld [vmem:[%s734 + $0xa9] sm:$0xff]
        %v2363 = vld [vmem:[%s734 + $0xb1] sm:$0xff]
        %v2364 = vld [vmem:[%s734 + $0xc1] sm:$0xff]
        %v2365 = vld [vmem:[%s734 + $0xc9] sm:$0xff]
        %v2366 = vld [vmem:[%s734 + $0xd9] sm:$0xff]
        %v2367 = vld [vmem:[%s734 + $0xe1] sm:$0xff]
        %v2368 = vld [vmem:[%s734 + $0xf1] sm:$0xff]
        %v2369 = vld [vmem:[%s734 + $0xf9] sm:$0xff]
        %v2370 = vld [vmem:[%s734 + $0x109] sm:$0xff]
        %v2371 = vld [vmem:[%s734 + $0x111] sm:$0xff]
        %v2372 = vld [vmem:[%s734 + $0x121] sm:$0xff]
        %v2373 = vld [vmem:[%s734 + $0x129] sm:$0xff]
        %v2374 = vld [vmem:[%s734 + $0x139] sm:$0xff]
        %v2375 = vld [vmem:[%s734 + $0x141] sm:$0xff]
        %v2376 = vld [vmem:[%s734 + $0x151] sm:$0xff]
        %v2377 = vld [vmem:[%s734 + $0x159] sm:$0xff]
        %v2378 = vld [vmem:[%s734 + $0x169] sm:$0xff]
        %v2379 = vld [vmem:[%s734 + $0x171] sm:$0xff]
        %v2380 = vld [vmem:[%s734 + $0x2] sm:$0xff]
        %v2381 = vld [vmem:[%s734 + $0xa] sm:$0xff]
        %v2382 = vld [vmem:[%s734 + $0x1a] sm:$0xff]
        %v2383 = vld [vmem:[%s734 + $0x22] sm:$0xff]
        %v2384 = vld [vmem:[%s734 + $0x32] sm:$0xff]
        %v2385 = vld [vmem:[%s734 + $0x3a] sm:$0xff]
        %v2386 = vld [vmem:[%s734 + $0x4a] sm:$0xff]
        %v2387 = vld [vmem:[%s734 + $0x52] sm:$0xff]
        %v2388 = vld [vmem:[%s734 + $0x62] sm:$0xff]
        %v2389 = vld [vmem:[%s734 + $0x6a] sm:$0xff]
        %v2390 = vld [vmem:[%s734 + $0x7a] sm:$0xff]
        %v2391 = vld [vmem:[%s734 + $0x82] sm:$0xff]
        %v2392 = vld [vmem:[%s734 + $0x92] sm:$0xff]
        %v2393 = vld [vmem:[%s734 + $0x9a] sm:$0xff]
        %v2394 = vld [vmem:[%s734 + $0xaa] sm:$0xff]
        %v2395 = vld [vmem:[%s734 + $0xb2] sm:$0xff]
        %v2396 = vld [vmem:[%s734 + $0xc2] sm:$0xff]
        %v2397 = vld [vmem:[%s734 + $0xca] sm:$0xff]
        %v2398 = vld [vmem:[%s734 + $0xda] sm:$0xff]
        %v2399 = vld [vmem:[%s734 + $0xe2] sm:$0xff]
        %v2400 = vld [vmem:[%s734 + $0xf2] sm:$0xff]
        %v2401 = vld [vmem:[%s734 + $0xfa] sm:$0xff]
        %v2402 = vld [vmem:[%s734 + $0x10a] sm:$0xff]
        %v2403 = vld [vmem:[%s734 + $0x112] sm:$0xff]
        %v2404 = vld [vmem:[%s734 + $0x122] sm:$0xff]
        %v2405 = vld [vmem:[%s734 + $0x12a] sm:$0xff]
        %v2406 = vld [vmem:[%s734 + $0x13a] sm:$0xff]
        %v2407 = vld [vmem:[%s734 + $0x142] sm:$0xff]
        %v2408 = vld [vmem:[%s734 + $0x152] sm:$0xff]
        %v2409 = vld [vmem:[%s734 + $0x15a] sm:$0xff]
        %v2410 = vld [vmem:[%s734 + $0x16a] sm:$0xff]
        %v2411 = vld [vmem:[%s734 + $0x172] sm:$0xff]
        %v2413 = vperm.slane %v2123, 0
        %2415 = vmatpush.msra.mxu0 %v1994
        %2416 = vmatpush.msra.mxu0 %v1993
        %2417 = vmatpush.msra.mxu0 %v1992
        %2418 = vmatpush.msra.mxu0 %v1991
        %2419 = vmatpush.msra.mxu0 %v1990
        %2420 = vmatpush.msra.mxu0 %v1989
        %2421 = vmatpush.msra.mxu0 %v1988
        %2422 = vmatpush.msra.mxu0 %v1987
        %2423 = vmatpush.msra.mxu0 %v1986
        %2424 = vmatpush.msra.mxu0 %v1985
        %2425 = vmatpush.msra.mxu0 %v1984
        %2426 = vmatpush.msra.mxu0 %v1983
        %2427 = vmatpush.msra.mxu0 %v1982
        %2428 = vmatpush.msra.mxu0 %v1981
        %2429 = vmatpush.msra.mxu0 %v1980
        %2430 = vmatpush.msra.mxu0 %v1979
        %2431 = vmatmul.f32.gmra.mxu0 %v2124
        %v2432 = vpop.f32.mrf.mxu0
        %v2433 = vadd.f32 %v2413, %v2432
        %2434 = vmatmul.f32.gmra.mxu0 %v2125
        %v2435 = vpop.f32.mrf.mxu0
        %v2436 = vadd.f32 %v2413, %v2435
        %2437 = vmatmul.f32.gmra.mxu0 %v2126
        %v2438 = vpop.f32.mrf.mxu0
        %v2439 = vadd.f32 %v2413, %v2438
        %2440 = vmatmul.f32.gmra.mxu0 %v2127
        %v2441 = vpop.f32.mrf.mxu0
        %v2442 = vadd.f32 %v2413, %v2441
        %2443 = vmatmul.f32.gmra.mxu0 %v2128
        %v2444 = vpop.f32.mrf.mxu0
        %v2445 = vadd.f32 %v2413, %v2444
        %2446 = vmatmul.f32.gmra.mxu0 %v2129
        %v2447 = vpop.f32.mrf.mxu0
        %v2448 = vadd.f32 %v2413, %v2447
        %2449 = vmatmul.f32.gmra.mxu0 %v2130
        %v2450 = vpop.f32.mrf.mxu0
        %v2451 = vadd.f32 %v2413, %v2450
        %2452 = vmatmul.f32.gmra.mxu0 %v2131
        %v2453 = vpop.f32.mrf.mxu0
        %v2454 = vadd.f32 %v2413, %v2453
        %2455 = vmatmul.f32.gmra.mxu0 %v2132
        %v2456 = vpop.f32.mrf.mxu0
        %v2457 = vadd.f32 %v2413, %v2456
        %2458 = vmatmul.f32.gmra.mxu0 %v2133
        %v2459 = vpop.f32.mrf.mxu0
        %v2460 = vadd.f32 %v2413, %v2459
        %2461 = vmatmul.f32.gmra.mxu0 %v2134
        %v2462 = vpop.f32.mrf.mxu0
        %v2463 = vadd.f32 %v2413, %v2462
        %2464 = vmatmul.f32.gmra.mxu0 %v2135
        %v2465 = vpop.f32.mrf.mxu0
        %v2466 = vadd.f32 %v2413, %v2465
        %2467 = vmatmul.f32.gmra.mxu0 %v2136
        %v2468 = vpop.f32.mrf.mxu0
        %v2469 = vadd.f32 %v2413, %v2468
        %2470 = vmatmul.f32.gmra.mxu0 %v2137
        %v2471 = vpop.f32.mrf.mxu0
        %v2472 = vadd.f32 %v2413, %v2471
        %2473 = vmatmul.f32.gmra.mxu0 %v2138
        %v2474 = vpop.f32.mrf.mxu0
        %v2475 = vadd.f32 %v2413, %v2474
        %2476 = vmatmul.f32.gmra.mxu0 %v2139
        %v2477 = vpop.f32.mrf.mxu0
        %v2478 = vadd.f32 %v2413, %v2477
        %2479 = vmatmul.f32.gmra.mxu0 %v2140
        %v2480 = vpop.f32.mrf.mxu0
        %v2481 = vadd.f32 %v2413, %v2480
        %2482 = vmatmul.f32.gmra.mxu0 %v2141
        %v2483 = vpop.f32.mrf.mxu0
        %v2484 = vadd.f32 %v2413, %v2483
        %2485 = vmatmul.f32.gmra.mxu0 %v2142
        %v2486 = vpop.f32.mrf.mxu0
        %v2487 = vadd.f32 %v2413, %v2486
        %2488 = vmatmul.f32.gmra.mxu0 %v2143
        %v2489 = vpop.f32.mrf.mxu0
        %v2490 = vadd.f32 %v2413, %v2489
        %2491 = vmatmul.f32.gmra.mxu0 %v2144
        %v2492 = vpop.f32.mrf.mxu0
        %v2493 = vadd.f32 %v2413, %v2492
        %2494 = vmatmul.f32.gmra.mxu0 %v2145
        %v2495 = vpop.f32.mrf.mxu0
        %v2496 = vadd.f32 %v2413, %v2495
        %2497 = vmatmul.f32.gmra.mxu0 %v2146
        %v2498 = vpop.f32.mrf.mxu0
        %v2499 = vadd.f32 %v2413, %v2498
        %2500 = vmatmul.f32.gmra.mxu0 %v2147
        %v2501 = vpop.f32.mrf.mxu0
        %v2502 = vadd.f32 %v2413, %v2501
        %2503 = vmatmul.f32.gmra.mxu0 %v2148
        %v2504 = vpop.f32.mrf.mxu0
        %v2505 = vadd.f32 %v2413, %v2504
        %2506 = vmatmul.f32.gmra.mxu0 %v2149
        %v2507 = vpop.f32.mrf.mxu0
        %v2508 = vadd.f32 %v2413, %v2507
        %2509 = vmatmul.f32.gmra.mxu0 %v2150
        %v2510 = vpop.f32.mrf.mxu0
        %v2511 = vadd.f32 %v2413, %v2510
        %2512 = vmatmul.f32.gmra.mxu0 %v2151
        %v2513 = vpop.f32.mrf.mxu0
        %v2514 = vadd.f32 %v2413, %v2513
        %2515 = vmatmul.f32.gmra.mxu0 %v2152
        %v2516 = vpop.f32.mrf.mxu0
        %v2517 = vadd.f32 %v2413, %v2516
        %2518 = vmatmul.f32.gmra.mxu0 %v2153
        %v2519 = vpop.f32.mrf.mxu0
        %v2520 = vadd.f32 %v2413, %v2519
        %2521 = vmatmul.f32.gmra.mxu0 %v2154
        %v2522 = vpop.f32.mrf.mxu0
        %v2523 = vadd.f32 %v2413, %v2522
        %2524 = vmatmul.f32.gmra.mxu0 %v2155
        %v2525 = vpop.f32.mrf.mxu0
        %v2526 = vadd.f32 %v2413, %v2525
        %2527 = vdwg.mxu0
        %2528 = vmatpush.msra.mxu0 %v2010
        %2529 = vmatpush.msra.mxu0 %v2009
        %2530 = vmatpush.msra.mxu0 %v2008
        %2531 = vmatpush.msra.mxu0 %v2007
        %2532 = vmatpush.msra.mxu0 %v2006
        %2533 = vmatpush.msra.mxu0 %v2005
        %2534 = vmatpush.msra.mxu0 %v2004
        %2535 = vmatpush.msra.mxu0 %v2003
        %2536 = vmatpush.msra.mxu0 %v2002
        %2537 = vmatpush.msra.mxu0 %v2001
        %2538 = vmatpush.msra.mxu0 %v2000
        %2539 = vmatpush.msra.mxu0 %v1999
        %2540 = vmatpush.msra.mxu0 %v1998
        %2541 = vmatpush.msra.mxu0 %v1997
        %2542 = vmatpush.msra.mxu0 %v1996
        %2543 = vmatpush.msra.mxu0 %v1995
        %2544 = vmatmul.f32.gmra.mxu0 %v2156
        %v2545 = vpop.f32.mrf.mxu0
        %v2546 = vadd.f32 %v2433, %v2545
        %2547 = vmatmul.f32.gmra.mxu0 %v2157
        %v2548 = vpop.f32.mrf.mxu0
        %v2549 = vadd.f32 %v2436, %v2548
        %2550 = vmatmul.f32.gmra.mxu0 %v2158
        %v2551 = vpop.f32.mrf.mxu0
        %v2552 = vadd.f32 %v2439, %v2551
        %2553 = vmatmul.f32.gmra.mxu0 %v2159
        %v2554 = vpop.f32.mrf.mxu0
        %v2555 = vadd.f32 %v2442, %v2554
        %2556 = vmatmul.f32.gmra.mxu0 %v2160
        %v2557 = vpop.f32.mrf.mxu0
        %v2558 = vadd.f32 %v2445, %v2557
        %2559 = vmatmul.f32.gmra.mxu0 %v2161
        %v2560 = vpop.f32.mrf.mxu0
        %v2561 = vadd.f32 %v2448, %v2560
        %2562 = vmatmul.f32.gmra.mxu0 %v2162
        %v2563 = vpop.f32.mrf.mxu0
        %v2564 = vadd.f32 %v2451, %v2563
        %2565 = vmatmul.f32.gmra.mxu0 %v2163
        %v2566 = vpop.f32.mrf.mxu0
        %v2567 = vadd.f32 %v2454, %v2566
        %2568 = vmatmul.f32.gmra.mxu0 %v2164
        %v2569 = vpop.f32.mrf.mxu0
        %v2570 = vadd.f32 %v2457, %v2569
        %2571 = vmatmul.f32.gmra.mxu0 %v2165
        %v2572 = vpop.f32.mrf.mxu0
        %v2573 = vadd.f32 %v2460, %v2572
        %2574 = vmatmul.f32.gmra.mxu0 %v2166
        %v2575 = vpop.f32.mrf.mxu0
        %v2576 = vadd.f32 %v2463, %v2575
        %2577 = vmatmul.f32.gmra.mxu0 %v2167
        %v2578 = vpop.f32.mrf.mxu0
        %v2579 = vadd.f32 %v2466, %v2578
        %2580 = vmatmul.f32.gmra.mxu0 %v2168
        %v2581 = vpop.f32.mrf.mxu0
        %v2582 = vadd.f32 %v2469, %v2581
        %2583 = vmatmul.f32.gmra.mxu0 %v2169
        %v2584 = vpop.f32.mrf.mxu0
        %v2585 = vadd.f32 %v2472, %v2584
        %2586 = vmatmul.f32.gmra.mxu0 %v2170
        %v2587 = vpop.f32.mrf.mxu0
        %v2588 = vadd.f32 %v2475, %v2587
        %2589 = vmatmul.f32.gmra.mxu0 %v2171
        %v2590 = vpop.f32.mrf.mxu0
        %v2591 = vadd.f32 %v2478, %v2590
        %2592 = vmatmul.f32.gmra.mxu0 %v2172
        %v2593 = vpop.f32.mrf.mxu0
        %v2594 = vadd.f32 %v2481, %v2593
        %2595 = vmatmul.f32.gmra.mxu0 %v2173
        %v2596 = vpop.f32.mrf.mxu0
        %v2597 = vadd.f32 %v2484, %v2596
        %2598 = vmatmul.f32.gmra.mxu0 %v2174
        %v2599 = vpop.f32.mrf.mxu0
        %v2600 = vadd.f32 %v2487, %v2599
        %2601 = vmatmul.f32.gmra.mxu0 %v2175
        %v2602 = vpop.f32.mrf.mxu0
        %v2603 = vadd.f32 %v2490, %v2602
        %2604 = vmatmul.f32.gmra.mxu0 %v2176
        %v2605 = vpop.f32.mrf.mxu0
        %v2606 = vadd.f32 %v2493, %v2605
        %2607 = vmatmul.f32.gmra.mxu0 %v2177
        %v2608 = vpop.f32.mrf.mxu0
        %v2609 = vadd.f32 %v2496, %v2608
        %2610 = vmatmul.f32.gmra.mxu0 %v2178
        %v2611 = vpop.f32.mrf.mxu0
        %v2612 = vadd.f32 %v2499, %v2611
        %2613 = vmatmul.f32.gmra.mxu0 %v2179
        %v2614 = vpop.f32.mrf.mxu0
        %v2615 = vadd.f32 %v2502, %v2614
        %2616 = vmatmul.f32.gmra.mxu0 %v2180
        %v2617 = vpop.f32.mrf.mxu0
        %v2618 = vadd.f32 %v2505, %v2617
        %2619 = vmatmul.f32.gmra.mxu0 %v2181
        %v2620 = vpop.f32.mrf.mxu0
        %v2621 = vadd.f32 %v2508, %v2620
        %2622 = vmatmul.f32.gmra.mxu0 %v2182
        %v2623 = vpop.f32.mrf.mxu0
        %v2624 = vadd.f32 %v2511, %v2623
        %2625 = vmatmul.f32.gmra.mxu0 %v2183
        %v2626 = vpop.f32.mrf.mxu0
        %v2627 = vadd.f32 %v2514, %v2626
        %2628 = vmatmul.f32.gmra.mxu0 %v2184
        %v2629 = vpop.f32.mrf.mxu0
        %v2630 = vadd.f32 %v2517, %v2629
        %2631 = vmatmul.f32.gmra.mxu0 %v2185
        %v2632 = vpop.f32.mrf.mxu0
        %v2633 = vadd.f32 %v2520, %v2632
        %2634 = vmatmul.f32.gmra.mxu0 %v2186
        %v2635 = vpop.f32.mrf.mxu0
        %v2636 = vadd.f32 %v2523, %v2635
        %2637 = vmatmul.f32.gmra.mxu0 %v2187
        %v2638 = vpop.f32.mrf.mxu0
        %v2639 = vadd.f32 %v2526, %v2638
        %2640 = vdwg.mxu0
        %2641 = vmatpush.msra.mxu0 %v2026
        %2642 = vmatpush.msra.mxu0 %v2025
        %2643 = vmatpush.msra.mxu0 %v2024
        %2644 = vmatpush.msra.mxu0 %v2023
        %2645 = vmatpush.msra.mxu0 %v2022
        %2646 = vmatpush.msra.mxu0 %v2021
        %2647 = vmatpush.msra.mxu0 %v2020
        %2648 = vmatpush.msra.mxu0 %v2019
        %2649 = vmatpush.msra.mxu0 %v2018
        %2650 = vmatpush.msra.mxu0 %v2017
        %2651 = vmatpush.msra.mxu0 %v2016
        %2652 = vmatpush.msra.mxu0 %v2015
        %2653 = vmatpush.msra.mxu0 %v2014
        %2654 = vmatpush.msra.mxu0 %v2013
        %2655 = vmatpush.msra.mxu0 %v2012
        %2656 = vmatpush.msra.mxu0 %v2011
        %2657 = vmatmul.f32.gmra.mxu0 %v2188
        %v2658 = vpop.f32.mrf.mxu0
        %v2659 = vadd.f32 %v2546, %v2658
        %2660 = vmatmul.f32.gmra.mxu0 %v2189
        %v2661 = vpop.f32.mrf.mxu0
        %v2662 = vadd.f32 %v2549, %v2661
        %2663 = vmatmul.f32.gmra.mxu0 %v2190
        %v2664 = vpop.f32.mrf.mxu0
        %v2665 = vadd.f32 %v2552, %v2664
        %2666 = vmatmul.f32.gmra.mxu0 %v2191
        %v2667 = vpop.f32.mrf.mxu0
        %v2668 = vadd.f32 %v2555, %v2667
        %2669 = vmatmul.f32.gmra.mxu0 %v2192
        %v2670 = vpop.f32.mrf.mxu0
        %v2671 = vadd.f32 %v2558, %v2670
        %2672 = vmatmul.f32.gmra.mxu0 %v2193
        %v2673 = vpop.f32.mrf.mxu0
        %v2674 = vadd.f32 %v2561, %v2673
        %2675 = vmatmul.f32.gmra.mxu0 %v2194
        %v2676 = vpop.f32.mrf.mxu0
        %v2677 = vadd.f32 %v2564, %v2676
        %2678 = vmatmul.f32.gmra.mxu0 %v2195
        %v2679 = vpop.f32.mrf.mxu0
        %v2680 = vadd.f32 %v2567, %v2679
        %2681 = vmatmul.f32.gmra.mxu0 %v2196
        %v2682 = vpop.f32.mrf.mxu0
        %v2683 = vadd.f32 %v2570, %v2682
        %2684 = vmatmul.f32.gmra.mxu0 %v2197
        %v2685 = vpop.f32.mrf.mxu0
        %v2686 = vadd.f32 %v2573, %v2685
        %2687 = vmatmul.f32.gmra.mxu0 %v2198
        %v2688 = vpop.f32.mrf.mxu0
        %v2689 = vadd.f32 %v2576, %v2688
        %2690 = vmatmul.f32.gmra.mxu0 %v2199
        %v2691 = vpop.f32.mrf.mxu0
        %v2692 = vadd.f32 %v2579, %v2691
        %2693 = vmatmul.f32.gmra.mxu0 %v2200
        %v2694 = vpop.f32.mrf.mxu0
        %v2695 = vadd.f32 %v2582, %v2694
        %2696 = vmatmul.f32.gmra.mxu0 %v2201
        %v2697 = vpop.f32.mrf.mxu0
        %v2698 = vadd.f32 %v2585, %v2697
        %2699 = vmatmul.f32.gmra.mxu0 %v2202
        %v2700 = vpop.f32.mrf.mxu0
        %v2701 = vadd.f32 %v2588, %v2700
        %2702 = vmatmul.f32.gmra.mxu0 %v2203
        %v2703 = vpop.f32.mrf.mxu0
        %v2704 = vadd.f32 %v2591, %v2703
        %2705 = vmatmul.f32.gmra.mxu0 %v2204
        %v2706 = vpop.f32.mrf.mxu0
        %v2707 = vadd.f32 %v2594, %v2706
        %2708 = vmatmul.f32.gmra.mxu0 %v2205
        %v2709 = vpop.f32.mrf.mxu0
        %v2710 = vadd.f32 %v2597, %v2709
        %2711 = vmatmul.f32.gmra.mxu0 %v2206
        %v2712 = vpop.f32.mrf.mxu0
        %v2713 = vadd.f32 %v2600, %v2712
        %2714 = vmatmul.f32.gmra.mxu0 %v2207
        %v2715 = vpop.f32.mrf.mxu0
        %v2716 = vadd.f32 %v2603, %v2715
        %2717 = vmatmul.f32.gmra.mxu0 %v2208
        %v2718 = vpop.f32.mrf.mxu0
        %v2719 = vadd.f32 %v2606, %v2718
        %2720 = vmatmul.f32.gmra.mxu0 %v2209
        %v2721 = vpop.f32.mrf.mxu0
        %v2722 = vadd.f32 %v2609, %v2721
        %2723 = vmatmul.f32.gmra.mxu0 %v2210
        %v2724 = vpop.f32.mrf.mxu0
        %v2725 = vadd.f32 %v2612, %v2724
        %2726 = vmatmul.f32.gmra.mxu0 %v2211
        %v2727 = vpop.f32.mrf.mxu0
        %v2728 = vadd.f32 %v2615, %v2727
        %2729 = vmatmul.f32.gmra.mxu0 %v2212
        %v2730 = vpop.f32.mrf.mxu0
        %v2731 = vadd.f32 %v2618, %v2730
        %2732 = vmatmul.f32.gmra.mxu0 %v2213
        %v2733 = vpop.f32.mrf.mxu0
        %v2734 = vadd.f32 %v2621, %v2733
        %2735 = vmatmul.f32.gmra.mxu0 %v2214
        %v2736 = vpop.f32.mrf.mxu0
        %v2737 = vadd.f32 %v2624, %v2736
        %2738 = vmatmul.f32.gmra.mxu0 %v2215
        %v2739 = vpop.f32.mrf.mxu0
        %v2740 = vadd.f32 %v2627, %v2739
        %2741 = vmatmul.f32.gmra.mxu0 %v2216
        %v2742 = vpop.f32.mrf.mxu0
        %v2743 = vadd.f32 %v2630, %v2742
        %2744 = vmatmul.f32.gmra.mxu0 %v2217
        %v2745 = vpop.f32.mrf.mxu0
        %v2746 = vadd.f32 %v2633, %v2745
        %2747 = vmatmul.f32.gmra.mxu0 %v2218
        %v2748 = vpop.f32.mrf.mxu0
        %v2749 = vadd.f32 %v2636, %v2748
        %2750 = vmatmul.f32.gmra.mxu0 %v2219
        %v2751 = vpop.f32.mrf.mxu0
        %v2752 = vadd.f32 %v2639, %v2751
        %2753 = vdwg.mxu0
        %2754 = vmatpush.msra.mxu0 %v2042
        %2755 = vmatpush.msra.mxu0 %v2041
        %2756 = vmatpush.msra.mxu0 %v2040
        %2757 = vmatpush.msra.mxu0 %v2039
        %2758 = vmatpush.msra.mxu0 %v2038
        %2759 = vmatpush.msra.mxu0 %v2037
        %2760 = vmatpush.msra.mxu0 %v2036
        %2761 = vmatpush.msra.mxu0 %v2035
        %2762 = vmatpush.msra.mxu0 %v2034
        %2763 = vmatpush.msra.mxu0 %v2033
        %2764 = vmatpush.msra.mxu0 %v2032
        %2765 = vmatpush.msra.mxu0 %v2031
        %2766 = vmatpush.msra.mxu0 %v2030
        %2767 = vmatpush.msra.mxu0 %v2029
        %2768 = vmatpush.msra.mxu0 %v2028
        %2769 = vmatpush.msra.mxu0 %v2027
        %2770 = vmatmul.f32.gmra.mxu0 %v2220
        %v2771 = vpop.f32.mrf.mxu0
        %v2772 = vadd.f32 %v2659, %v2771
        %2773 = vmatmul.f32.gmra.mxu0 %v2221
        %v2774 = vpop.f32.mrf.mxu0
        %v2775 = vadd.f32 %v2662, %v2774
        %2776 = vmatmul.f32.gmra.mxu0 %v2222
        %v2777 = vpop.f32.mrf.mxu0
        %v2778 = vadd.f32 %v2665, %v2777
        %2779 = vmatmul.f32.gmra.mxu0 %v2223
        %v2780 = vpop.f32.mrf.mxu0
        %v2781 = vadd.f32 %v2668, %v2780
        %2782 = vmatmul.f32.gmra.mxu0 %v2224
        %v2783 = vpop.f32.mrf.mxu0
        %v2784 = vadd.f32 %v2671, %v2783
        %2785 = vmatmul.f32.gmra.mxu0 %v2225
        %v2786 = vpop.f32.mrf.mxu0
        %v2787 = vadd.f32 %v2674, %v2786
        %2788 = vmatmul.f32.gmra.mxu0 %v2226
        %v2789 = vpop.f32.mrf.mxu0
        %v2790 = vadd.f32 %v2677, %v2789
        %2791 = vmatmul.f32.gmra.mxu0 %v2227
        %v2792 = vpop.f32.mrf.mxu0
        %v2793 = vadd.f32 %v2680, %v2792
        %2794 = vmatmul.f32.gmra.mxu0 %v2228
        %v2795 = vpop.f32.mrf.mxu0
        %v2796 = vadd.f32 %v2683, %v2795
        %2797 = vmatmul.f32.gmra.mxu0 %v2229
        %v2798 = vpop.f32.mrf.mxu0
        %v2799 = vadd.f32 %v2686, %v2798
        %2800 = vmatmul.f32.gmra.mxu0 %v2230
        %v2801 = vpop.f32.mrf.mxu0
        %v2802 = vadd.f32 %v2689, %v2801
        %2803 = vmatmul.f32.gmra.mxu0 %v2231
        %v2804 = vpop.f32.mrf.mxu0
        %v2805 = vadd.f32 %v2692, %v2804
        %2806 = vmatmul.f32.gmra.mxu0 %v2232
        %v2807 = vpop.f32.mrf.mxu0
        %v2808 = vadd.f32 %v2695, %v2807
        %2809 = vmatmul.f32.gmra.mxu0 %v2233
        %v2810 = vpop.f32.mrf.mxu0
        %v2811 = vadd.f32 %v2698, %v2810
        %2812 = vmatmul.f32.gmra.mxu0 %v2234
        %v2813 = vpop.f32.mrf.mxu0
        %v2814 = vadd.f32 %v2701, %v2813
        %2815 = vmatmul.f32.gmra.mxu0 %v2235
        %v2816 = vpop.f32.mrf.mxu0
        %v2817 = vadd.f32 %v2704, %v2816
        %2818 = vmatmul.f32.gmra.mxu0 %v2236
        %v2819 = vpop.f32.mrf.mxu0
        %v2820 = vadd.f32 %v2707, %v2819
        %2821 = vmatmul.f32.gmra.mxu0 %v2237
        %v2822 = vpop.f32.mrf.mxu0
        %v2823 = vadd.f32 %v2710, %v2822
        %2824 = vmatmul.f32.gmra.mxu0 %v2238
        %v2825 = vpop.f32.mrf.mxu0
        %v2826 = vadd.f32 %v2713, %v2825
        %2827 = vmatmul.f32.gmra.mxu0 %v2239
        %v2828 = vpop.f32.mrf.mxu0
        %v2829 = vadd.f32 %v2716, %v2828
        %2830 = vmatmul.f32.gmra.mxu0 %v2240
        %v2831 = vpop.f32.mrf.mxu0
        %v2832 = vadd.f32 %v2719, %v2831
        %2833 = vmatmul.f32.gmra.mxu0 %v2241
        %v2834 = vpop.f32.mrf.mxu0
        %v2835 = vadd.f32 %v2722, %v2834
        %2836 = vmatmul.f32.gmra.mxu0 %v2242
        %v2837 = vpop.f32.mrf.mxu0
        %v2838 = vadd.f32 %v2725, %v2837
        %2839 = vmatmul.f32.gmra.mxu0 %v2243
        %v2840 = vpop.f32.mrf.mxu0
        %v2841 = vadd.f32 %v2728, %v2840
        %2842 = vmatmul.f32.gmra.mxu0 %v2244
        %v2843 = vpop.f32.mrf.mxu0
        %v2844 = vadd.f32 %v2731, %v2843
        %2845 = vmatmul.f32.gmra.mxu0 %v2245
        %v2846 = vpop.f32.mrf.mxu0
        %v2847 = vadd.f32 %v2734, %v2846
        %2848 = vmatmul.f32.gmra.mxu0 %v2246
        %v2849 = vpop.f32.mrf.mxu0
        %v2850 = vadd.f32 %v2737, %v2849
        %2851 = vmatmul.f32.gmra.mxu0 %v2247
        %v2852 = vpop.f32.mrf.mxu0
        %v2853 = vadd.f32 %v2740, %v2852
        %2854 = vmatmul.f32.gmra.mxu0 %v2248
        %v2855 = vpop.f32.mrf.mxu0
        %v2856 = vadd.f32 %v2743, %v2855
        %2857 = vmatmul.f32.gmra.mxu0 %v2249
        %v2858 = vpop.f32.mrf.mxu0
        %v2859 = vadd.f32 %v2746, %v2858
        %2860 = vmatmul.f32.gmra.mxu0 %v2250
        %v2861 = vpop.f32.mrf.mxu0
        %v2862 = vadd.f32 %v2749, %v2861
        %2863 = vmatmul.f32.gmra.mxu0 %v2251
        %v2864 = vpop.f32.mrf.mxu0
        %v2865 = vadd.f32 %v2752, %v2864
        %2866 = vdwg.mxu0
        %2867 = vmatpush.msra.mxu0 %v2058
        %2868 = vmatpush.msra.mxu0 %v2057
        %2869 = vmatpush.msra.mxu0 %v2056
        %2870 = vmatpush.msra.mxu0 %v2055
        %2871 = vmatpush.msra.mxu0 %v2054
        %2872 = vmatpush.msra.mxu0 %v2053
        %2873 = vmatpush.msra.mxu0 %v2052
        %2874 = vmatpush.msra.mxu0 %v2051
        %2875 = vmatpush.msra.mxu0 %v2050
        %2876 = vmatpush.msra.mxu0 %v2049
        %2877 = vmatpush.msra.mxu0 %v2048
        %2878 = vmatpush.msra.mxu0 %v2047
        %2879 = vmatpush.msra.mxu0 %v2046
        %2880 = vmatpush.msra.mxu0 %v2045
        %2881 = vmatpush.msra.mxu0 %v2044
        %2882 = vmatpush.msra.mxu0 %v2043
        %2883 = vmatmul.f32.gmra.mxu0 %v2252
        %v2884 = vpop.f32.mrf.mxu0
        %v2885 = vadd.f32 %v2772, %v2884
        %2886 = vmatmul.f32.gmra.mxu0 %v2253
        %v2887 = vpop.f32.mrf.mxu0
        %v2888 = vadd.f32 %v2775, %v2887
        %2889 = vmatmul.f32.gmra.mxu0 %v2254
        %v2890 = vpop.f32.mrf.mxu0
        %v2891 = vadd.f32 %v2778, %v2890
        %2892 = vmatmul.f32.gmra.mxu0 %v2255
        %v2893 = vpop.f32.mrf.mxu0
        %v2894 = vadd.f32 %v2781, %v2893
        %2895 = vmatmul.f32.gmra.mxu0 %v2256
        %v2896 = vpop.f32.mrf.mxu0
        %v2897 = vadd.f32 %v2784, %v2896
        %2898 = vmatmul.f32.gmra.mxu0 %v2257
        %v2899 = vpop.f32.mrf.mxu0
        %v2900 = vadd.f32 %v2787, %v2899
        %2901 = vmatmul.f32.gmra.mxu0 %v2258
        %v2902 = vpop.f32.mrf.mxu0
        %v2903 = vadd.f32 %v2790, %v2902
        %2904 = vmatmul.f32.gmra.mxu0 %v2259
        %v2905 = vpop.f32.mrf.mxu0
        %v2906 = vadd.f32 %v2793, %v2905
        %2907 = vmatmul.f32.gmra.mxu0 %v2260
        %v2908 = vpop.f32.mrf.mxu0
        %v2909 = vadd.f32 %v2796, %v2908
        %2910 = vmatmul.f32.gmra.mxu0 %v2261
        %v2911 = vpop.f32.mrf.mxu0
        %v2912 = vadd.f32 %v2799, %v2911
        %2913 = vmatmul.f32.gmra.mxu0 %v2262
        %v2914 = vpop.f32.mrf.mxu0
        %v2915 = vadd.f32 %v2802, %v2914
        %2916 = vmatmul.f32.gmra.mxu0 %v2263
        %v2917 = vpop.f32.mrf.mxu0
        %v2918 = vadd.f32 %v2805, %v2917
        %2919 = vmatmul.f32.gmra.mxu0 %v2264
        %v2920 = vpop.f32.mrf.mxu0
        %v2921 = vadd.f32 %v2808, %v2920
        %2922 = vmatmul.f32.gmra.mxu0 %v2265
        %v2923 = vpop.f32.mrf.mxu0
        %v2924 = vadd.f32 %v2811, %v2923
        %2925 = vmatmul.f32.gmra.mxu0 %v2266
        %v2926 = vpop.f32.mrf.mxu0
        %v2927 = vadd.f32 %v2814, %v2926
        %2928 = vmatmul.f32.gmra.mxu0 %v2267
        %v2929 = vpop.f32.mrf.mxu0
        %v2930 = vadd.f32 %v2817, %v2929
        %2931 = vmatmul.f32.gmra.mxu0 %v2268
        %v2932 = vpop.f32.mrf.mxu0
        %v2933 = vadd.f32 %v2820, %v2932
        %2934 = vmatmul.f32.gmra.mxu0 %v2269
        %v2935 = vpop.f32.mrf.mxu0
        %v2936 = vadd.f32 %v2823, %v2935
        %2937 = vmatmul.f32.gmra.mxu0 %v2270
        %v2938 = vpop.f32.mrf.mxu0
        %v2939 = vadd.f32 %v2826, %v2938
        %2940 = vmatmul.f32.gmra.mxu0 %v2271
        %v2941 = vpop.f32.mrf.mxu0
        %v2942 = vadd.f32 %v2829, %v2941
        %2943 = vmatmul.f32.gmra.mxu0 %v2272
        %v2944 = vpop.f32.mrf.mxu0
        %v2945 = vadd.f32 %v2832, %v2944
        %2946 = vmatmul.f32.gmra.mxu0 %v2273
        %v2947 = vpop.f32.mrf.mxu0
        %v2948 = vadd.f32 %v2835, %v2947
        %2949 = vmatmul.f32.gmra.mxu0 %v2274
        %v2950 = vpop.f32.mrf.mxu0
        %v2951 = vadd.f32 %v2838, %v2950
        %2952 = vmatmul.f32.gmra.mxu0 %v2275
        %v2953 = vpop.f32.mrf.mxu0
        %v2954 = vadd.f32 %v2841, %v2953
        %2955 = vmatmul.f32.gmra.mxu0 %v2276
        %v2956 = vpop.f32.mrf.mxu0
        %v2957 = vadd.f32 %v2844, %v2956
        %2958 = vmatmul.f32.gmra.mxu0 %v2277
        %v2959 = vpop.f32.mrf.mxu0
        %v2960 = vadd.f32 %v2847, %v2959
        %2961 = vmatmul.f32.gmra.mxu0 %v2278
        %v2962 = vpop.f32.mrf.mxu0
        %v2963 = vadd.f32 %v2850, %v2962
        %2964 = vmatmul.f32.gmra.mxu0 %v2279
        %v2965 = vpop.f32.mrf.mxu0
        %v2966 = vadd.f32 %v2853, %v2965
        %2967 = vmatmul.f32.gmra.mxu0 %v2280
        %v2968 = vpop.f32.mrf.mxu0
        %v2969 = vadd.f32 %v2856, %v2968
        %2970 = vmatmul.f32.gmra.mxu0 %v2281
        %v2971 = vpop.f32.mrf.mxu0
        %v2972 = vadd.f32 %v2859, %v2971
        %2973 = vmatmul.f32.gmra.mxu0 %v2282
        %v2974 = vpop.f32.mrf.mxu0
        %v2975 = vadd.f32 %v2862, %v2974
        %2976 = vmatmul.f32.gmra.mxu0 %v2283
        %v2977 = vpop.f32.mrf.mxu0
        %v2978 = vadd.f32 %v2865, %v2977
        %2979 = vdwg.mxu0
        %2980 = vmatpush.msra.mxu0 %v2074
        %2981 = vmatpush.msra.mxu0 %v2073
        %2982 = vmatpush.msra.mxu0 %v2072
        %2983 = vmatpush.msra.mxu0 %v2071
        %2984 = vmatpush.msra.mxu0 %v2070
        %2985 = vmatpush.msra.mxu0 %v2069
        %2986 = vmatpush.msra.mxu0 %v2068
        %2987 = vmatpush.msra.mxu0 %v2067
        %2988 = vmatpush.msra.mxu0 %v2066
        %2989 = vmatpush.msra.mxu0 %v2065
        %2990 = vmatpush.msra.mxu0 %v2064
        %2991 = vmatpush.msra.mxu0 %v2063
        %2992 = vmatpush.msra.mxu0 %v2062
        %2993 = vmatpush.msra.mxu0 %v2061
        %2994 = vmatpush.msra.mxu0 %v2060
        %2995 = vmatpush.msra.mxu0 %v2059
        %2996 = vmatmul.f32.gmra.mxu0 %v2284
        %v2997 = vpop.f32.mrf.mxu0
        %v2998 = vadd.f32 %v2885, %v2997
        %2999 = vmatmul.f32.gmra.mxu0 %v2285
        %v3000 = vpop.f32.mrf.mxu0
        %v3001 = vadd.f32 %v2888, %v3000
        %3002 = vmatmul.f32.gmra.mxu0 %v2286
        %v3003 = vpop.f32.mrf.mxu0
        %v3004 = vadd.f32 %v2891, %v3003
        %3005 = vmatmul.f32.gmra.mxu0 %v2287
        %v3006 = vpop.f32.mrf.mxu0
        %v3007 = vadd.f32 %v2894, %v3006
        %3008 = vmatmul.f32.gmra.mxu0 %v2288
        %v3009 = vpop.f32.mrf.mxu0
        %v3010 = vadd.f32 %v2897, %v3009
        %3011 = vmatmul.f32.gmra.mxu0 %v2289
        %v3012 = vpop.f32.mrf.mxu0
        %v3013 = vadd.f32 %v2900, %v3012
        %3014 = vmatmul.f32.gmra.mxu0 %v2290
        %v3015 = vpop.f32.mrf.mxu0
        %v3016 = vadd.f32 %v2903, %v3015
        %3017 = vmatmul.f32.gmra.mxu0 %v2291
        %v3018 = vpop.f32.mrf.mxu0
        %v3019 = vadd.f32 %v2906, %v3018
        %3020 = vmatmul.f32.gmra.mxu0 %v2292
        %v3021 = vpop.f32.mrf.mxu0
        %v3022 = vadd.f32 %v2909, %v3021
        %3023 = vmatmul.f32.gmra.mxu0 %v2293
        %v3024 = vpop.f32.mrf.mxu0
        %v3025 = vadd.f32 %v2912, %v3024
        %3026 = vmatmul.f32.gmra.mxu0 %v2294
        %v3027 = vpop.f32.mrf.mxu0
        %v3028 = vadd.f32 %v2915, %v3027
        %3029 = vmatmul.f32.gmra.mxu0 %v2295
        %v3030 = vpop.f32.mrf.mxu0
        %v3031 = vadd.f32 %v2918, %v3030
        %3032 = vmatmul.f32.gmra.mxu0 %v2296
        %v3033 = vpop.f32.mrf.mxu0
        %v3034 = vadd.f32 %v2921, %v3033
        %3035 = vmatmul.f32.gmra.mxu0 %v2297
        %v3036 = vpop.f32.mrf.mxu0
        %v3037 = vadd.f32 %v2924, %v3036
        %3038 = vmatmul.f32.gmra.mxu0 %v2298
        %v3039 = vpop.f32.mrf.mxu0
        %v3040 = vadd.f32 %v2927, %v3039
        %3041 = vmatmul.f32.gmra.mxu0 %v2299
        %v3042 = vpop.f32.mrf.mxu0
        %v3043 = vadd.f32 %v2930, %v3042
        %3044 = vmatmul.f32.gmra.mxu0 %v2300
        %v3045 = vpop.f32.mrf.mxu0
        %v3046 = vadd.f32 %v2933, %v3045
        %3047 = vmatmul.f32.gmra.mxu0 %v2301
        %v3048 = vpop.f32.mrf.mxu0
        %v3049 = vadd.f32 %v2936, %v3048
        %3050 = vmatmul.f32.gmra.mxu0 %v2302
        %v3051 = vpop.f32.mrf.mxu0
        %v3052 = vadd.f32 %v2939, %v3051
        %3053 = vmatmul.f32.gmra.mxu0 %v2303
        %v3054 = vpop.f32.mrf.mxu0
        %v3055 = vadd.f32 %v2942, %v3054
        %3056 = vmatmul.f32.gmra.mxu0 %v2304
        %v3057 = vpop.f32.mrf.mxu0
        %v3058 = vadd.f32 %v2945, %v3057
        %3059 = vmatmul.f32.gmra.mxu0 %v2305
        %v3060 = vpop.f32.mrf.mxu0
        %v3061 = vadd.f32 %v2948, %v3060
        %3062 = vmatmul.f32.gmra.mxu0 %v2306
        %v3063 = vpop.f32.mrf.mxu0
        %v3064 = vadd.f32 %v2951, %v3063
        %3065 = vmatmul.f32.gmra.mxu0 %v2307
        %v3066 = vpop.f32.mrf.mxu0
        %v3067 = vadd.f32 %v2954, %v3066
        %3068 = vmatmul.f32.gmra.mxu0 %v2308
        %v3069 = vpop.f32.mrf.mxu0
        %v3070 = vadd.f32 %v2957, %v3069
        %3071 = vmatmul.f32.gmra.mxu0 %v2309
        %v3072 = vpop.f32.mrf.mxu0
        %v3073 = vadd.f32 %v2960, %v3072
        %3074 = vmatmul.f32.gmra.mxu0 %v2310
        %v3075 = vpop.f32.mrf.mxu0
        %v3076 = vadd.f32 %v2963, %v3075
        %3077 = vmatmul.f32.gmra.mxu0 %v2311
        %v3078 = vpop.f32.mrf.mxu0
        %v3079 = vadd.f32 %v2966, %v3078
        %3080 = vmatmul.f32.gmra.mxu0 %v2312
        %v3081 = vpop.f32.mrf.mxu0
        %v3082 = vadd.f32 %v2969, %v3081
        %3083 = vmatmul.f32.gmra.mxu0 %v2313
        %v3084 = vpop.f32.mrf.mxu0
        %v3085 = vadd.f32 %v2972, %v3084
        %3086 = vmatmul.f32.gmra.mxu0 %v2314
        %v3087 = vpop.f32.mrf.mxu0
        %v3088 = vadd.f32 %v2975, %v3087
        %3089 = vmatmul.f32.gmra.mxu0 %v2315
        %v3090 = vpop.f32.mrf.mxu0
        %v3091 = vadd.f32 %v2978, %v3090
        %3092 = vdwg.mxu0
        %3093 = vmatpush.msra.mxu0 %v2090
        %3094 = vmatpush.msra.mxu0 %v2089
        %3095 = vmatpush.msra.mxu0 %v2088
        %3096 = vmatpush.msra.mxu0 %v2087
        %3097 = vmatpush.msra.mxu0 %v2086
        %3098 = vmatpush.msra.mxu0 %v2085
        %3099 = vmatpush.msra.mxu0 %v2084
        %3100 = vmatpush.msra.mxu0 %v2083
        %3101 = vmatpush.msra.mxu0 %v2082
        %3102 = vmatpush.msra.mxu0 %v2081
        %3103 = vmatpush.msra.mxu0 %v2080
        %3104 = vmatpush.msra.mxu0 %v2079
        %3105 = vmatpush.msra.mxu0 %v2078
        %3106 = vmatpush.msra.mxu0 %v2077
        %3107 = vmatpush.msra.mxu0 %v2076
        %3108 = vmatpush.msra.mxu0 %v2075
        %3109 = vmatmul.f32.gmra.mxu0 %v2316
        %v3110 = vpop.f32.mrf.mxu0
        %v3111 = vadd.f32 %v2998, %v3110
        %3112 = vmatmul.f32.gmra.mxu0 %v2317
        %v3113 = vpop.f32.mrf.mxu0
        %v3114 = vadd.f32 %v3001, %v3113
        %3115 = vmatmul.f32.gmra.mxu0 %v2318
        %v3116 = vpop.f32.mrf.mxu0
        %v3117 = vadd.f32 %v3004, %v3116
        %3118 = vmatmul.f32.gmra.mxu0 %v2319
        %v3119 = vpop.f32.mrf.mxu0
        %v3120 = vadd.f32 %v3007, %v3119
        %3121 = vmatmul.f32.gmra.mxu0 %v2320
        %v3122 = vpop.f32.mrf.mxu0
        %v3123 = vadd.f32 %v3010, %v3122
        %3124 = vmatmul.f32.gmra.mxu0 %v2321
        %v3125 = vpop.f32.mrf.mxu0
        %v3126 = vadd.f32 %v3013, %v3125
        %3127 = vmatmul.f32.gmra.mxu0 %v2322
        %v3128 = vpop.f32.mrf.mxu0
        %v3129 = vadd.f32 %v3016, %v3128
        %3130 = vmatmul.f32.gmra.mxu0 %v2323
        %v3131 = vpop.f32.mrf.mxu0
        %v3132 = vadd.f32 %v3019, %v3131
        %3133 = vmatmul.f32.gmra.mxu0 %v2324
        %v3134 = vpop.f32.mrf.mxu0
        %v3135 = vadd.f32 %v3022, %v3134
        %3136 = vmatmul.f32.gmra.mxu0 %v2325
        %v3137 = vpop.f32.mrf.mxu0
        %v3138 = vadd.f32 %v3025, %v3137
        %3139 = vmatmul.f32.gmra.mxu0 %v2326
        %v3140 = vpop.f32.mrf.mxu0
        %v3141 = vadd.f32 %v3028, %v3140
        %3142 = vmatmul.f32.gmra.mxu0 %v2327
        %v3143 = vpop.f32.mrf.mxu0
        %v3144 = vadd.f32 %v3031, %v3143
        %3145 = vmatmul.f32.gmra.mxu0 %v2328
        %v3146 = vpop.f32.mrf.mxu0
        %v3147 = vadd.f32 %v3034, %v3146
        %3148 = vmatmul.f32.gmra.mxu0 %v2329
        %v3149 = vpop.f32.mrf.mxu0
        %v3150 = vadd.f32 %v3037, %v3149
        %3151 = vmatmul.f32.gmra.mxu0 %v2330
        %v3152 = vpop.f32.mrf.mxu0
        %v3153 = vadd.f32 %v3040, %v3152
        %3154 = vmatmul.f32.gmra.mxu0 %v2331
        %v3155 = vpop.f32.mrf.mxu0
        %v3156 = vadd.f32 %v3043, %v3155
        %3157 = vmatmul.f32.gmra.mxu0 %v2332
        %v3158 = vpop.f32.mrf.mxu0
        %v3159 = vadd.f32 %v3046, %v3158
        %3160 = vmatmul.f32.gmra.mxu0 %v2333
        %v3161 = vpop.f32.mrf.mxu0
        %v3162 = vadd.f32 %v3049, %v3161
        %3163 = vmatmul.f32.gmra.mxu0 %v2334
        %v3164 = vpop.f32.mrf.mxu0
        %v3165 = vadd.f32 %v3052, %v3164
        %3166 = vmatmul.f32.gmra.mxu0 %v2335
        %v3167 = vpop.f32.mrf.mxu0
        %v3168 = vadd.f32 %v3055, %v3167
        %3169 = vmatmul.f32.gmra.mxu0 %v2336
        %v3170 = vpop.f32.mrf.mxu0
        %v3171 = vadd.f32 %v3058, %v3170
        %3172 = vmatmul.f32.gmra.mxu0 %v2337
        %v3173 = vpop.f32.mrf.mxu0
        %v3174 = vadd.f32 %v3061, %v3173
        %3175 = vmatmul.f32.gmra.mxu0 %v2338
        %v3176 = vpop.f32.mrf.mxu0
        %v3177 = vadd.f32 %v3064, %v3176
        %3178 = vmatmul.f32.gmra.mxu0 %v2339
        %v3179 = vpop.f32.mrf.mxu0
        %v3180 = vadd.f32 %v3067, %v3179
        %3181 = vmatmul.f32.gmra.mxu0 %v2340
        %v3182 = vpop.f32.mrf.mxu0
        %v3183 = vadd.f32 %v3070, %v3182
        %3184 = vmatmul.f32.gmra.mxu0 %v2341
        %v3185 = vpop.f32.mrf.mxu0
        %v3186 = vadd.f32 %v3073, %v3185
        %3187 = vmatmul.f32.gmra.mxu0 %v2342
        %v3188 = vpop.f32.mrf.mxu0
        %v3189 = vadd.f32 %v3076, %v3188
        %3190 = vmatmul.f32.gmra.mxu0 %v2343
        %v3191 = vpop.f32.mrf.mxu0
        %v3192 = vadd.f32 %v3079, %v3191
        %3193 = vmatmul.f32.gmra.mxu0 %v2344
        %v3194 = vpop.f32.mrf.mxu0
        %v3195 = vadd.f32 %v3082, %v3194
        %3196 = vmatmul.f32.gmra.mxu0 %v2345
        %v3197 = vpop.f32.mrf.mxu0
        %v3198 = vadd.f32 %v3085, %v3197
        %3199 = vmatmul.f32.gmra.mxu0 %v2346
        %v3200 = vpop.f32.mrf.mxu0
        %v3201 = vadd.f32 %v3088, %v3200
        %3202 = vmatmul.f32.gmra.mxu0 %v2347
        %v3203 = vpop.f32.mrf.mxu0
        %v3204 = vadd.f32 %v3091, %v3203
        %3205 = vdwg.mxu0
        %3206 = vmatpush.msra.mxu0 %v2106
        %3207 = vmatpush.msra.mxu0 %v2105
        %3208 = vmatpush.msra.mxu0 %v2104
        %3209 = vmatpush.msra.mxu0 %v2103
        %3210 = vmatpush.msra.mxu0 %v2102
        %3211 = vmatpush.msra.mxu0 %v2101
        %3212 = vmatpush.msra.mxu0 %v2100
        %3213 = vmatpush.msra.mxu0 %v2099
        %3214 = vmatpush.msra.mxu0 %v2098
        %3215 = vmatpush.msra.mxu0 %v2097
        %3216 = vmatpush.msra.mxu0 %v2096
        %3217 = vmatpush.msra.mxu0 %v2095
        %3218 = vmatpush.msra.mxu0 %v2094
        %3219 = vmatpush.msra.mxu0 %v2093
        %3220 = vmatpush.msra.mxu0 %v2092
        %3221 = vmatpush.msra.mxu0 %v2091
        %3222 = vmatmul.f32.gmra.mxu0 %v2348
        %v3223 = vpop.f32.mrf.mxu0
        %v3224 = vadd.f32 %v3111, %v3223
        %3225 = vmatmul.f32.gmra.mxu0 %v2349
        %v3226 = vpop.f32.mrf.mxu0
        %v3227 = vadd.f32 %v3114, %v3226
        %3228 = vmatmul.f32.gmra.mxu0 %v2350
        %v3229 = vpop.f32.mrf.mxu0
        %v3230 = vadd.f32 %v3117, %v3229
        %3231 = vmatmul.f32.gmra.mxu0 %v2351
        %v3232 = vpop.f32.mrf.mxu0
        %v3233 = vadd.f32 %v3120, %v3232
        %3234 = vmatmul.f32.gmra.mxu0 %v2352
        %v3235 = vpop.f32.mrf.mxu0
        %v3236 = vadd.f32 %v3123, %v3235
        %3237 = vmatmul.f32.gmra.mxu0 %v2353
        %v3238 = vpop.f32.mrf.mxu0
        %v3239 = vadd.f32 %v3126, %v3238
        %3240 = vmatmul.f32.gmra.mxu0 %v2354
        %v3241 = vpop.f32.mrf.mxu0
        %v3242 = vadd.f32 %v3129, %v3241
        %3243 = vmatmul.f32.gmra.mxu0 %v2355
        %v3244 = vpop.f32.mrf.mxu0
        %v3245 = vadd.f32 %v3132, %v3244
        %3246 = vmatmul.f32.gmra.mxu0 %v2356
        %v3247 = vpop.f32.mrf.mxu0
        %v3248 = vadd.f32 %v3135, %v3247
        %3249 = vmatmul.f32.gmra.mxu0 %v2357
        %v3250 = vpop.f32.mrf.mxu0
        %v3251 = vadd.f32 %v3138, %v3250
        %3252 = vmatmul.f32.gmra.mxu0 %v2358
        %v3253 = vpop.f32.mrf.mxu0
        %v3254 = vadd.f32 %v3141, %v3253
        %3255 = vmatmul.f32.gmra.mxu0 %v2359
        %v3256 = vpop.f32.mrf.mxu0
        %v3257 = vadd.f32 %v3144, %v3256
        %3258 = vmatmul.f32.gmra.mxu0 %v2360
        %v3259 = vpop.f32.mrf.mxu0
        %v3260 = vadd.f32 %v3147, %v3259
        %3261 = vmatmul.f32.gmra.mxu0 %v2361
        %v3262 = vpop.f32.mrf.mxu0
        %v3263 = vadd.f32 %v3150, %v3262
        %3264 = vmatmul.f32.gmra.mxu0 %v2362
        %v3265 = vpop.f32.mrf.mxu0
        %v3266 = vadd.f32 %v3153, %v3265
        %3267 = vmatmul.f32.gmra.mxu0 %v2363
        %v3268 = vpop.f32.mrf.mxu0
        %v3269 = vadd.f32 %v3156, %v3268
        %3270 = vmatmul.f32.gmra.mxu0 %v2364
        %v3271 = vpop.f32.mrf.mxu0
        %v3272 = vadd.f32 %v3159, %v3271
        %3273 = vmatmul.f32.gmra.mxu0 %v2365
        %v3274 = vpop.f32.mrf.mxu0
        %v3275 = vadd.f32 %v3162, %v3274
        %3276 = vmatmul.f32.gmra.mxu0 %v2366
        %v3277 = vpop.f32.mrf.mxu0
        %v3278 = vadd.f32 %v3165, %v3277
        %3279 = vmatmul.f32.gmra.mxu0 %v2367
        %v3280 = vpop.f32.mrf.mxu0
        %v3281 = vadd.f32 %v3168, %v3280
        %3282 = vmatmul.f32.gmra.mxu0 %v2368
        %v3283 = vpop.f32.mrf.mxu0
        %v3284 = vadd.f32 %v3171, %v3283
        %3285 = vmatmul.f32.gmra.mxu0 %v2369
        %v3286 = vpop.f32.mrf.mxu0
        %v3287 = vadd.f32 %v3174, %v3286
        %3288 = vmatmul.f32.gmra.mxu0 %v2370
        %v3289 = vpop.f32.mrf.mxu0
        %v3290 = vadd.f32 %v3177, %v3289
        %3291 = vmatmul.f32.gmra.mxu0 %v2371
        %v3292 = vpop.f32.mrf.mxu0
        %v3293 = vadd.f32 %v3180, %v3292
        %3294 = vmatmul.f32.gmra.mxu0 %v2372
        %v3295 = vpop.f32.mrf.mxu0
        %v3296 = vadd.f32 %v3183, %v3295
        %3297 = vmatmul.f32.gmra.mxu0 %v2373
        %v3298 = vpop.f32.mrf.mxu0
        %v3299 = vadd.f32 %v3186, %v3298
        %3300 = vmatmul.f32.gmra.mxu0 %v2374
        %v3301 = vpop.f32.mrf.mxu0
        %v3302 = vadd.f32 %v3189, %v3301
        %3303 = vmatmul.f32.gmra.mxu0 %v2375
        %v3304 = vpop.f32.mrf.mxu0
        %v3305 = vadd.f32 %v3192, %v3304
        %3306 = vmatmul.f32.gmra.mxu0 %v2376
        %v3307 = vpop.f32.mrf.mxu0
        %v3308 = vadd.f32 %v3195, %v3307
        %3309 = vmatmul.f32.gmra.mxu0 %v2377
        %v3310 = vpop.f32.mrf.mxu0
        %v3311 = vadd.f32 %v3198, %v3310
        %3312 = vmatmul.f32.gmra.mxu0 %v2378
        %v3313 = vpop.f32.mrf.mxu0
        %v3314 = vadd.f32 %v3201, %v3313
        %3315 = vmatmul.f32.gmra.mxu0 %v2379
        %v3316 = vpop.f32.mrf.mxu0
        %v3317 = vadd.f32 %v3204, %v3316
        %3318 = vdwg.mxu0
        %3319 = vmatpush.msra.mxu0 %v2122
        %3320 = vmatpush.msra.mxu0 %v2121
        %3321 = vmatpush.msra.mxu0 %v2120
        %3322 = vmatpush.msra.mxu0 %v2119
        %3323 = vmatpush.msra.mxu0 %v2118
        %3324 = vmatpush.msra.mxu0 %v2117
        %3325 = vmatpush.msra.mxu0 %v2116
        %3326 = vmatpush.msra.mxu0 %v2115
        %3327 = vmatpush.msra.mxu0 %v2114
        %3328 = vmatpush.msra.mxu0 %v2113
        %3329 = vmatpush.msra.mxu0 %v2112
        %3330 = vmatpush.msra.mxu0 %v2111
        %3331 = vmatpush.msra.mxu0 %v2110
        %3332 = vmatpush.msra.mxu0 %v2109
        %3333 = vmatpush.msra.mxu0 %v2108
        %3334 = vmatpush.msra.mxu0 %v2107
        %3335 = vmatmul.f32.gmra.mxu0 %v2380
        %v3336 = vpop.f32.mrf.mxu0
        %v3337 = vadd.f32 %v3224, %v3336
        %3338 = vmatmul.f32.gmra.mxu0 %v2381
        %v3339 = vpop.f32.mrf.mxu0
        %v3340 = vadd.f32 %v3227, %v3339
        %3341 = vmatmul.f32.gmra.mxu0 %v2382
        %v3342 = vpop.f32.mrf.mxu0
        %v3343 = vadd.f32 %v3230, %v3342
        %3344 = vmatmul.f32.gmra.mxu0 %v2383
        %v3345 = vpop.f32.mrf.mxu0
        %v3346 = vadd.f32 %v3233, %v3345
        %3347 = vmatmul.f32.gmra.mxu0 %v2384
        %v3348 = vpop.f32.mrf.mxu0
        %v3349 = vadd.f32 %v3236, %v3348
        %3350 = vmatmul.f32.gmra.mxu0 %v2385
        %v3351 = vpop.f32.mrf.mxu0
        %v3352 = vadd.f32 %v3239, %v3351
        %3353 = vmatmul.f32.gmra.mxu0 %v2386
        %v3354 = vpop.f32.mrf.mxu0
        %v3355 = vadd.f32 %v3242, %v3354
        %3356 = vmatmul.f32.gmra.mxu0 %v2387
        %v3357 = vpop.f32.mrf.mxu0
        %v3358 = vadd.f32 %v3245, %v3357
        %3359 = vmatmul.f32.gmra.mxu0 %v2388
        %v3360 = vpop.f32.mrf.mxu0
        %v3361 = vadd.f32 %v3248, %v3360
        %3362 = vmatmul.f32.gmra.mxu0 %v2389
        %v3363 = vpop.f32.mrf.mxu0
        %v3364 = vadd.f32 %v3251, %v3363
        %3365 = vmatmul.f32.gmra.mxu0 %v2390
        %v3366 = vpop.f32.mrf.mxu0
        %v3367 = vadd.f32 %v3254, %v3366
        %3368 = vmatmul.f32.gmra.mxu0 %v2391
        %v3369 = vpop.f32.mrf.mxu0
        %v3370 = vadd.f32 %v3257, %v3369
        %3371 = vmatmul.f32.gmra.mxu0 %v2392
        %v3372 = vpop.f32.mrf.mxu0
        %v3373 = vadd.f32 %v3260, %v3372
        %3374 = vmatmul.f32.gmra.mxu0 %v2393
        %v3375 = vpop.f32.mrf.mxu0
        %v3376 = vadd.f32 %v3263, %v3375
        %3377 = vmatmul.f32.gmra.mxu0 %v2394
        %v3378 = vpop.f32.mrf.mxu0
        %v3379 = vadd.f32 %v3266, %v3378
        %3380 = vmatmul.f32.gmra.mxu0 %v2395
        %v3381 = vpop.f32.mrf.mxu0
        %v3382 = vadd.f32 %v3269, %v3381
        %3383 = vmatmul.f32.gmra.mxu0 %v2396
        %v3384 = vpop.f32.mrf.mxu0
        %v3385 = vadd.f32 %v3272, %v3384
        %3386 = vmatmul.f32.gmra.mxu0 %v2397
        %v3387 = vpop.f32.mrf.mxu0
        %v3388 = vadd.f32 %v3275, %v3387
        %3389 = vmatmul.f32.gmra.mxu0 %v2398
        %v3390 = vpop.f32.mrf.mxu0
        %v3391 = vadd.f32 %v3278, %v3390
        %3392 = vmatmul.f32.gmra.mxu0 %v2399
        %v3393 = vpop.f32.mrf.mxu0
        %v3394 = vadd.f32 %v3281, %v3393
        %3395 = vmatmul.f32.gmra.mxu0 %v2400
        %v3396 = vpop.f32.mrf.mxu0
        %v3397 = vadd.f32 %v3284, %v3396
        %3398 = vmatmul.f32.gmra.mxu0 %v2401
        %v3399 = vpop.f32.mrf.mxu0
        %v3400 = vadd.f32 %v3287, %v3399
        %3401 = vmatmul.f32.gmra.mxu0 %v2402
        %v3402 = vpop.f32.mrf.mxu0
        %v3403 = vadd.f32 %v3290, %v3402
        %3404 = vmatmul.f32.gmra.mxu0 %v2403
        %v3405 = vpop.f32.mrf.mxu0
        %v3406 = vadd.f32 %v3293, %v3405
        %3407 = vmatmul.f32.gmra.mxu0 %v2404
        %v3408 = vpop.f32.mrf.mxu0
        %v3409 = vadd.f32 %v3296, %v3408
        %3410 = vmatmul.f32.gmra.mxu0 %v2405
        %v3411 = vpop.f32.mrf.mxu0
        %v3412 = vadd.f32 %v3299, %v3411
        %3413 = vmatmul.f32.gmra.mxu0 %v2406
        %v3414 = vpop.f32.mrf.mxu0
        %v3415 = vadd.f32 %v3302, %v3414
        %3416 = vmatmul.f32.gmra.mxu0 %v2407
        %v3417 = vpop.f32.mrf.mxu0
        %v3418 = vadd.f32 %v3305, %v3417
        %3419 = vmatmul.f32.gmra.mxu0 %v2408
        %v3420 = vpop.f32.mrf.mxu0
        %v3421 = vadd.f32 %v3308, %v3420
        %3422 = vmatmul.f32.gmra.mxu0 %v2409
        %v3423 = vpop.f32.mrf.mxu0
        %v3424 = vadd.f32 %v3311, %v3423
        %3425 = vmatmul.f32.gmra.mxu0 %v2410
        %v3426 = vpop.f32.mrf.mxu0
        %v3427 = vadd.f32 %v3314, %v3426
        %3428 = vmatmul.f32.gmra.mxu0 %v2411
        %v3429 = vpop.f32.mrf.mxu0
        %v3430 = vadd.f32 %v3317, %v3429
        %3431 = vdwg.mxu0
        %vm3432 = vcmp.ge.f32.partialorder %v3337, 0.0
        %vm3433 = vcmp.ge.f32.partialorder %v3340, 0.0
        %vm3434 = vcmp.ge.f32.partialorder %v3343, 0.0
        %vm3435 = vcmp.ge.f32.partialorder %v3346, 0.0
        %vm3436 = vcmp.ge.f32.partialorder %v3349, 0.0
        %vm3437 = vcmp.ge.f32.partialorder %v3352, 0.0
        %vm3438 = vcmp.ge.f32.partialorder %v3355, 0.0
        %vm3439 = vcmp.ge.f32.partialorder %v3358, 0.0
        %vm3440 = vcmp.ge.f32.partialorder %v3361, 0.0
        %vm3441 = vcmp.ge.f32.partialorder %v3364, 0.0
        %vm3442 = vcmp.ge.f32.partialorder %v3367, 0.0
        %vm3443 = vcmp.ge.f32.partialorder %v3370, 0.0
        %vm3444 = vcmp.ge.f32.partialorder %v3373, 0.0
        %vm3445 = vcmp.ge.f32.partialorder %v3376, 0.0
        %vm3446 = vcmp.ge.f32.partialorder %v3379, 0.0
        %vm3447 = vcmp.ge.f32.partialorder %v3382, 0.0
        %vm3448 = vcmp.ge.f32.partialorder %v3385, 0.0
        %vm3449 = vcmp.ge.f32.partialorder %v3388, 0.0
        %vm3450 = vcmp.ge.f32.partialorder %v3391, 0.0
        %vm3451 = vcmp.ge.f32.partialorder %v3394, 0.0
        %vm3452 = vcmp.ge.f32.partialorder %v3397, 0.0
        %vm3453 = vcmp.ge.f32.partialorder %v3400, 0.0
        %vm3454 = vcmp.ge.f32.partialorder %v3403, 0.0
        %vm3455 = vcmp.ge.f32.partialorder %v3406, 0.0
        %vm3456 = vcmp.ge.f32.partialorder %v3409, 0.0
        %vm3457 = vcmp.ge.f32.partialorder %v3412, 0.0
        %vm3458 = vcmp.ge.f32.partialorder %v3415, 0.0
        %vm3459 = vcmp.ge.f32.partialorder %v3418, 0.0
        %vm3460 = vcmp.ge.f32.partialorder %v3421, 0.0
        %vm3461 = vcmp.ge.f32.partialorder %v3424, 0.0
        %vm3462 = vcmp.ge.f32.partialorder %v3427, 0.0
        %vm3463 = vcmp.ge.f32.partialorder %v3430, 0.0
        %v3464 = vmul.f32 %v3337, 0.2
        %v3465 = vmul.f32 %v3340, 0.2
        %v3466 = vmul.f32 %v3343, 0.2
        %v3467 = vmul.f32 %v3346, 0.2
        %v3468 = vmul.f32 %v3349, 0.2
        %v3469 = vmul.f32 %v3352, 0.2
        %v3470 = vmul.f32 %v3355, 0.2
        %v3471 = vmul.f32 %v3358, 0.2
        %v3472 = vmul.f32 %v3361, 0.2
        %v3473 = vmul.f32 %v3364, 0.2
        %v3474 = vmul.f32 %v3367, 0.2
        %v3475 = vmul.f32 %v3370, 0.2
        %v3476 = vmul.f32 %v3373, 0.2
        %v3477 = vmul.f32 %v3376, 0.2
        %v3478 = vmul.f32 %v3379, 0.2
        %v3479 = vmul.f32 %v3382, 0.2
        %v3480 = vmul.f32 %v3385, 0.2
        %v3481 = vmul.f32 %v3388, 0.2
        %v3482 = vmul.f32 %v3391, 0.2
        %v3483 = vmul.f32 %v3394, 0.2
        %v3484 = vmul.f32 %v3397, 0.2
        %v3485 = vmul.f32 %v3400, 0.2
        %v3486 = vmul.f32 %v3403, 0.2
        %v3487 = vmul.f32 %v3406, 0.2
        %v3488 = vmul.f32 %v3409, 0.2
        %v3489 = vmul.f32 %v3412, 0.2
        %v3490 = vmul.f32 %v3415, 0.2
        %v3491 = vmul.f32 %v3418, 0.2
        %v3492 = vmul.f32 %v3421, 0.2
        %v3493 = vmul.f32 %v3424, 0.2
        %v3494 = vmul.f32 %v3427, 0.2
        %v3495 = vmul.f32 %v3430, 0.2
        %v3496 = vsel %vm3432, %v3337, %v3464
        %v3497 = vsel %vm3433, %v3340, %v3465
        %v3498 = vsel %vm3434, %v3343, %v3466
        %v3499 = vsel %vm3435, %v3346, %v3467
        %v3500 = vsel %vm3436, %v3349, %v3468
        %v3501 = vsel %vm3437, %v3352, %v3469
        %v3502 = vsel %vm3438, %v3355, %v3470
        %v3503 = vsel %vm3439, %v3358, %v3471
        %v3504 = vsel %vm3440, %v3361, %v3472
        %v3505 = vsel %vm3441, %v3364, %v3473
        %v3506 = vsel %vm3442, %v3367, %v3474
        %v3507 = vsel %vm3443, %v3370, %v3475
        %v3508 = vsel %vm3444, %v3373, %v3476
        %v3509 = vsel %vm3445, %v3376, %v3477
        %v3510 = vsel %vm3446, %v3379, %v3478
        %v3511 = vsel %vm3447, %v3382, %v3479
        %v3512 = vsel %vm3448, %v3385, %v3480
        %v3513 = vsel %vm3449, %v3388, %v3481
        %v3514 = vsel %vm3450, %v3391, %v3482
        %v3515 = vsel %vm3451, %v3394, %v3483
        %v3516 = vsel %vm3452, %v3397, %v3484
        %v3517 = vsel %vm3453, %v3400, %v3485
        %v3518 = vsel %vm3454, %v3403, %v3486
        %v3519 = vsel %vm3455, %v3406, %v3487
        %v3520 = vsel %vm3456, %v3409, %v3488
        %v3521 = vsel %vm3457, %v3412, %v3489
        %v3522 = vsel %vm3458, %v3415, %v3490
        %v3523 = vsel %vm3459, %v3418, %v3491
        %v3524 = vsel %vm3460, %v3421, %v3492
        %v3525 = vsel %vm3461, %v3424, %v3493
        %v3526 = vsel %vm3462, %v3427, %v3494
        %v3527 = vsel %vm3463, %v3430, %v3495
        %v3560 = vrot.slane %v3496, 2
        %v3561 = vrot.slane %v3496, 4
        %v3562 = vrot.slane %v3496, 6
        %v3563 = vrot.slane %v3497, 2
        %v3564 = vrot.slane %v3497, 4
        %v3565 = vrot.slane %v3497, 6
        %v3566 = vrot.slane %v3498, 2
        %v3567 = vrot.slane %v3498, 4
        %v3568 = vrot.slane %v3498, 6
        %v3569 = vrot.slane %v3499, 2
        %v3570 = vrot.slane %v3499, 4
        %v3571 = vrot.slane %v3499, 6
        %v3572 = vrot.slane %v3500, 2
        %v3573 = vrot.slane %v3500, 4
        %v3574 = vrot.slane %v3500, 6
        %v3575 = vrot.slane %v3501, 2
        %v3576 = vrot.slane %v3501, 4
        %v3577 = vrot.slane %v3501, 6
        %v3578 = vrot.slane %v3502, 2
        %v3579 = vrot.slane %v3502, 4
        %v3580 = vrot.slane %v3502, 6
        %v3581 = vrot.slane %v3503, 2
        %v3582 = vrot.slane %v3503, 4
        %v3583 = vrot.slane %v3503, 6
        %v3584 = vrot.slane %v3504, 2
        %v3585 = vrot.slane %v3504, 4
        %v3586 = vrot.slane %v3504, 6
        %v3587 = vrot.slane %v3505, 2
        %v3588 = vrot.slane %v3505, 4
        %v3589 = vrot.slane %v3505, 6
        %v3590 = vrot.slane %v3506, 2
        %v3591 = vrot.slane %v3506, 4
        %v3592 = vrot.slane %v3506, 6
        %v3593 = vrot.slane %v3507, 2
        %v3594 = vrot.slane %v3507, 4
        %v3595 = vrot.slane %v3507, 6
        %v3596 = vrot.slane %v3508, 2
        %v3597 = vrot.slane %v3508, 4
        %v3598 = vrot.slane %v3508, 6
        %v3599 = vrot.slane %v3509, 2
        %v3600 = vrot.slane %v3509, 4
        %v3601 = vrot.slane %v3509, 6
        %v3602 = vrot.slane %v3510, 2
        %v3603 = vrot.slane %v3510, 4
        %v3604 = vrot.slane %v3510, 6
        %v3605 = vrot.slane %v3511, 2
        %v3606 = vrot.slane %v3511, 4
        %v3607 = vrot.slane %v3511, 6
        %v3608 = vrot.slane %v3512, 2
        %v3609 = vrot.slane %v3512, 4
        %v3610 = vrot.slane %v3512, 6
        %v3611 = vrot.slane %v3513, 2
        %v3612 = vrot.slane %v3513, 4
        %v3613 = vrot.slane %v3513, 6
        %v3614 = vrot.slane %v3514, 2
        %v3615 = vrot.slane %v3514, 4
        %v3616 = vrot.slane %v3514, 6
        %v3617 = vrot.slane %v3515, 2
        %v3618 = vrot.slane %v3515, 4
        %v3619 = vrot.slane %v3515, 6
        %v3620 = vrot.slane %v3516, 2
        %v3621 = vrot.slane %v3516, 4
        %v3622 = vrot.slane %v3516, 6
        %v3623 = vrot.slane %v3517, 2
        %v3624 = vrot.slane %v3517, 4
        %v3625 = vrot.slane %v3517, 6
        %v3626 = vrot.slane %v3518, 2
        %v3627 = vrot.slane %v3518, 4
        %v3628 = vrot.slane %v3518, 6
        %v3629 = vrot.slane %v3519, 2
        %v3630 = vrot.slane %v3519, 4
        %v3631 = vrot.slane %v3519, 6
        %v3632 = vrot.slane %v3520, 2
        %v3633 = vrot.slane %v3520, 4
        %v3634 = vrot.slane %v3520, 6
        %v3635 = vrot.slane %v3521, 2
        %v3636 = vrot.slane %v3521, 4
        %v3637 = vrot.slane %v3521, 6
        %v3638 = vrot.slane %v3522, 2
        %v3639 = vrot.slane %v3522, 4
        %v3640 = vrot.slane %v3522, 6
        %v3641 = vrot.slane %v3523, 2
        %v3642 = vrot.slane %v3523, 4
        %v3643 = vrot.slane %v3523, 6
        %v3644 = vrot.slane %v3524, 2
        %v3645 = vrot.slane %v3524, 4
        %v3646 = vrot.slane %v3524, 6
        %v3647 = vrot.slane %v3525, 2
        %v3648 = vrot.slane %v3525, 4
        %v3649 = vrot.slane %v3525, 6
        %v3650 = vrot.slane %v3526, 2
        %v3651 = vrot.slane %v3526, 4
        %v3652 = vrot.slane %v3526, 6
        %v3653 = vrot.slane %v3527, 2
        %v3654 = vrot.slane %v3527, 4
        %v3655 = vrot.slane %v3527, 6
        %vm3752 = vcmask 1041408
        %v3753 = vsel %vm3752, %v3496, 0.0
        %v3754 = vsel %vm3752, %v3498, 0.0
        %v3755 = vadd.f32 %v3753, %v3754
        %v3756 = vrot.slane %v3755, 4
        %v3757 = vadd.f32 %v3755, %v3756
        %v3758 = vrot.slane %v3757, 2
        %v3759 = vadd.f32 %v3757, %v3758
        %v3760 = vrot.slane %v3759, 1
        %v3761 = vadd.f32 %v3759, %v3760
        %v3762 = vsel %vm3752, %v3560, 0.0
        %v3763 = vsel %vm3752, %v3566, 0.0
        %v3764 = vadd.f32 %v3762, %v3763
        %v3765 = vrot.slane %v3764, 4
        %v3766 = vadd.f32 %v3764, %v3765
        %v3767 = vrot.slane %v3766, 2
        %v3768 = vadd.f32 %v3766, %v3767
        %v3769 = vrot.slane %v3768, 1
        %v3770 = vadd.f32 %v3768, %v3769
        %v3771 = vsel %vm3752, %v3561, 0.0
        %v3772 = vsel %vm3752, %v3567, 0.0
        %v3773 = vadd.f32 %v3771, %v3772
        %v3774 = vrot.slane %v3773, 4
        %v3775 = vadd.f32 %v3773, %v3774
        %v3776 = vrot.slane %v3775, 2
        %v3777 = vadd.f32 %v3775, %v3776
        %v3778 = vrot.slane %v3777, 1
        %v3779 = vadd.f32 %v3777, %v3778
        %v3780 = vsel %vm3752, %v3562, 0.0
        %v3781 = vsel %vm3752, %v3568, 0.0
        %v3782 = vadd.f32 %v3780, %v3781
        %v3783 = vrot.slane %v3782, 4
        %v3784 = vadd.f32 %v3782, %v3783
        %v3785 = vrot.slane %v3784, 2
        %v3786 = vadd.f32 %v3784, %v3785
        %v3787 = vrot.slane %v3786, 1
        %v3788 = vadd.f32 %v3786, %v3787
        %v3789 = vsel %vm3752, %v3497, 0.0
        %v3790 = vsel %vm3752, %v3499, 0.0
        %v3791 = vadd.f32 %v3789, %v3790
        %v3792 = vrot.slane %v3791, 4
        %v3793 = vadd.f32 %v3791, %v3792
        %v3794 = vrot.slane %v3793, 2
        %v3795 = vadd.f32 %v3793, %v3794
        %v3796 = vrot.slane %v3795, 1
        %v3797 = vadd.f32 %v3795, %v3796
        %v3798 = vsel %vm3752, %v3563, 0.0
        %v3799 = vsel %vm3752, %v3569, 0.0
        %v3800 = vadd.f32 %v3798, %v3799
        %v3801 = vrot.slane %v3800, 4
        %v3802 = vadd.f32 %v3800, %v3801
        %v3803 = vrot.slane %v3802, 2
        %v3804 = vadd.f32 %v3802, %v3803
        %v3805 = vrot.slane %v3804, 1
        %v3806 = vadd.f32 %v3804, %v3805
        %v3807 = vsel %vm3752, %v3564, 0.0
        %v3808 = vsel %vm3752, %v3570, 0.0
        %v3809 = vadd.f32 %v3807, %v3808
        %v3810 = vrot.slane %v3809, 4
        %v3811 = vadd.f32 %v3809, %v3810
        %v3812 = vrot.slane %v3811, 2
        %v3813 = vadd.f32 %v3811, %v3812
        %v3814 = vrot.slane %v3813, 1
        %v3815 = vadd.f32 %v3813, %v3814
        %v3816 = vsel %vm3752, %v3565, 0.0
        %v3817 = vsel %vm3752, %v3571, 0.0
        %v3818 = vadd.f32 %v3816, %v3817
        %v3819 = vrot.slane %v3818, 4
        %v3820 = vadd.f32 %v3818, %v3819
        %v3821 = vrot.slane %v3820, 2
        %v3822 = vadd.f32 %v3820, %v3821
        %v3823 = vrot.slane %v3822, 1
        %v3824 = vadd.f32 %v3822, %v3823
        %v3825 = vsel %vm3752, %v3500, 0.0
        %v3826 = vsel %vm3752, %v3502, 0.0
        %v3827 = vadd.f32 %v3825, %v3826
        %v3828 = vrot.slane %v3827, 4
        %v3829 = vadd.f32 %v3827, %v3828
        %v3830 = vrot.slane %v3829, 2
        %v3831 = vadd.f32 %v3829, %v3830
        %v3832 = vrot.slane %v3831, 1
        %v3833 = vadd.f32 %v3831, %v3832
        %v3834 = vsel %vm3752, %v3572, 0.0
        %v3835 = vsel %vm3752, %v3578, 0.0
        %v3836 = vadd.f32 %v3834, %v3835
        %v3837 = vrot.slane %v3836, 4
        %v3838 = vadd.f32 %v3836, %v3837
        %v3839 = vrot.slane %v3838, 2
        %v3840 = vadd.f32 %v3838, %v3839
        %v3841 = vrot.slane %v3840, 1
        %v3842 = vadd.f32 %v3840, %v3841
        %v3843 = vsel %vm3752, %v3573, 0.0
        %v3844 = vsel %vm3752, %v3579, 0.0
        %v3845 = vadd.f32 %v3843, %v3844
        %v3846 = vrot.slane %v3845, 4
        %v3847 = vadd.f32 %v3845, %v3846
        %v3848 = vrot.slane %v3847, 2
        %v3849 = vadd.f32 %v3847, %v3848
        %v3850 = vrot.slane %v3849, 1
        %v3851 = vadd.f32 %v3849, %v3850
        %v3852 = vsel %vm3752, %v3574, 0.0
        %v3853 = vsel %vm3752, %v3580, 0.0
        %v3854 = vadd.f32 %v3852, %v3853
        %v3855 = vrot.slane %v3854, 4
        %v3856 = vadd.f32 %v3854, %v3855
        %v3857 = vrot.slane %v3856, 2
        %v3858 = vadd.f32 %v3856, %v3857
        %v3859 = vrot.slane %v3858, 1
        %v3860 = vadd.f32 %v3858, %v3859
        %v3861 = vsel %vm3752, %v3501, 0.0
        %v3862 = vsel %vm3752, %v3503, 0.0
        %v3863 = vadd.f32 %v3861, %v3862
        %v3864 = vrot.slane %v3863, 4
        %v3865 = vadd.f32 %v3863, %v3864
        %v3866 = vrot.slane %v3865, 2
        %v3867 = vadd.f32 %v3865, %v3866
        %v3868 = vrot.slane %v3867, 1
        %v3869 = vadd.f32 %v3867, %v3868
        %v3870 = vsel %vm3752, %v3575, 0.0
        %v3871 = vsel %vm3752, %v3581, 0.0
        %v3872 = vadd.f32 %v3870, %v3871
        %v3873 = vrot.slane %v3872, 4
        %v3874 = vadd.f32 %v3872, %v3873
        %v3875 = vrot.slane %v3874, 2
        %v3876 = vadd.f32 %v3874, %v3875
        %v3877 = vrot.slane %v3876, 1
        %v3878 = vadd.f32 %v3876, %v3877
        %v3879 = vsel %vm3752, %v3576, 0.0
        %v3880 = vsel %vm3752, %v3582, 0.0
        %v3881 = vadd.f32 %v3879, %v3880
        %v3882 = vrot.slane %v3881, 4
        %v3883 = vadd.f32 %v3881, %v3882
        %v3884 = vrot.slane %v3883, 2
        %v3885 = vadd.f32 %v3883, %v3884
        %v3886 = vrot.slane %v3885, 1
        %v3887 = vadd.f32 %v3885, %v3886
        %v3888 = vsel %vm3752, %v3577, 0.0
        %v3889 = vsel %vm3752, %v3583, 0.0
        %v3890 = vadd.f32 %v3888, %v3889
        %v3891 = vrot.slane %v3890, 4
        %v3892 = vadd.f32 %v3890, %v3891
        %v3893 = vrot.slane %v3892, 2
        %v3894 = vadd.f32 %v3892, %v3893
        %v3895 = vrot.slane %v3894, 1
        %v3896 = vadd.f32 %v3894, %v3895
        %v3897 = vsel %vm3752, %v3504, 0.0
        %v3898 = vsel %vm3752, %v3506, 0.0
        %v3899 = vadd.f32 %v3897, %v3898
        %v3900 = vrot.slane %v3899, 4
        %v3901 = vadd.f32 %v3899, %v3900
        %v3902 = vrot.slane %v3901, 2
        %v3903 = vadd.f32 %v3901, %v3902
        %v3904 = vrot.slane %v3903, 1
        %v3905 = vadd.f32 %v3903, %v3904
        %v3906 = vsel %vm3752, %v3584, 0.0
        %v3907 = vsel %vm3752, %v3590, 0.0
        %v3908 = vadd.f32 %v3906, %v3907
        %v3909 = vrot.slane %v3908, 4
        %v3910 = vadd.f32 %v3908, %v3909
        %v3911 = vrot.slane %v3910, 2
        %v3912 = vadd.f32 %v3910, %v3911
        %v3913 = vrot.slane %v3912, 1
        %v3914 = vadd.f32 %v3912, %v3913
        %v3915 = vsel %vm3752, %v3585, 0.0
        %v3916 = vsel %vm3752, %v3591, 0.0
        %v3917 = vadd.f32 %v3915, %v3916
        %v3918 = vrot.slane %v3917, 4
        %v3919 = vadd.f32 %v3917, %v3918
        %v3920 = vrot.slane %v3919, 2
        %v3921 = vadd.f32 %v3919, %v3920
        %v3922 = vrot.slane %v3921, 1
        %v3923 = vadd.f32 %v3921, %v3922
        %v3924 = vsel %vm3752, %v3586, 0.0
        %v3925 = vsel %vm3752, %v3592, 0.0
        %v3926 = vadd.f32 %v3924, %v3925
        %v3927 = vrot.slane %v3926, 4
        %v3928 = vadd.f32 %v3926, %v3927
        %v3929 = vrot.slane %v3928, 2
        %v3930 = vadd.f32 %v3928, %v3929
        %v3931 = vrot.slane %v3930, 1
        %v3932 = vadd.f32 %v3930, %v3931
        %v3933 = vsel %vm3752, %v3505, 0.0
        %v3934 = vsel %vm3752, %v3507, 0.0
        %v3935 = vadd.f32 %v3933, %v3934
        %v3936 = vrot.slane %v3935, 4
        %v3937 = vadd.f32 %v3935, %v3936
        %v3938 = vrot.slane %v3937, 2
        %v3939 = vadd.f32 %v3937, %v3938
        %v3940 = vrot.slane %v3939, 1
        %v3941 = vadd.f32 %v3939, %v3940
        %v3942 = vsel %vm3752, %v3587, 0.0
        %v3943 = vsel %vm3752, %v3593, 0.0
        %v3944 = vadd.f32 %v3942, %v3943
        %v3945 = vrot.slane %v3944, 4
        %v3946 = vadd.f32 %v3944, %v3945
        %v3947 = vrot.slane %v3946, 2
        %v3948 = vadd.f32 %v3946, %v3947
        %v3949 = vrot.slane %v3948, 1
        %v3950 = vadd.f32 %v3948, %v3949
        %v3951 = vsel %vm3752, %v3588, 0.0
        %v3952 = vsel %vm3752, %v3594, 0.0
        %v3953 = vadd.f32 %v3951, %v3952
        %v3954 = vrot.slane %v3953, 4
        %v3955 = vadd.f32 %v3953, %v3954
        %v3956 = vrot.slane %v3955, 2
        %v3957 = vadd.f32 %v3955, %v3956
        %v3958 = vrot.slane %v3957, 1
        %v3959 = vadd.f32 %v3957, %v3958
        %v3960 = vsel %vm3752, %v3589, 0.0
        %v3961 = vsel %vm3752, %v3595, 0.0
        %v3962 = vadd.f32 %v3960, %v3961
        %v3963 = vrot.slane %v3962, 4
        %v3964 = vadd.f32 %v3962, %v3963
        %v3965 = vrot.slane %v3964, 2
        %v3966 = vadd.f32 %v3964, %v3965
        %v3967 = vrot.slane %v3966, 1
        %v3968 = vadd.f32 %v3966, %v3967
        %v3969 = vsel %vm3752, %v3508, 0.0
        %v3970 = vsel %vm3752, %v3510, 0.0
        %v3971 = vadd.f32 %v3969, %v3970
        %v3972 = vrot.slane %v3971, 4
        %v3973 = vadd.f32 %v3971, %v3972
        %v3974 = vrot.slane %v3973, 2
        %v3975 = vadd.f32 %v3973, %v3974
        %v3976 = vrot.slane %v3975, 1
        %v3977 = vadd.f32 %v3975, %v3976
        %v3978 = vsel %vm3752, %v3596, 0.0
        %v3979 = vsel %vm3752, %v3602, 0.0
        %v3980 = vadd.f32 %v3978, %v3979
        %v3981 = vrot.slane %v3980, 4
        %v3982 = vadd.f32 %v3980, %v3981
        %v3983 = vrot.slane %v3982, 2
        %v3984 = vadd.f32 %v3982, %v3983
        %v3985 = vrot.slane %v3984, 1
        %v3986 = vadd.f32 %v3984, %v3985
        %v3987 = vsel %vm3752, %v3597, 0.0
        %v3988 = vsel %vm3752, %v3603, 0.0
        %v3989 = vadd.f32 %v3987, %v3988
        %v3990 = vrot.slane %v3989, 4
        %v3991 = vadd.f32 %v3989, %v3990
        %v3992 = vrot.slane %v3991, 2
        %v3993 = vadd.f32 %v3991, %v3992
        %v3994 = vrot.slane %v3993, 1
        %v3995 = vadd.f32 %v3993, %v3994
        %v3996 = vsel %vm3752, %v3598, 0.0
        %v3997 = vsel %vm3752, %v3604, 0.0
        %v3998 = vadd.f32 %v3996, %v3997
        %v3999 = vrot.slane %v3998, 4
        %v4000 = vadd.f32 %v3998, %v3999
        %v4001 = vrot.slane %v4000, 2
        %v4002 = vadd.f32 %v4000, %v4001
        %v4003 = vrot.slane %v4002, 1
        %v4004 = vadd.f32 %v4002, %v4003
        %v4005 = vsel %vm3752, %v3509, 0.0
        %v4006 = vsel %vm3752, %v3511, 0.0
        %v4007 = vadd.f32 %v4005, %v4006
        %v4008 = vrot.slane %v4007, 4
        %v4009 = vadd.f32 %v4007, %v4008
        %v4010 = vrot.slane %v4009, 2
        %v4011 = vadd.f32 %v4009, %v4010
        %v4012 = vrot.slane %v4011, 1
        %v4013 = vadd.f32 %v4011, %v4012
        %v4014 = vsel %vm3752, %v3599, 0.0
        %v4015 = vsel %vm3752, %v3605, 0.0
        %v4016 = vadd.f32 %v4014, %v4015
        %v4017 = vrot.slane %v4016, 4
        %v4018 = vadd.f32 %v4016, %v4017
        %v4019 = vrot.slane %v4018, 2
        %v4020 = vadd.f32 %v4018, %v4019
        %v4021 = vrot.slane %v4020, 1
        %v4022 = vadd.f32 %v4020, %v4021
        %v4023 = vsel %vm3752, %v3600, 0.0
        %v4024 = vsel %vm3752, %v3606, 0.0
        %v4025 = vadd.f32 %v4023, %v4024
        %v4026 = vrot.slane %v4025, 4
        %v4027 = vadd.f32 %v4025, %v4026
        %v4028 = vrot.slane %v4027, 2
        %v4029 = vadd.f32 %v4027, %v4028
        %v4030 = vrot.slane %v4029, 1
        %v4031 = vadd.f32 %v4029, %v4030
        %v4032 = vsel %vm3752, %v3601, 0.0
        %v4033 = vsel %vm3752, %v3607, 0.0
        %v4034 = vadd.f32 %v4032, %v4033
        %v4035 = vrot.slane %v4034, 4
        %v4036 = vadd.f32 %v4034, %v4035
        %v4037 = vrot.slane %v4036, 2
        %v4038 = vadd.f32 %v4036, %v4037
        %v4039 = vrot.slane %v4038, 1
        %v4040 = vadd.f32 %v4038, %v4039
        %v4041 = vsel %vm3752, %v3512, 0.0
        %v4042 = vsel %vm3752, %v3514, 0.0
        %v4043 = vadd.f32 %v4041, %v4042
        %v4044 = vrot.slane %v4043, 4
        %v4045 = vadd.f32 %v4043, %v4044
        %v4046 = vrot.slane %v4045, 2
        %v4047 = vadd.f32 %v4045, %v4046
        %v4048 = vrot.slane %v4047, 1
        %v4049 = vadd.f32 %v4047, %v4048
        %v4050 = vsel %vm3752, %v3608, 0.0
        %v4051 = vsel %vm3752, %v3614, 0.0
        %v4052 = vadd.f32 %v4050, %v4051
        %v4053 = vrot.slane %v4052, 4
        %v4054 = vadd.f32 %v4052, %v4053
        %v4055 = vrot.slane %v4054, 2
        %v4056 = vadd.f32 %v4054, %v4055
        %v4057 = vrot.slane %v4056, 1
        %v4058 = vadd.f32 %v4056, %v4057
        %v4059 = vsel %vm3752, %v3609, 0.0
        %v4060 = vsel %vm3752, %v3615, 0.0
        %v4061 = vadd.f32 %v4059, %v4060
        %v4062 = vrot.slane %v4061, 4
        %v4063 = vadd.f32 %v4061, %v4062
        %v4064 = vrot.slane %v4063, 2
        %v4065 = vadd.f32 %v4063, %v4064
        %v4066 = vrot.slane %v4065, 1
        %v4067 = vadd.f32 %v4065, %v4066
        %v4068 = vsel %vm3752, %v3610, 0.0
        %v4069 = vsel %vm3752, %v3616, 0.0
        %v4070 = vadd.f32 %v4068, %v4069
        %v4071 = vrot.slane %v4070, 4
        %v4072 = vadd.f32 %v4070, %v4071
        %v4073 = vrot.slane %v4072, 2
        %v4074 = vadd.f32 %v4072, %v4073
        %v4075 = vrot.slane %v4074, 1
        %v4076 = vadd.f32 %v4074, %v4075
        %v4077 = vsel %vm3752, %v3513, 0.0
        %v4078 = vsel %vm3752, %v3515, 0.0
        %v4079 = vadd.f32 %v4077, %v4078
        %v4080 = vrot.slane %v4079, 4
        %v4081 = vadd.f32 %v4079, %v4080
        %v4082 = vrot.slane %v4081, 2
        %v4083 = vadd.f32 %v4081, %v4082
        %v4084 = vrot.slane %v4083, 1
        %v4085 = vadd.f32 %v4083, %v4084
        %v4086 = vsel %vm3752, %v3611, 0.0
        %v4087 = vsel %vm3752, %v3617, 0.0
        %v4088 = vadd.f32 %v4086, %v4087
        %v4089 = vrot.slane %v4088, 4
        %v4090 = vadd.f32 %v4088, %v4089
        %v4091 = vrot.slane %v4090, 2
        %v4092 = vadd.f32 %v4090, %v4091
        %v4093 = vrot.slane %v4092, 1
        %v4094 = vadd.f32 %v4092, %v4093
        %v4095 = vsel %vm3752, %v3612, 0.0
        %v4096 = vsel %vm3752, %v3618, 0.0
        %v4097 = vadd.f32 %v4095, %v4096
        %v4098 = vrot.slane %v4097, 4
        %v4099 = vadd.f32 %v4097, %v4098
        %v4100 = vrot.slane %v4099, 2
        %v4101 = vadd.f32 %v4099, %v4100
        %v4102 = vrot.slane %v4101, 1
        %v4103 = vadd.f32 %v4101, %v4102
        %v4104 = vsel %vm3752, %v3613, 0.0
        %v4105 = vsel %vm3752, %v3619, 0.0
        %v4106 = vadd.f32 %v4104, %v4105
        %v4107 = vrot.slane %v4106, 4
        %v4108 = vadd.f32 %v4106, %v4107
        %v4109 = vrot.slane %v4108, 2
        %v4110 = vadd.f32 %v4108, %v4109
        %v4111 = vrot.slane %v4110, 1
        %v4112 = vadd.f32 %v4110, %v4111
        %v4113 = vsel %vm3752, %v3516, 0.0
        %v4114 = vsel %vm3752, %v3518, 0.0
        %v4115 = vadd.f32 %v4113, %v4114
        %v4116 = vrot.slane %v4115, 4
        %v4117 = vadd.f32 %v4115, %v4116
        %v4118 = vrot.slane %v4117, 2
        %v4119 = vadd.f32 %v4117, %v4118
        %v4120 = vrot.slane %v4119, 1
        %v4121 = vadd.f32 %v4119, %v4120
        %v4122 = vsel %vm3752, %v3620, 0.0
        %v4123 = vsel %vm3752, %v3626, 0.0
        %v4124 = vadd.f32 %v4122, %v4123
        %v4125 = vrot.slane %v4124, 4
        %v4126 = vadd.f32 %v4124, %v4125
        %v4127 = vrot.slane %v4126, 2
        %v4128 = vadd.f32 %v4126, %v4127
        %v4129 = vrot.slane %v4128, 1
        %v4130 = vadd.f32 %v4128, %v4129
        %v4131 = vsel %vm3752, %v3621, 0.0
        %v4132 = vsel %vm3752, %v3627, 0.0
        %v4133 = vadd.f32 %v4131, %v4132
        %v4134 = vrot.slane %v4133, 4
        %v4135 = vadd.f32 %v4133, %v4134
        %v4136 = vrot.slane %v4135, 2
        %v4137 = vadd.f32 %v4135, %v4136
        %v4138 = vrot.slane %v4137, 1
        %v4139 = vadd.f32 %v4137, %v4138
        %v4140 = vsel %vm3752, %v3622, 0.0
        %v4141 = vsel %vm3752, %v3628, 0.0
        %v4142 = vadd.f32 %v4140, %v4141
        %v4143 = vrot.slane %v4142, 4
        %v4144 = vadd.f32 %v4142, %v4143
        %v4145 = vrot.slane %v4144, 2
        %v4146 = vadd.f32 %v4144, %v4145
        %v4147 = vrot.slane %v4146, 1
        %v4148 = vadd.f32 %v4146, %v4147
        %v4149 = vsel %vm3752, %v3517, 0.0
        %v4150 = vsel %vm3752, %v3519, 0.0
        %v4151 = vadd.f32 %v4149, %v4150
        %v4152 = vrot.slane %v4151, 4
        %v4153 = vadd.f32 %v4151, %v4152
        %v4154 = vrot.slane %v4153, 2
        %v4155 = vadd.f32 %v4153, %v4154
        %v4156 = vrot.slane %v4155, 1
        %v4157 = vadd.f32 %v4155, %v4156
        %v4158 = vsel %vm3752, %v3623, 0.0
        %v4159 = vsel %vm3752, %v3629, 0.0
        %v4160 = vadd.f32 %v4158, %v4159
        %v4161 = vrot.slane %v4160, 4
        %v4162 = vadd.f32 %v4160, %v4161
        %v4163 = vrot.slane %v4162, 2
        %v4164 = vadd.f32 %v4162, %v4163
        %v4165 = vrot.slane %v4164, 1
        %v4166 = vadd.f32 %v4164, %v4165
        %v4167 = vsel %vm3752, %v3624, 0.0
        %v4168 = vsel %vm3752, %v3630, 0.0
        %v4169 = vadd.f32 %v4167, %v4168
        %v4170 = vrot.slane %v4169, 4
        %v4171 = vadd.f32 %v4169, %v4170
        %v4172 = vrot.slane %v4171, 2
        %v4173 = vadd.f32 %v4171, %v4172
        %v4174 = vrot.slane %v4173, 1
        %v4175 = vadd.f32 %v4173, %v4174
        %v4176 = vsel %vm3752, %v3625, 0.0
        %v4177 = vsel %vm3752, %v3631, 0.0
        %v4178 = vadd.f32 %v4176, %v4177
        %v4179 = vrot.slane %v4178, 4
        %v4180 = vadd.f32 %v4178, %v4179
        %v4181 = vrot.slane %v4180, 2
        %v4182 = vadd.f32 %v4180, %v4181
        %v4183 = vrot.slane %v4182, 1
        %v4184 = vadd.f32 %v4182, %v4183
        %v4185 = vsel %vm3752, %v3520, 0.0
        %v4186 = vsel %vm3752, %v3522, 0.0
        %v4187 = vadd.f32 %v4185, %v4186
        %v4188 = vrot.slane %v4187, 4
        %v4189 = vadd.f32 %v4187, %v4188
        %v4190 = vrot.slane %v4189, 2
        %v4191 = vadd.f32 %v4189, %v4190
        %v4192 = vrot.slane %v4191, 1
        %v4193 = vadd.f32 %v4191, %v4192
        %v4194 = vsel %vm3752, %v3632, 0.0
        %v4195 = vsel %vm3752, %v3638, 0.0
        %v4196 = vadd.f32 %v4194, %v4195
        %v4197 = vrot.slane %v4196, 4
        %v4198 = vadd.f32 %v4196, %v4197
        %v4199 = vrot.slane %v4198, 2
        %v4200 = vadd.f32 %v4198, %v4199
        %v4201 = vrot.slane %v4200, 1
        %v4202 = vadd.f32 %v4200, %v4201
        %v4203 = vsel %vm3752, %v3633, 0.0
        %v4204 = vsel %vm3752, %v3639, 0.0
        %v4205 = vadd.f32 %v4203, %v4204
        %v4206 = vrot.slane %v4205, 4
        %v4207 = vadd.f32 %v4205, %v4206
        %v4208 = vrot.slane %v4207, 2
        %v4209 = vadd.f32 %v4207, %v4208
        %v4210 = vrot.slane %v4209, 1
        %v4211 = vadd.f32 %v4209, %v4210
        %v4212 = vsel %vm3752, %v3634, 0.0
        %v4213 = vsel %vm3752, %v3640, 0.0
        %v4214 = vadd.f32 %v4212, %v4213
        %v4215 = vrot.slane %v4214, 4
        %v4216 = vadd.f32 %v4214, %v4215
        %v4217 = vrot.slane %v4216, 2
        %v4218 = vadd.f32 %v4216, %v4217
        %v4219 = vrot.slane %v4218, 1
        %v4220 = vadd.f32 %v4218, %v4219
        %v4221 = vsel %vm3752, %v3521, 0.0
        %v4222 = vsel %vm3752, %v3523, 0.0
        %v4223 = vadd.f32 %v4221, %v4222
        %v4224 = vrot.slane %v4223, 4
        %v4225 = vadd.f32 %v4223, %v4224
        %v4226 = vrot.slane %v4225, 2
        %v4227 = vadd.f32 %v4225, %v4226
        %v4228 = vrot.slane %v4227, 1
        %v4229 = vadd.f32 %v4227, %v4228
        %v4230 = vsel %vm3752, %v3635, 0.0
        %v4231 = vsel %vm3752, %v3641, 0.0
        %v4232 = vadd.f32 %v4230, %v4231
        %v4233 = vrot.slane %v4232, 4
        %v4234 = vadd.f32 %v4232, %v4233
        %v4235 = vrot.slane %v4234, 2
        %v4236 = vadd.f32 %v4234, %v4235
        %v4237 = vrot.slane %v4236, 1
        %v4238 = vadd.f32 %v4236, %v4237
        %v4239 = vsel %vm3752, %v3636, 0.0
        %v4240 = vsel %vm3752, %v3642, 0.0
        %v4241 = vadd.f32 %v4239, %v4240
        %v4242 = vrot.slane %v4241, 4
        %v4243 = vadd.f32 %v4241, %v4242
        %v4244 = vrot.slane %v4243, 2
        %v4245 = vadd.f32 %v4243, %v4244
        %v4246 = vrot.slane %v4245, 1
        %v4247 = vadd.f32 %v4245, %v4246
        %v4248 = vsel %vm3752, %v3637, 0.0
        %v4249 = vsel %vm3752, %v3643, 0.0
        %v4250 = vadd.f32 %v4248, %v4249
        %v4251 = vrot.slane %v4250, 4
        %v4252 = vadd.f32 %v4250, %v4251
        %v4253 = vrot.slane %v4252, 2
        %v4254 = vadd.f32 %v4252, %v4253
        %v4255 = vrot.slane %v4254, 1
        %v4256 = vadd.f32 %v4254, %v4255
        %v4257 = vsel %vm3752, %v3524, 0.0
        %v4258 = vsel %vm3752, %v3526, 0.0
        %v4259 = vadd.f32 %v4257, %v4258
        %v4260 = vrot.slane %v4259, 4
        %v4261 = vadd.f32 %v4259, %v4260
        %v4262 = vrot.slane %v4261, 2
        %v4263 = vadd.f32 %v4261, %v4262
        %v4264 = vrot.slane %v4263, 1
        %v4265 = vadd.f32 %v4263, %v4264
        %v4266 = vsel %vm3752, %v3644, 0.0
        %v4267 = vsel %vm3752, %v3650, 0.0
        %v4268 = vadd.f32 %v4266, %v4267
        %v4269 = vrot.slane %v4268, 4
        %v4270 = vadd.f32 %v4268, %v4269
        %v4271 = vrot.slane %v4270, 2
        %v4272 = vadd.f32 %v4270, %v4271
        %v4273 = vrot.slane %v4272, 1
        %v4274 = vadd.f32 %v4272, %v4273
        %v4275 = vsel %vm3752, %v3645, 0.0
        %v4276 = vsel %vm3752, %v3651, 0.0
        %v4277 = vadd.f32 %v4275, %v4276
        %v4278 = vrot.slane %v4277, 4
        %v4279 = vadd.f32 %v4277, %v4278
        %v4280 = vrot.slane %v4279, 2
        %v4281 = vadd.f32 %v4279, %v4280
        %v4282 = vrot.slane %v4281, 1
        %v4283 = vadd.f32 %v4281, %v4282
        %v4284 = vsel %vm3752, %v3646, 0.0
        %v4285 = vsel %vm3752, %v3652, 0.0
        %v4286 = vadd.f32 %v4284, %v4285
        %v4287 = vrot.slane %v4286, 4
        %v4288 = vadd.f32 %v4286, %v4287
        %v4289 = vrot.slane %v4288, 2
        %v4290 = vadd.f32 %v4288, %v4289
        %v4291 = vrot.slane %v4290, 1
        %v4292 = vadd.f32 %v4290, %v4291
        %v4293 = vsel %vm3752, %v3525, 0.0
        %v4294 = vsel %vm3752, %v3527, 0.0
        %v4295 = vadd.f32 %v4293, %v4294
        %v4296 = vrot.slane %v4295, 4
        %v4297 = vadd.f32 %v4295, %v4296
        %v4298 = vrot.slane %v4297, 2
        %v4299 = vadd.f32 %v4297, %v4298
        %v4300 = vrot.slane %v4299, 1
        %v4301 = vadd.f32 %v4299, %v4300
        %v4302 = vsel %vm3752, %v3647, 0.0
        %v4303 = vsel %vm3752, %v3653, 0.0
        %v4304 = vadd.f32 %v4302, %v4303
        %v4305 = vrot.slane %v4304, 4
        %v4306 = vadd.f32 %v4304, %v4305
        %v4307 = vrot.slane %v4306, 2
        %v4308 = vadd.f32 %v4306, %v4307
        %v4309 = vrot.slane %v4308, 1
        %v4310 = vadd.f32 %v4308, %v4309
        %v4311 = vsel %vm3752, %v3648, 0.0
        %v4312 = vsel %vm3752, %v3654, 0.0
        %v4313 = vadd.f32 %v4311, %v4312
        %v4314 = vrot.slane %v4313, 4
        %v4315 = vadd.f32 %v4313, %v4314
        %v4316 = vrot.slane %v4315, 2
        %v4317 = vadd.f32 %v4315, %v4316
        %v4318 = vrot.slane %v4317, 1
        %v4319 = vadd.f32 %v4317, %v4318
        %v4320 = vsel %vm3752, %v3649, 0.0
        %v4321 = vsel %vm3752, %v3655, 0.0
        %v4322 = vadd.f32 %v4320, %v4321
        %v4323 = vrot.slane %v4322, 4
        %v4324 = vadd.f32 %v4322, %v4323
        %v4325 = vrot.slane %v4324, 2
        %v4326 = vadd.f32 %v4324, %v4325
        %v4327 = vrot.slane %v4326, 1
        %v4328 = vadd.f32 %v4326, %v4327
        %v4329 = vrcp.pop 4.0
        %v4330 = vmul.f32 4.0, %v4329
        %v4331 = vsub.f32 1.0, %v4330
        %v4332 = vmul.f32 %v4329, %v4331
        %v4333 = vadd.f32 %v4329, %v4332
        %vm4334 = vweird.f32 %v4329
        %v4335 = vsel %vm4334, %v4329, %v4333
        %v4336 = vmul.f32 %v3761, %v4335
        %v4337 = vmul.f32 %v3770, %v4335
        %v4338 = vmul.f32 %v3779, %v4335
        %v4339 = vmul.f32 %v3788, %v4335
        %v4340 = vmul.f32 %v3797, %v4335
        %v4341 = vmul.f32 %v3806, %v4335
        %v4342 = vmul.f32 %v3815, %v4335
        %v4343 = vmul.f32 %v3824, %v4335
        %v4344 = vmul.f32 %v3833, %v4335
        %v4345 = vmul.f32 %v3842, %v4335
        %v4346 = vmul.f32 %v3851, %v4335
        %v4347 = vmul.f32 %v3860, %v4335
        %v4348 = vmul.f32 %v3869, %v4335
        %v4349 = vmul.f32 %v3878, %v4335
        %v4350 = vmul.f32 %v3887, %v4335
        %v4351 = vmul.f32 %v3896, %v4335
        %v4352 = vmul.f32 %v3905, %v4335
        %v4353 = vmul.f32 %v3914, %v4335
        %v4354 = vmul.f32 %v3923, %v4335
        %v4355 = vmul.f32 %v3932, %v4335
        %v4356 = vmul.f32 %v3941, %v4335
        %v4357 = vmul.f32 %v3950, %v4335
        %v4358 = vmul.f32 %v3959, %v4335
        %v4359 = vmul.f32 %v3968, %v4335
        %v4360 = vmul.f32 %v3977, %v4335
        %v4361 = vmul.f32 %v3986, %v4335
        %v4362 = vmul.f32 %v3995, %v4335
        %v4363 = vmul.f32 %v4004, %v4335
        %v4364 = vmul.f32 %v4013, %v4335
        %v4365 = vmul.f32 %v4022, %v4335
        %v4366 = vmul.f32 %v4031, %v4335
        %v4367 = vmul.f32 %v4040, %v4335
        %v4368 = vmul.f32 %v4049, %v4335
        %v4369 = vmul.f32 %v4058, %v4335
        %v4370 = vmul.f32 %v4067, %v4335
        %v4371 = vmul.f32 %v4076, %v4335
        %v4372 = vmul.f32 %v4085, %v4335
        %v4373 = vmul.f32 %v4094, %v4335
        %v4374 = vmul.f32 %v4103, %v4335
        %v4375 = vmul.f32 %v4112, %v4335
        %v4376 = vmul.f32 %v4121, %v4335
        %v4377 = vmul.f32 %v4130, %v4335
        %v4378 = vmul.f32 %v4139, %v4335
        %v4379 = vmul.f32 %v4148, %v4335
        %v4380 = vmul.f32 %v4157, %v4335
        %v4381 = vmul.f32 %v4166, %v4335
        %v4382 = vmul.f32 %v4175, %v4335
        %v4383 = vmul.f32 %v4184, %v4335
        %v4384 = vmul.f32 %v4193, %v4335
        %v4385 = vmul.f32 %v4202, %v4335
        %v4386 = vmul.f32 %v4211, %v4335
        %v4387 = vmul.f32 %v4220, %v4335
        %v4388 = vmul.f32 %v4229, %v4335
        %v4389 = vmul.f32 %v4238, %v4335
        %v4390 = vmul.f32 %v4247, %v4335
        %v4391 = vmul.f32 %v4256, %v4335
        %v4392 = vmul.f32 %v4265, %v4335
        %v4393 = vmul.f32 %v4274, %v4335
        %v4394 = vmul.f32 %v4283, %v4335
        %v4395 = vmul.f32 %v4292, %v4335
        %v4396 = vmul.f32 %v4301, %v4335
        %v4397 = vmul.f32 %v4310, %v4335
        %v4398 = vmul.f32 %v4319, %v4335
        %v4399 = vmul.f32 %v4328, %v4335
        %vm4464 = vcmask 1041409
        %v4465 = vsel %vm4464, %v4337, %v4336
        %vm4466 = vcmask 1042434
        %v4467 = vsel %vm4466, %v4338, %v4465
        %vm4468 = vcmask 1043459
        %v4469 = vsel %vm4468, %v4339, %v4467
        %vm4470 = vcmask 1044484
        %v4471 = vsel %vm4470, %v4340, %v4469
        %vm4472 = vcmask 1045509
        %v4473 = vsel %vm4472, %v4341, %v4471
        %vm4474 = vcmask 1046534
        %v4475 = vsel %vm4474, %v4342, %v4473
        %vm4476 = vcmask 1047559
        %v4477 = vsel %vm4476, %v4343, %v4475
        %v4478 = vsel %vm4464, %v4345, %v4344
        %v4479 = vsel %vm4466, %v4346, %v4478
        %v4480 = vsel %vm4468, %v4347, %v4479
        %v4481 = vsel %vm4470, %v4348, %v4480
        %v4482 = vsel %vm4472, %v4349, %v4481
        %v4483 = vsel %vm4474, %v4350, %v4482
        %v4484 = vsel %vm4476, %v4351, %v4483
        %v4485 = vsel %vm4464, %v4353, %v4352
        %v4486 = vsel %vm4466, %v4354, %v4485
        %v4487 = vsel %vm4468, %v4355, %v4486
        %v4488 = vsel %vm4470, %v4356, %v4487
        %v4489 = vsel %vm4472, %v4357, %v4488
        %v4490 = vsel %vm4474, %v4358, %v4489
        %v4491 = vsel %vm4476, %v4359, %v4490
        %v4492 = vsel %vm4464, %v4361, %v4360
        %v4493 = vsel %vm4466, %v4362, %v4492
        %v4494 = vsel %vm4468, %v4363, %v4493
        %v4495 = vsel %vm4470, %v4364, %v4494
        %v4496 = vsel %vm4472, %v4365, %v4495
        %v4497 = vsel %vm4474, %v4366, %v4496
        %v4498 = vsel %vm4476, %v4367, %v4497
        %v4499 = vsel %vm4464, %v4369, %v4368
        %v4500 = vsel %vm4466, %v4370, %v4499
        %v4501 = vsel %vm4468, %v4371, %v4500
        %v4502 = vsel %vm4470, %v4372, %v4501
        %v4503 = vsel %vm4472, %v4373, %v4502
        %v4504 = vsel %vm4474, %v4374, %v4503
        %v4505 = vsel %vm4476, %v4375, %v4504
        %v4506 = vsel %vm4464, %v4377, %v4376
        %v4507 = vsel %vm4466, %v4378, %v4506
        %v4508 = vsel %vm4468, %v4379, %v4507
        %v4509 = vsel %vm4470, %v4380, %v4508
        %v4510 = vsel %vm4472, %v4381, %v4509
        %v4511 = vsel %vm4474, %v4382, %v4510
        %v4512 = vsel %vm4476, %v4383, %v4511
        %v4513 = vsel %vm4464, %v4385, %v4384
        %v4514 = vsel %vm4466, %v4386, %v4513
        %v4515 = vsel %vm4468, %v4387, %v4514
        %v4516 = vsel %vm4470, %v4388, %v4515
        %v4517 = vsel %vm4472, %v4389, %v4516
        %v4518 = vsel %vm4474, %v4390, %v4517
        %v4519 = vsel %vm4476, %v4391, %v4518
        %v4520 = vsel %vm4464, %v4393, %v4392
        %v4521 = vsel %vm4466, %v4394, %v4520
        %v4522 = vsel %vm4468, %v4395, %v4521
        %v4523 = vsel %vm4470, %v4396, %v4522
        %v4524 = vsel %vm4472, %v4397, %v4523
        %v4525 = vsel %vm4474, %v4398, %v4524
        %v4526 = vsel %vm4476, %v4399, %v4525
        %4535 = vst [vmem:[%s277] sm:$0xff] %v4477
        %4536 = vst [vmem:[%s277 + $0x8] sm:$0xff] %v4484
        %4537 = vst [vmem:[%s277 + $0x10] sm:$0xff] %v4491
        %4538 = vst [vmem:[%s277 + $0x18] sm:$0xff] %v4498
        %4539 = vst [vmem:[%s277 + $0x20] sm:$0xff] %v4505
        %4540 = vst [vmem:[%s277 + $0x28] sm:$0xff] %v4512
        %4541 = vst [vmem:[%s277 + $0x30] sm:$0xff] %v4519
        %4542 = vst [vmem:[%s277 + $0x38] sm:$0xff] %v4526
        %s4543 = sand.u32 %s141, 1
        %s4544 = scalar_lea.sflag [#allocation5], %s4543
        %s4545 = sand.u32 %s141, 1
        %s4546 = smul.addr %s4545, 64
        %s4547 = scalar_lea.vmem [#allocation9], %s4546
        // Predicated region
        $region53: #{tpu_custom_call.1} parent=39 // pred_check
          %p4548 = pneg %p151
        $region54: #{tpu_custom_call.1} parent=39 // pred_check_branch
          %4550 = sbr.rel (%p4548) target = $region56
        $region55: #{tpu_custom_call.1} parent=39 // pred_region
          %4552 = vsyncadd %s4544, 0
          %s4553 = smul.addr %s23, 8
          %s4554 = smul.addr %s4553, 8
          %s4555 = scalar_lea.hbm %s5, %s4554
          %s4556 = sshll.u32 %s4547, 4
          %s4557 = int_to_ptr.vmem [resolvable:$true] %s4556
          %s4558 = sshll.u32 %s4555, 4
          %s4559 = int_to_ptr.hbm [resolvable:$true] %s4558
          %4564 = dma.vmem_to_hbm [thread:$0]  %s4557, 1024, %s4559, %s4544, 128, 128, 8
        $region56: #{tpu_custom_call.1} parent=39 // pred_fallthru
          _
      $region40: #{tpu_custom_call.1} parent=5 // pred_fallthru
        _
      %p4565 = scmp.le.s32.totalorder 2, %s18
      // Predicated region
      $region57: #{tpu_custom_call.1} parent=5 // pred_check
        %p4566 = pneg %p4565
      $region58: #{tpu_custom_call.1} parent=5 // pred_check_branch
        %4568 = sbr.rel (%p4566) target = $region60
      $region59: #{tpu_custom_call.1} parent=5 // pred_region
        %s4569 = ssub.s32 %s18, 2
        // Predicated region
        $region61: #{tpu_custom_call.1} parent=59 // pred_check
          %p4570 = pneg %p157
        $region62: #{tpu_custom_call.1} parent=59 // pred_check_branch
          %4572 = sbr.rel (%p4570) target = $region64
        $region63: #{tpu_custom_call.1} parent=59 // pred_region
          %s4573 = sand.u32 %s142, 1
          %s4574 = scalar_lea.sflag [#allocation5], %s4573
          %s4575 = sand.u32 %s142, 1
          %s4576 = smul.addr %s4575, 64
          %s4577 = scalar_lea.vmem [#allocation9], %s4576
          %4579 = dma.done %s4574, 1024
        $region64: #{tpu_custom_call.1} parent=59 // pred_fallthru
          _
      $region60: #{tpu_custom_call.1} parent=5 // pred_fallthru
        _
    $region6: #{tpu_custom_call.1} parent=1 // loop_footer
      %s22 = sadd.s32 1, %s18
    $region7: #{tpu_custom_call.1} parent=1 // loop_footer_branch
      %17 = sbr.rel target = $region3
    $region8: #{tpu_custom_call.1} parent=1 // loop_exit
      _
    %4580 = vsyncpa [#allocation4], 1
    %s4581 = scalar_lea.sflag [#allocation4], 1
    %4582 = vsyncpa %s4581, 1
    %4583 = vsyncpa [#allocation7], 1
    %4584 = vsyncpa [#allocation5], 1
    %s4585 = scalar_lea.sflag [#allocation5], 1
    %4586 = vsyncpa %s4585, 1

</llo_original>
